<compile_context>
chip_gen: v7x
topology: tpu7x:2x2x1
jax: 0.10.0
libtpu: 0.0.40
codegen_flags: <defaults>
</compile_context>

<pallas_src>
import numpy as np
import jax
import jax.numpy as jnp
from jax import lax
from jax.experimental import pallas as pl
from jax.experimental.pallas import tpu as pltpu


def _group_kernel(xyz_ref, neigh_ref, center_ref):
    # xyz_ref:    (bt, 3, N)    points, lane-dense over N
    # neigh_ref:  (bt, 3, M*G)  column c = m*G + g  ->  x[knn[g, m]] - center[g]
    # center_ref: (bt, 3, G)
    x = xyz_ref[...].astype(jnp.float32)                     # (bt, 3, N)
    N = x.shape[2]
    MG = neigh_ref.shape[2]
    G = center_ref.shape[2]
    M = MG // G

    BIG = jnp.float32(1e30)    # > any squared distance for sane (normalized) inputs
    NEG = jnp.float32(-1e30)   # < any coordinate for sane inputs
    lane = lax.broadcasted_iota(jnp.int32, (1, 1, N), 2)     # shared lane-index iota
    lane_g = lax.broadcasted_iota(jnp.int32, (1, 1, G), 2)

    def sqdist(p):
        # squared distance of every point to p (bt,3,1) -> (bt,1,N)
        # exact f32 with the same ((d0+d1)+d2) association as the numpy reference,
        # so FPS / KNN index decisions match the reference.
        diff = x - p
        sq = diff * diff
        return (sq[:, 0:1, :] + sq[:, 1:2, :]) + sq[:, 2:3, :]

    # -------- furthest point sampling (deterministic start at point 0) --------
    p0 = x[:, :, 0:1]                                        # (bt,3,1) exact copy
    min_d0 = sqdist(p0)                                      # (bt,1,N)
    C0 = jnp.where(lane_g == 0, p0, jnp.float32(0.0))        # (bt,3,G) centers, col 0

    def fps_body(g, carry):
        # carry is small (min_d + tiny center matrix): no O(G*N) stash per step.
        min_d, C = carry
        mmax = jnp.max(min_d, axis=-1, keepdims=True)                    # (bt,1,1)
        idx = jnp.min(jnp.where(min_d >= mmax, lane, N),
                      axis=-1, keepdims=True)                            # first argmax
        sel = lane == idx                                                # (bt,1,N)
        p = jnp.max(jnp.where(sel, x, NEG), axis=-1, keepdims=True)      # exact gather (bt,3,1)
        C = jnp.where(lane_g == g, p, C)                                 # O(3*G) center stash
        min_d = jnp.minimum(min_d, sqdist(p))
        return min_d, C

    unroll = G <= 128                        # full unroll: carry is tiny
    _, C = lax.fori_loop(1, G, fps_body, (min_d0, C0), unroll=unroll)

    center_ref[...] = C.astype(center_ref.dtype)                         # (bt,3,G)

    # -------- KNN: M nearest points per center (ascending, stable tie-break) --------
    # Recompute center->point squared distances directly in the (bt,G,N) layout
    # (exact, same association as the reference; cheaper and simpler than stashing
    # a (G,bt,N) slab during FPS and transposing it).
    C_g = jnp.transpose(C, (0, 2, 1))                                    # (bt,G,3) minor-dims xpose
    e0 = x[:, 0:1, :] - C_g[:, :, 0:1]
    e1 = x[:, 1:2, :] - C_g[:, :, 1:2]
    e2 = x[:, 2:3, :] - C_g[:, :, 2:3]
    D = (e0 * e0 + e1 * e1) + e2 * e2                                    # (bt,G,N)

    for m in range(M):   # M small & static; peak temp per pass is one (bt,G,N) one-hot
        dmin = jnp.min(D, axis=-1, keepdims=True)                        # (bt,G,1)
        idx = jnp.min(jnp.where(D <= dmin, lane, N),
                      axis=-1, keepdims=True)                            # first argmin
        sel = lane == idx                                                # (bt,G,N) one-hot
        # exact one-hot gather on the MXU -> lane-dense (bt,3,G)
        pts = jnp.einsum("bcn,bgn->bcg", x, sel.astype(jnp.float32),
                         preferred_element_type=jnp.float32)
        neigh_ref[:, :, m * G:(m + 1) * G] = (pts - C).astype(neigh_ref.dtype)
        if m + 1 < M:
            D = jnp.where(sel, BIG, D)                                   # drop chosen point


def _dual_tensorcore():
    """Best-effort: does this chip have 2 TensorCores (v7x-class)?"""
    try:
        kind = (getattr(jax.devices()[0], "device_kind", "") or "").lower()
        return ("v7" in kind) or ("7x" in kind)
    except Exception:
        return False


def _vmem_bytes_per_batch(N, G, M):
    # Rough peak f32 VMEM footprint per batch element (KNN phase dominates):
    #   input block (double buffered) + loaded x value  ~ 3 * 3N
    #   D + one-hot sel + a where temp                  ~ 3 * G*N
    #   output slabs (double buffered)                  ~ 2 * 3*(M*G + G)
    return 4 * (3 * 3 * N + 3 * G * N + 2 * 3 * (M * G + G))


def _pick_batch_tile(B, N, G, M, vmem_budget_bytes=24 << 20):
    """Batch elements per grid step.

    v5e/v6e (1 TensorCore): take the largest divisor that fits the VMEM budget;
    a single-step grid is fine (extra grid steps only add ~0.35us each).
    v7x (2 TensorCores): prefer a tile giving an even number of grid steps so the
    "parallel" batch axis splits evenly across both cores.
    The budget stays under the 32 MiB default scoped-VMEM limit on all gens,
    which also leaves headroom inside v7x's 64 MiB physical VMEM.
    """
    dual = _dual_tensorcore()
    max_tile = 8 if dual else 16
    cap = max(1, int(vmem_budget_bytes // max(1, _vmem_bytes_per_batch(N, G, M))))
    max_tile = max(1, min(max_tile, cap))
    divs = [t for t in range(1, B + 1) if B % t == 0 and t <= max_tile]
    if not divs:
        divs = [1]
    if dual:
        even = [t for t in divs if (B // t) % 2 == 0]
        if even:
            return max(even)
    return max(divs)


def group_forward(xyz, num_group, group_size, batch_tile=None):
    """xyz: [B, N, 3] -> (neighborhood [B, G, M, 3], center [B, G, 3])."""
    B, N, _ = xyz.shape
    G, M = num_group, group_size
    bt = _pick_batch_tile(B, N, G, M) if batch_tile is None else batch_tile
    assert B % bt == 0

    xyz_t = jnp.transpose(xyz, (0, 2, 1))                # (B, 3, N) lane-dense points

    neigh_t, center_t = pl.pallas_call(
        _group_kernel,
        out_shape=(
            jax.ShapeDtypeStruct((B, 3, M * G), xyz.dtype),
            jax.ShapeDtypeStruct((B, 3, G), xyz.dtype),
        ),
        grid=(B // bt,),
        in_specs=[pl.BlockSpec((bt, 3, N), lambda i: (i, 0, 0))],
        out_specs=(
            pl.BlockSpec((bt, 3, M * G), lambda i: (i, 0, 0)),
            pl.BlockSpec((bt, 3, G), lambda i: (i, 0, 0)),
        ),
        compiler_params=pltpu.CompilerParams(dimension_semantics=("parallel",)),
    )(xyz_t)

    # kernel layout -> PyTorch convention (wrapper-side layout plumbing only)
    neighborhood = jnp.transpose(neigh_t.reshape(B, 3, M, G), (0, 3, 2, 1))  # [B,G,M,3]
    center = jnp.transpose(center_t, (0, 2, 1))                              # [B,G,3]
    return neighborhood, center


def _ref_group(xyz, G, M):
    """Pure numpy reference of Group.forward (FPS start index 0, stable knn)."""
    xyz = np.asarray(xyz, dtype=np.float32)
    B, N, _ = xyz.shape
    centers = np.zeros((B, G, 3), np.float32)
    neigh = np.zeros((B, G, M, 3), np.float32)
    for b in range(B):
        x = xyz[b]
        idxs = [0]
        min_d = np.sum((x - x[0]) ** 2, axis=-1)
        for _ in range(1, G):
            i = int(np.argmax(min_d))
            idxs.append(i)
            min_d = np.minimum(min_d, np.sum((x - x[i]) ** 2, axis=-1))
        C = x[np.asarray(idxs)]
        centers[b] = C
        D = np.sum((C[:, None, :] - x[None, :, :]) ** 2, axis=-1)   # (G, N)
        knn_idx = np.argsort(D, axis=-1, kind="stable")[:, :M]
        neigh[b] = x[knn_idx] - C[:, None, :]
    return neigh, centers


if __name__ == "__main__":
    B, N = 2, 128
    num_group, group_size = 16, 8      # G, M

    key = jax.random.PRNGKey(0)
    xyz = jax.random.uniform(key, (B, N, 3), dtype=jnp.float32)

    neighborhood, center = group_forward(xyz, num_group, group_size)
    neighborhood = jax.block_until_ready(neighborhood)
    center = jax.block_until_ready(center)

    assert neighborhood.shape == (B, num_group, group_size, 3)
    assert center.shape == (B, num_group, 3)

    ref_neigh, ref_center = _ref_group(xyz, num_group, group_size)
    np.testing.assert_allclose(np.asarray(center), ref_center, atol=1e-5, rtol=1e-5)
    np.testing.assert_allclose(np.asarray(neighborhood), ref_neigh, atol=1e-5, rtol=1e-5)

    print("KERNEL_OK")
</pallas_src>

<mosaic_0001>
module attributes {stable_mosaic.version = 11 : i64} {
  func.func @_group_kernel(%arg0: i32, %arg1: memref<2x3x128xf32, #tpu.memory_space<vmem>>, %arg2: memref<2x3x128xf32, #tpu.memory_space<vmem>>, %arg3: memref<2x3x16xf32, #tpu.memory_space<vmem>>) attributes {dimension_semantics = [#tpu.dimension_semantics<parallel>], iteration_bounds = array<i64: 1>, scalar_prefetch = 0 : i64, scratch_operands = 0 : i64, tpu.core_type = #tpu.core_type<tc>, window_params = [{transform_indices = @transform_0, window_bounds = array<i64: 2, 3, 128>}, {transform_indices = @transform_1, window_bounds = array<i64: 2, 3, 128>}, {transform_indices = @transform_2, window_bounds = array<i64: 2, 3, 16>}]} {
    %c0 = arith.constant 0 : index
    %c0_0 = arith.constant 0 : index
    %c0_1 = arith.constant 0 : index
    %0 = vector.load %arg1[%c0, %c0_0, %c0_1] : memref<2x3x128xf32, #tpu.memory_space<vmem>>, vector<2x3x128xf32>
    %1 = tpu.iota {dimensions = array<i32: 2>} : vector<1x1x128xi32>
    %2 = tpu.iota {dimensions = array<i32: 2>} : vector<1x1x16xi32>
    %3 = vector.extract_strided_slice %0 {offsets = [0, 0, 0], sizes = [2, 3, 1], strides = [1, 1, 1]} : vector<2x3x128xf32> to vector<2x3x1xf32>
    %4 = vector.broadcast %3 : vector<2x3x1xf32> to vector<2x3x128xf32>
    %5 = arith.subf %0, %4 : vector<2x3x128xf32>
    %6 = arith.mulf %5, %5 : vector<2x3x128xf32>
    %7 = vector.extract_strided_slice %6 {offsets = [0, 0, 0], sizes = [2, 1, 128], strides = [1, 1, 1]} : vector<2x3x128xf32> to vector<2x1x128xf32>
    %8 = vector.extract_strided_slice %6 {offsets = [0, 1, 0], sizes = [2, 1, 128], strides = [1, 1, 1]} : vector<2x3x128xf32> to vector<2x1x128xf32>
    %9 = arith.addf %7, %8 : vector<2x1x128xf32>
    %10 = vector.extract_strided_slice %6 {offsets = [0, 2, 0], sizes = [2, 1, 128], strides = [1, 1, 1]} : vector<2x3x128xf32> to vector<2x1x128xf32>
    %11 = arith.addf %9, %10 : vector<2x1x128xf32>
    %c0_i32 = arith.constant 0 : i32
    %12 = vector.broadcast %c0_i32 : i32 to vector<1x1x16xi32>
    %13 = arith.cmpi eq, %2, %12 : vector<1x1x16xi32>
    %cst = arith.constant 0.000000e+00 : f32
    %14 = vector.shape_cast %13 : vector<1x1x16xi1> to vector<1x1x16xi1>
    %15 = vector.broadcast %14 : vector<1x1x16xi1> to vector<2x3x16xi1>
    %16 = vector.shape_cast %3 : vector<2x3x1xf32> to vector<2x3x1xf32>
    %17 = vector.broadcast %16 : vector<2x3x1xf32> to vector<2x3x16xf32>
    %18 = vector.broadcast %cst : f32 to vector<2x3x16xf32>
    %19 = arith.select %15, %17, %18 : vector<2x3x16xi1>, vector<2x3x16xf32>
    %cst_2 = arith.constant -1.000000e+30 : f32
    %c1_i32 = arith.constant 1 : i32
    %cst_3 = arith.constant dense<0xFF800000> : vector<2x1xf32>
    %20 = vector.multi_reduction <maximumf>, %11, %cst_3 [2] : vector<2x1x128xf32> to vector<2x1xf32>
    %21 = vector.shape_cast %20 : vector<2x1xf32> to vector<2x1x1xf32>
    %22 = vector.broadcast %21 : vector<2x1x1xf32> to vector<2x1x128xf32>
    %23 = arith.cmpf oge, %11, %22 : vector<2x1x128xf32>
    %c128_i32 = arith.constant 128 : i32
    %24 = vector.shape_cast %1 : vector<1x1x128xi32> to vector<1x1x128xi32>
    %25 = vector.broadcast %24 : vector<1x1x128xi32> to vector<2x1x128xi32>
    %26 = vector.broadcast %c128_i32 : i32 to vector<2x1x128xi32>
    %27 = arith.select %23, %25, %26 : vector<2x1x128xi1>, vector<2x1x128xi32>
    %cst_4 = arith.constant dense<2147483647> : vector<2x1xi32>
    %28 = vector.multi_reduction <minsi>, %27, %cst_4 [2] : vector<2x1x128xi32> to vector<2x1xi32>
    %29 = vector.shape_cast %28 : vector<2x1xi32> to vector<2x1x1xi32>
    %30 = vector.broadcast %1 : vector<1x1x128xi32> to vector<2x1x128xi32>
    %31 = vector.broadcast %29 : vector<2x1x1xi32> to vector<2x1x128xi32>
    %32 = arith.cmpi eq, %30, %31 : vector<2x1x128xi32>
    %33 = vector.shape_cast %32 : vector<2x1x128xi1> to vector<2x1x128xi1>
    %34 = vector.broadcast %33 : vector<2x1x128xi1> to vector<2x3x128xi1>
    %35 = vector.broadcast %cst_2 : f32 to vector<2x3x128xf32>
    %36 = arith.select %34, %0, %35 : vector<2x3x128xi1>, vector<2x3x128xf32>
    %cst_5 = arith.constant dense<0xFF800000> : vector<2x3xf32>
    %37 = vector.multi_reduction <maximumf>, %36, %cst_5 [2] : vector<2x3x128xf32> to vector<2x3xf32>
    %38 = vector.shape_cast %37 : vector<2x3xf32> to vector<2x3x1xf32>
    %39 = vector.broadcast %c1_i32 : i32 to vector<1x1x16xi32>
    %40 = arith.cmpi eq, %2, %39 : vector<1x1x16xi32>
    %41 = vector.shape_cast %40 : vector<1x1x16xi1> to vector<1x1x16xi1>
    %42 = vector.broadcast %41 : vector<1x1x16xi1> to vector<2x3x16xi1>
    %43 = vector.shape_cast %38 : vector<2x3x1xf32> to vector<2x3x1xf32>
    %44 = vector.broadcast %43 : vector<2x3x1xf32> to vector<2x3x16xf32>
    %45 = arith.select %42, %44, %19 : vector<2x3x16xi1>, vector<2x3x16xf32>
    %46 = vector.broadcast %38 : vector<2x3x1xf32> to vector<2x3x128xf32>
    %47 = arith.subf %0, %46 : vector<2x3x128xf32>
    %48 = arith.mulf %47, %47 : vector<2x3x128xf32>
    %49 = vector.extract_strided_slice %48 {offsets = [0, 0, 0], sizes = [2, 1, 128], strides = [1, 1, 1]} : vector<2x3x128xf32> to vector<2x1x128xf32>
    %50 = vector.extract_strided_slice %48 {offsets = [0, 1, 0], sizes = [2, 1, 128], strides = [1, 1, 1]} : vector<2x3x128xf32> to vector<2x1x128xf32>
    %51 = arith.addf %49, %50 : vector<2x1x128xf32>
    %52 = vector.extract_strided_slice %48 {offsets = [0, 2, 0], sizes = [2, 1, 128], strides = [1, 1, 1]} : vector<2x3x128xf32> to vector<2x1x128xf32>
    %53 = arith.addf %51, %52 : vector<2x1x128xf32>
    %54 = arith.minimumf %11, %53 : vector<2x1x128xf32>
    %c2_i32 = arith.constant 2 : i32
    %cst_6 = arith.constant dense<0xFF800000> : vector<2x1xf32>
    %55 = vector.multi_reduction <maximumf>, %54, %cst_6 [2] : vector<2x1x128xf32> to vector<2x1xf32>
    %56 = vector.shape_cast %55 : vector<2x1xf32> to vector<2x1x1xf32>
    %57 = vector.broadcast %56 : vector<2x1x1xf32> to vector<2x1x128xf32>
    %58 = arith.cmpf oge, %54, %57 : vector<2x1x128xf32>
    %c128_i32_7 = arith.constant 128 : i32
    %59 = vector.shape_cast %1 : vector<1x1x128xi32> to vector<1x1x128xi32>
    %60 = vector.broadcast %59 : vector<1x1x128xi32> to vector<2x1x128xi32>
    %61 = vector.broadcast %c128_i32_7 : i32 to vector<2x1x128xi32>
    %62 = arith.select %58, %60, %61 : vector<2x1x128xi1>, vector<2x1x128xi32>
    %cst_8 = arith.constant dense<2147483647> : vector<2x1xi32>
    %63 = vector.multi_reduction <minsi>, %62, %cst_8 [2] : vector<2x1x128xi32> to vector<2x1xi32>
    %64 = vector.shape_cast %63 : vector<2x1xi32> to vector<2x1x1xi32>
    %65 = vector.broadcast %1 : vector<1x1x128xi32> to vector<2x1x128xi32>
    %66 = vector.broadcast %64 : vector<2x1x1xi32> to vector<2x1x128xi32>
    %67 = arith.cmpi eq, %65, %66 : vector<2x1x128xi32>
    %68 = vector.shape_cast %67 : vector<2x1x128xi1> to vector<2x1x128xi1>
    %69 = vector.broadcast %68 : vector<2x1x128xi1> to vector<2x3x128xi1>
    %70 = vector.broadcast %cst_2 : f32 to vector<2x3x128xf32>
    %71 = arith.select %69, %0, %70 : vector<2x3x128xi1>, vector<2x3x128xf32>
    %cst_9 = arith.constant dense<0xFF800000> : vector<2x3xf32>
    %72 = vector.multi_reduction <maximumf>, %71, %cst_9 [2] : vector<2x3x128xf32> to vector<2x3xf32>
    %73 = vector.shape_cast %72 : vector<2x3xf32> to vector<2x3x1xf32>
    %74 = vector.broadcast %c2_i32 : i32 to vector<1x1x16xi32>
    %75 = arith.cmpi eq, %2, %74 : vector<1x1x16xi32>
    %76 = vector.shape_cast %75 : vector<1x1x16xi1> to vector<1x1x16xi1>
    %77 = vector.broadcast %76 : vector<1x1x16xi1> to vector<2x3x16xi1>
    %78 = vector.shape_cast %73 : vector<2x3x1xf32> to vector<2x3x1xf32>
    %79 = vector.broadcast %78 : vector<2x3x1xf32> to vector<2x3x16xf32>
    %80 = arith.select %77, %79, %45 : vector<2x3x16xi1>, vector<2x3x16xf32>
    %81 = vector.broadcast %73 : vector<2x3x1xf32> to vector<2x3x128xf32>
    %82 = arith.subf %0, %81 : vector<2x3x128xf32>
    %83 = arith.mulf %82, %82 : vector<2x3x128xf32>
    %84 = vector.extract_strided_slice %83 {offsets = [0, 0, 0], sizes = [2, 1, 128], strides = [1, 1, 1]} : vector<2x3x128xf32> to vector<2x1x128xf32>
    %85 = vector.extract_strided_slice %83 {offsets = [0, 1, 0], sizes = [2, 1, 128], strides = [1, 1, 1]} : vector<2x3x128xf32> to vector<2x1x128xf32>
    %86 = arith.addf %84, %85 : vector<2x1x128xf32>
    %87 = vector.extract_strided_slice %83 {offsets = [0, 2, 0], sizes = [2, 1, 128], strides = [1, 1, 1]} : vector<2x3x128xf32> to vector<2x1x128xf32>
    %88 = arith.addf %86, %87 : vector<2x1x128xf32>
    %89 = arith.minimumf %54, %88 : vector<2x1x128xf32>
    %c3_i32 = arith.constant 3 : i32
    %cst_10 = arith.constant dense<0xFF800000> : vector<2x1xf32>
    %90 = vector.multi_reduction <maximumf>, %89, %cst_10 [2] : vector<2x1x128xf32> to vector<2x1xf32>
    %91 = vector.shape_cast %90 : vector<2x1xf32> to vector<2x1x1xf32>
    %92 = vector.broadcast %91 : vector<2x1x1xf32> to vector<2x1x128xf32>
    %93 = arith.cmpf oge, %89, %92 : vector<2x1x128xf32>
    %c128_i32_11 = arith.constant 128 : i32
    %94 = vector.shape_cast %1 : vector<1x1x128xi32> to vector<1x1x128xi32>
    %95 = vector.broadcast %94 : vector<1x1x128xi32> to vector<2x1x128xi32>
    %96 = vector.broadcast %c128_i32_11 : i32 to vector<2x1x128xi32>
    %97 = arith.select %93, %95, %96 : vector<2x1x128xi1>, vector<2x1x128xi32>
    %cst_12 = arith.constant dense<2147483647> : vector<2x1xi32>
    %98 = vector.multi_reduction <minsi>, %97, %cst_12 [2] : vector<2x1x128xi32> to vector<2x1xi32>
    %99 = vector.shape_cast %98 : vector<2x1xi32> to vector<2x1x1xi32>
    %100 = vector.broadcast %1 : vector<1x1x128xi32> to vector<2x1x128xi32>
    %101 = vector.broadcast %99 : vector<2x1x1xi32> to vector<2x1x128xi32>
    %102 = arith.cmpi eq, %100, %101 : vector<2x1x128xi32>
    %103 = vector.shape_cast %102 : vector<2x1x128xi1> to vector<2x1x128xi1>
    %104 = vector.broadcast %103 : vector<2x1x128xi1> to vector<2x3x128xi1>
    %105 = vector.broadcast %cst_2 : f32 to vector<2x3x128xf32>
    %106 = arith.select %104, %0, %105 : vector<2x3x128xi1>, vector<2x3x128xf32>
    %cst_13 = arith.constant dense<0xFF800000> : vector<2x3xf32>
    %107 = vector.multi_reduction <maximumf>, %106, %cst_13 [2] : vector<2x3x128xf32> to vector<2x3xf32>
    %108 = vector.shape_cast %107 : vector<2x3xf32> to vector<2x3x1xf32>
    %109 = vector.broadcast %c3_i32 : i32 to vector<1x1x16xi32>
    %110 = arith.cmpi eq, %2, %109 : vector<1x1x16xi32>
    %111 = vector.shape_cast %110 : vector<1x1x16xi1> to vector<1x1x16xi1>
    %112 = vector.broadcast %111 : vector<1x1x16xi1> to vector<2x3x16xi1>
    %113 = vector.shape_cast %108 : vector<2x3x1xf32> to vector<2x3x1xf32>
    %114 = vector.broadcast %113 : vector<2x3x1xf32> to vector<2x3x16xf32>
    %115 = arith.select %112, %114, %80 : vector<2x3x16xi1>, vector<2x3x16xf32>
    %116 = vector.broadcast %108 : vector<2x3x1xf32> to vector<2x3x128xf32>
    %117 = arith.subf %0, %116 : vector<2x3x128xf32>
    %118 = arith.mulf %117, %117 : vector<2x3x128xf32>
    %119 = vector.extract_strided_slice %118 {offsets = [0, 0, 0], sizes = [2, 1, 128], strides = [1, 1, 1]} : vector<2x3x128xf32> to vector<2x1x128xf32>
    %120 = vector.extract_strided_slice %118 {offsets = [0, 1, 0], sizes = [2, 1, 128], strides = [1, 1, 1]} : vector<2x3x128xf32> to vector<2x1x128xf32>
    %121 = arith.addf %119, %120 : vector<2x1x128xf32>
    %122 = vector.extract_strided_slice %118 {offsets = [0, 2, 0], sizes = [2, 1, 128], strides = [1, 1, 1]} : vector<2x3x128xf32> to vector<2x1x128xf32>
    %123 = arith.addf %121, %122 : vector<2x1x128xf32>
    %124 = arith.minimumf %89, %123 : vector<2x1x128xf32>
    %c4_i32 = arith.constant 4 : i32
    %cst_14 = arith.constant dense<0xFF800000> : vector<2x1xf32>
    %125 = vector.multi_reduction <maximumf>, %124, %cst_14 [2] : vector<2x1x128xf32> to vector<2x1xf32>
    %126 = vector.shape_cast %125 : vector<2x1xf32> to vector<2x1x1xf32>
    %127 = vector.broadcast %126 : vector<2x1x1xf32> to vector<2x1x128xf32>
    %128 = arith.cmpf oge, %124, %127 : vector<2x1x128xf32>
    %c128_i32_15 = arith.constant 128 : i32
    %129 = vector.shape_cast %1 : vector<1x1x128xi32> to vector<1x1x128xi32>
    %130 = vector.broadcast %129 : vector<1x1x128xi32> to vector<2x1x128xi32>
    %131 = vector.broadcast %c128_i32_15 : i32 to vector<2x1x128xi32>
    %132 = arith.select %128, %130, %131 : vector<2x1x128xi1>, vector<2x1x128xi32>
    %cst_16 = arith.constant dense<2147483647> : vector<2x1xi32>
    %133 = vector.multi_reduction <minsi>, %132, %cst_16 [2] : vector<2x1x128xi32> to vector<2x1xi32>
    %134 = vector.shape_cast %133 : vector<2x1xi32> to vector<2x1x1xi32>
    %135 = vector.broadcast %1 : vector<1x1x128xi32> to vector<2x1x128xi32>
    %136 = vector.broadcast %134 : vector<2x1x1xi32> to vector<2x1x128xi32>
    %137 = arith.cmpi eq, %135, %136 : vector<2x1x128xi32>
    %138 = vector.shape_cast %137 : vector<2x1x128xi1> to vector<2x1x128xi1>
    %139 = vector.broadcast %138 : vector<2x1x128xi1> to vector<2x3x128xi1>
    %140 = vector.broadcast %cst_2 : f32 to vector<2x3x128xf32>
    %141 = arith.select %139, %0, %140 : vector<2x3x128xi1>, vector<2x3x128xf32>
    %cst_17 = arith.constant dense<0xFF800000> : vector<2x3xf32>
    %142 = vector.multi_reduction <maximumf>, %141, %cst_17 [2] : vector<2x3x128xf32> to vector<2x3xf32>
    %143 = vector.shape_cast %142 : vector<2x3xf32> to vector<2x3x1xf32>
    %144 = vector.broadcast %c4_i32 : i32 to vector<1x1x16xi32>
    %145 = arith.cmpi eq, %2, %144 : vector<1x1x16xi32>
    %146 = vector.shape_cast %145 : vector<1x1x16xi1> to vector<1x1x16xi1>
    %147 = vector.broadcast %146 : vector<1x1x16xi1> to vector<2x3x16xi1>
    %148 = vector.shape_cast %143 : vector<2x3x1xf32> to vector<2x3x1xf32>
    %149 = vector.broadcast %148 : vector<2x3x1xf32> to vector<2x3x16xf32>
    %150 = arith.select %147, %149, %115 : vector<2x3x16xi1>, vector<2x3x16xf32>
    %151 = vector.broadcast %143 : vector<2x3x1xf32> to vector<2x3x128xf32>
    %152 = arith.subf %0, %151 : vector<2x3x128xf32>
    %153 = arith.mulf %152, %152 : vector<2x3x128xf32>
    %154 = vector.extract_strided_slice %153 {offsets = [0, 0, 0], sizes = [2, 1, 128], strides = [1, 1, 1]} : vector<2x3x128xf32> to vector<2x1x128xf32>
    %155 = vector.extract_strided_slice %153 {offsets = [0, 1, 0], sizes = [2, 1, 128], strides = [1, 1, 1]} : vector<2x3x128xf32> to vector<2x1x128xf32>
    %156 = arith.addf %154, %155 : vector<2x1x128xf32>
    %157 = vector.extract_strided_slice %153 {offsets = [0, 2, 0], sizes = [2, 1, 128], strides = [1, 1, 1]} : vector<2x3x128xf32> to vector<2x1x128xf32>
    %158 = arith.addf %156, %157 : vector<2x1x128xf32>
    %159 = arith.minimumf %124, %158 : vector<2x1x128xf32>
    %c5_i32 = arith.constant 5 : i32
    %cst_18 = arith.constant dense<0xFF800000> : vector<2x1xf32>
    %160 = vector.multi_reduction <maximumf>, %159, %cst_18 [2] : vector<2x1x128xf32> to vector<2x1xf32>
    %161 = vector.shape_cast %160 : vector<2x1xf32> to vector<2x1x1xf32>
    %162 = vector.broadcast %161 : vector<2x1x1xf32> to vector<2x1x128xf32>
    %163 = arith.cmpf oge, %159, %162 : vector<2x1x128xf32>
    %c128_i32_19 = arith.constant 128 : i32
    %164 = vector.shape_cast %1 : vector<1x1x128xi32> to vector<1x1x128xi32>
    %165 = vector.broadcast %164 : vector<1x1x128xi32> to vector<2x1x128xi32>
    %166 = vector.broadcast %c128_i32_19 : i32 to vector<2x1x128xi32>
    %167 = arith.select %163, %165, %166 : vector<2x1x128xi1>, vector<2x1x128xi32>
    %cst_20 = arith.constant dense<2147483647> : vector<2x1xi32>
    %168 = vector.multi_reduction <minsi>, %167, %cst_20 [2] : vector<2x1x128xi32> to vector<2x1xi32>
    %169 = vector.shape_cast %168 : vector<2x1xi32> to vector<2x1x1xi32>
    %170 = vector.broadcast %1 : vector<1x1x128xi32> to vector<2x1x128xi32>
    %171 = vector.broadcast %169 : vector<2x1x1xi32> to vector<2x1x128xi32>
    %172 = arith.cmpi eq, %170, %171 : vector<2x1x128xi32>
    %173 = vector.shape_cast %172 : vector<2x1x128xi1> to vector<2x1x128xi1>
    %174 = vector.broadcast %173 : vector<2x1x128xi1> to vector<2x3x128xi1>
    %175 = vector.broadcast %cst_2 : f32 to vector<2x3x128xf32>
    %176 = arith.select %174, %0, %175 : vector<2x3x128xi1>, vector<2x3x128xf32>
    %cst_21 = arith.constant dense<0xFF800000> : vector<2x3xf32>
    %177 = vector.multi_reduction <maximumf>, %176, %cst_21 [2] : vector<2x3x128xf32> to vector<2x3xf32>
    %178 = vector.shape_cast %177 : vector<2x3xf32> to vector<2x3x1xf32>
    %179 = vector.broadcast %c5_i32 : i32 to vector<1x1x16xi32>
    %180 = arith.cmpi eq, %2, %179 : vector<1x1x16xi32>
    %181 = vector.shape_cast %180 : vector<1x1x16xi1> to vector<1x1x16xi1>
    %182 = vector.broadcast %181 : vector<1x1x16xi1> to vector<2x3x16xi1>
    %183 = vector.shape_cast %178 : vector<2x3x1xf32> to vector<2x3x1xf32>
    %184 = vector.broadcast %183 : vector<2x3x1xf32> to vector<2x3x16xf32>
    %185 = arith.select %182, %184, %150 : vector<2x3x16xi1>, vector<2x3x16xf32>
    %186 = vector.broadcast %178 : vector<2x3x1xf32> to vector<2x3x128xf32>
    %187 = arith.subf %0, %186 : vector<2x3x128xf32>
    %188 = arith.mulf %187, %187 : vector<2x3x128xf32>
    %189 = vector.extract_strided_slice %188 {offsets = [0, 0, 0], sizes = [2, 1, 128], strides = [1, 1, 1]} : vector<2x3x128xf32> to vector<2x1x128xf32>
    %190 = vector.extract_strided_slice %188 {offsets = [0, 1, 0], sizes = [2, 1, 128], strides = [1, 1, 1]} : vector<2x3x128xf32> to vector<2x1x128xf32>
    %191 = arith.addf %189, %190 : vector<2x1x128xf32>
    %192 = vector.extract_strided_slice %188 {offsets = [0, 2, 0], sizes = [2, 1, 128], strides = [1, 1, 1]} : vector<2x3x128xf32> to vector<2x1x128xf32>
    %193 = arith.addf %191, %192 : vector<2x1x128xf32>
    %194 = arith.minimumf %159, %193 : vector<2x1x128xf32>
    %c6_i32 = arith.constant 6 : i32
    %cst_22 = arith.constant dense<0xFF800000> : vector<2x1xf32>
    %195 = vector.multi_reduction <maximumf>, %194, %cst_22 [2] : vector<2x1x128xf32> to vector<2x1xf32>
    %196 = vector.shape_cast %195 : vector<2x1xf32> to vector<2x1x1xf32>
    %197 = vector.broadcast %196 : vector<2x1x1xf32> to vector<2x1x128xf32>
    %198 = arith.cmpf oge, %194, %197 : vector<2x1x128xf32>
    %c128_i32_23 = arith.constant 128 : i32
    %199 = vector.shape_cast %1 : vector<1x1x128xi32> to vector<1x1x128xi32>
    %200 = vector.broadcast %199 : vector<1x1x128xi32> to vector<2x1x128xi32>
    %201 = vector.broadcast %c128_i32_23 : i32 to vector<2x1x128xi32>
    %202 = arith.select %198, %200, %201 : vector<2x1x128xi1>, vector<2x1x128xi32>
    %cst_24 = arith.constant dense<2147483647> : vector<2x1xi32>
    %203 = vector.multi_reduction <minsi>, %202, %cst_24 [2] : vector<2x1x128xi32> to vector<2x1xi32>
    %204 = vector.shape_cast %203 : vector<2x1xi32> to vector<2x1x1xi32>
    %205 = vector.broadcast %1 : vector<1x1x128xi32> to vector<2x1x128xi32>
    %206 = vector.broadcast %204 : vector<2x1x1xi32> to vector<2x1x128xi32>
    %207 = arith.cmpi eq, %205, %206 : vector<2x1x128xi32>
    %208 = vector.shape_cast %207 : vector<2x1x128xi1> to vector<2x1x128xi1>
    %209 = vector.broadcast %208 : vector<2x1x128xi1> to vector<2x3x128xi1>
    %210 = vector.broadcast %cst_2 : f32 to vector<2x3x128xf32>
    %211 = arith.select %209, %0, %210 : vector<2x3x128xi1>, vector<2x3x128xf32>
    %cst_25 = arith.constant dense<0xFF800000> : vector<2x3xf32>
    %212 = vector.multi_reduction <maximumf>, %211, %cst_25 [2] : vector<2x3x128xf32> to vector<2x3xf32>
    %213 = vector.shape_cast %212 : vector<2x3xf32> to vector<2x3x1xf32>
    %214 = vector.broadcast %c6_i32 : i32 to vector<1x1x16xi32>
    %215 = arith.cmpi eq, %2, %214 : vector<1x1x16xi32>
    %216 = vector.shape_cast %215 : vector<1x1x16xi1> to vector<1x1x16xi1>
    %217 = vector.broadcast %216 : vector<1x1x16xi1> to vector<2x3x16xi1>
    %218 = vector.shape_cast %213 : vector<2x3x1xf32> to vector<2x3x1xf32>
    %219 = vector.broadcast %218 : vector<2x3x1xf32> to vector<2x3x16xf32>
    %220 = arith.select %217, %219, %185 : vector<2x3x16xi1>, vector<2x3x16xf32>
    %221 = vector.broadcast %213 : vector<2x3x1xf32> to vector<2x3x128xf32>
    %222 = arith.subf %0, %221 : vector<2x3x128xf32>
    %223 = arith.mulf %222, %222 : vector<2x3x128xf32>
    %224 = vector.extract_strided_slice %223 {offsets = [0, 0, 0], sizes = [2, 1, 128], strides = [1, 1, 1]} : vector<2x3x128xf32> to vector<2x1x128xf32>
    %225 = vector.extract_strided_slice %223 {offsets = [0, 1, 0], sizes = [2, 1, 128], strides = [1, 1, 1]} : vector<2x3x128xf32> to vector<2x1x128xf32>
    %226 = arith.addf %224, %225 : vector<2x1x128xf32>
    %227 = vector.extract_strided_slice %223 {offsets = [0, 2, 0], sizes = [2, 1, 128], strides = [1, 1, 1]} : vector<2x3x128xf32> to vector<2x1x128xf32>
    %228 = arith.addf %226, %227 : vector<2x1x128xf32>
    %229 = arith.minimumf %194, %228 : vector<2x1x128xf32>
    %c7_i32 = arith.constant 7 : i32
    %cst_26 = arith.constant dense<0xFF800000> : vector<2x1xf32>
    %230 = vector.multi_reduction <maximumf>, %229, %cst_26 [2] : vector<2x1x128xf32> to vector<2x1xf32>
    %231 = vector.shape_cast %230 : vector<2x1xf32> to vector<2x1x1xf32>
    %232 = vector.broadcast %231 : vector<2x1x1xf32> to vector<2x1x128xf32>
    %233 = arith.cmpf oge, %229, %232 : vector<2x1x128xf32>
    %c128_i32_27 = arith.constant 128 : i32
    %234 = vector.shape_cast %1 : vector<1x1x128xi32> to vector<1x1x128xi32>
    %235 = vector.broadcast %234 : vector<1x1x128xi32> to vector<2x1x128xi32>
    %236 = vector.broadcast %c128_i32_27 : i32 to vector<2x1x128xi32>
    %237 = arith.select %233, %235, %236 : vector<2x1x128xi1>, vector<2x1x128xi32>
    %cst_28 = arith.constant dense<2147483647> : vector<2x1xi32>
    %238 = vector.multi_reduction <minsi>, %237, %cst_28 [2] : vector<2x1x128xi32> to vector<2x1xi32>
    %239 = vector.shape_cast %238 : vector<2x1xi32> to vector<2x1x1xi32>
    %240 = vector.broadcast %1 : vector<1x1x128xi32> to vector<2x1x128xi32>
    %241 = vector.broadcast %239 : vector<2x1x1xi32> to vector<2x1x128xi32>
    %242 = arith.cmpi eq, %240, %241 : vector<2x1x128xi32>
    %243 = vector.shape_cast %242 : vector<2x1x128xi1> to vector<2x1x128xi1>
    %244 = vector.broadcast %243 : vector<2x1x128xi1> to vector<2x3x128xi1>
    %245 = vector.broadcast %cst_2 : f32 to vector<2x3x128xf32>
    %246 = arith.select %244, %0, %245 : vector<2x3x128xi1>, vector<2x3x128xf32>
    %cst_29 = arith.constant dense<0xFF800000> : vector<2x3xf32>
    %247 = vector.multi_reduction <maximumf>, %246, %cst_29 [2] : vector<2x3x128xf32> to vector<2x3xf32>
    %248 = vector.shape_cast %247 : vector<2x3xf32> to vector<2x3x1xf32>
    %249 = vector.broadcast %c7_i32 : i32 to vector<1x1x16xi32>
    %250 = arith.cmpi eq, %2, %249 : vector<1x1x16xi32>
    %251 = vector.shape_cast %250 : vector<1x1x16xi1> to vector<1x1x16xi1>
    %252 = vector.broadcast %251 : vector<1x1x16xi1> to vector<2x3x16xi1>
    %253 = vector.shape_cast %248 : vector<2x3x1xf32> to vector<2x3x1xf32>
    %254 = vector.broadcast %253 : vector<2x3x1xf32> to vector<2x3x16xf32>
    %255 = arith.select %252, %254, %220 : vector<2x3x16xi1>, vector<2x3x16xf32>
    %256 = vector.broadcast %248 : vector<2x3x1xf32> to vector<2x3x128xf32>
    %257 = arith.subf %0, %256 : vector<2x3x128xf32>
    %258 = arith.mulf %257, %257 : vector<2x3x128xf32>
    %259 = vector.extract_strided_slice %258 {offsets = [0, 0, 0], sizes = [2, 1, 128], strides = [1, 1, 1]} : vector<2x3x128xf32> to vector<2x1x128xf32>
    %260 = vector.extract_strided_slice %258 {offsets = [0, 1, 0], sizes = [2, 1, 128], strides = [1, 1, 1]} : vector<2x3x128xf32> to vector<2x1x128xf32>
    %261 = arith.addf %259, %260 : vector<2x1x128xf32>
    %262 = vector.extract_strided_slice %258 {offsets = [0, 2, 0], sizes = [2, 1, 128], strides = [1, 1, 1]} : vector<2x3x128xf32> to vector<2x1x128xf32>
    %263 = arith.addf %261, %262 : vector<2x1x128xf32>
    %264 = arith.minimumf %229, %263 : vector<2x1x128xf32>
    %c8_i32 = arith.constant 8 : i32
    %cst_30 = arith.constant dense<0xFF800000> : vector<2x1xf32>
    %265 = vector.multi_reduction <maximumf>, %264, %cst_30 [2] : vector<2x1x128xf32> to vector<2x1xf32>
    %266 = vector.shape_cast %265 : vector<2x1xf32> to vector<2x1x1xf32>
    %267 = vector.broadcast %266 : vector<2x1x1xf32> to vector<2x1x128xf32>
    %268 = arith.cmpf oge, %264, %267 : vector<2x1x128xf32>
    %c128_i32_31 = arith.constant 128 : i32
    %269 = vector.shape_cast %1 : vector<1x1x128xi32> to vector<1x1x128xi32>
    %270 = vector.broadcast %269 : vector<1x1x128xi32> to vector<2x1x128xi32>
    %271 = vector.broadcast %c128_i32_31 : i32 to vector<2x1x128xi32>
    %272 = arith.select %268, %270, %271 : vector<2x1x128xi1>, vector<2x1x128xi32>
    %cst_32 = arith.constant dense<2147483647> : vector<2x1xi32>
    %273 = vector.multi_reduction <minsi>, %272, %cst_32 [2] : vector<2x1x128xi32> to vector<2x1xi32>
    %274 = vector.shape_cast %273 : vector<2x1xi32> to vector<2x1x1xi32>
    %275 = vector.broadcast %1 : vector<1x1x128xi32> to vector<2x1x128xi32>
    %276 = vector.broadcast %274 : vector<2x1x1xi32> to vector<2x1x128xi32>
    %277 = arith.cmpi eq, %275, %276 : vector<2x1x128xi32>
    %278 = vector.shape_cast %277 : vector<2x1x128xi1> to vector<2x1x128xi1>
    %279 = vector.broadcast %278 : vector<2x1x128xi1> to vector<2x3x128xi1>
    %280 = vector.broadcast %cst_2 : f32 to vector<2x3x128xf32>
    %281 = arith.select %279, %0, %280 : vector<2x3x128xi1>, vector<2x3x128xf32>
    %cst_33 = arith.constant dense<0xFF800000> : vector<2x3xf32>
    %282 = vector.multi_reduction <maximumf>, %281, %cst_33 [2] : vector<2x3x128xf32> to vector<2x3xf32>
    %283 = vector.shape_cast %282 : vector<2x3xf32> to vector<2x3x1xf32>
    %284 = vector.broadcast %c8_i32 : i32 to vector<1x1x16xi32>
    %285 = arith.cmpi eq, %2, %284 : vector<1x1x16xi32>
    %286 = vector.shape_cast %285 : vector<1x1x16xi1> to vector<1x1x16xi1>
    %287 = vector.broadcast %286 : vector<1x1x16xi1> to vector<2x3x16xi1>
    %288 = vector.shape_cast %283 : vector<2x3x1xf32> to vector<2x3x1xf32>
    %289 = vector.broadcast %288 : vector<2x3x1xf32> to vector<2x3x16xf32>
    %290 = arith.select %287, %289, %255 : vector<2x3x16xi1>, vector<2x3x16xf32>
    %291 = vector.broadcast %283 : vector<2x3x1xf32> to vector<2x3x128xf32>
    %292 = arith.subf %0, %291 : vector<2x3x128xf32>
    %293 = arith.mulf %292, %292 : vector<2x3x128xf32>
    %294 = vector.extract_strided_slice %293 {offsets = [0, 0, 0], sizes = [2, 1, 128], strides = [1, 1, 1]} : vector<2x3x128xf32> to vector<2x1x128xf32>
    %295 = vector.extract_strided_slice %293 {offsets = [0, 1, 0], sizes = [2, 1, 128], strides = [1, 1, 1]} : vector<2x3x128xf32> to vector<2x1x128xf32>
    %296 = arith.addf %294, %295 : vector<2x1x128xf32>
    %297 = vector.extract_strided_slice %293 {offsets = [0, 2, 0], sizes = [2, 1, 128], strides = [1, 1, 1]} : vector<2x3x128xf32> to vector<2x1x128xf32>
    %298 = arith.addf %296, %297 : vector<2x1x128xf32>
    %299 = arith.minimumf %264, %298 : vector<2x1x128xf32>
    %c9_i32 = arith.constant 9 : i32
    %cst_34 = arith.constant dense<0xFF800000> : vector<2x1xf32>
    %300 = vector.multi_reduction <maximumf>, %299, %cst_34 [2] : vector<2x1x128xf32> to vector<2x1xf32>
    %301 = vector.shape_cast %300 : vector<2x1xf32> to vector<2x1x1xf32>
    %302 = vector.broadcast %301 : vector<2x1x1xf32> to vector<2x1x128xf32>
    %303 = arith.cmpf oge, %299, %302 : vector<2x1x128xf32>
    %c128_i32_35 = arith.constant 128 : i32
    %304 = vector.shape_cast %1 : vector<1x1x128xi32> to vector<1x1x128xi32>
    %305 = vector.broadcast %304 : vector<1x1x128xi32> to vector<2x1x128xi32>
    %306 = vector.broadcast %c128_i32_35 : i32 to vector<2x1x128xi32>
    %307 = arith.select %303, %305, %306 : vector<2x1x128xi1>, vector<2x1x128xi32>
    %cst_36 = arith.constant dense<2147483647> : vector<2x1xi32>
    %308 = vector.multi_reduction <minsi>, %307, %cst_36 [2] : vector<2x1x128xi32> to vector<2x1xi32>
    %309 = vector.shape_cast %308 : vector<2x1xi32> to vector<2x1x1xi32>
    %310 = vector.broadcast %1 : vector<1x1x128xi32> to vector<2x1x128xi32>
    %311 = vector.broadcast %309 : vector<2x1x1xi32> to vector<2x1x128xi32>
    %312 = arith.cmpi eq, %310, %311 : vector<2x1x128xi32>
    %313 = vector.shape_cast %312 : vector<2x1x128xi1> to vector<2x1x128xi1>
    %314 = vector.broadcast %313 : vector<2x1x128xi1> to vector<2x3x128xi1>
    %315 = vector.broadcast %cst_2 : f32 to vector<2x3x128xf32>
    %316 = arith.select %314, %0, %315 : vector<2x3x128xi1>, vector<2x3x128xf32>
    %cst_37 = arith.constant dense<0xFF800000> : vector<2x3xf32>
    %317 = vector.multi_reduction <maximumf>, %316, %cst_37 [2] : vector<2x3x128xf32> to vector<2x3xf32>
    %318 = vector.shape_cast %317 : vector<2x3xf32> to vector<2x3x1xf32>
    %319 = vector.broadcast %c9_i32 : i32 to vector<1x1x16xi32>
    %320 = arith.cmpi eq, %2, %319 : vector<1x1x16xi32>
    %321 = vector.shape_cast %320 : vector<1x1x16xi1> to vector<1x1x16xi1>
    %322 = vector.broadcast %321 : vector<1x1x16xi1> to vector<2x3x16xi1>
    %323 = vector.shape_cast %318 : vector<2x3x1xf32> to vector<2x3x1xf32>
    %324 = vector.broadcast %323 : vector<2x3x1xf32> to vector<2x3x16xf32>
    %325 = arith.select %322, %324, %290 : vector<2x3x16xi1>, vector<2x3x16xf32>
    %326 = vector.broadcast %318 : vector<2x3x1xf32> to vector<2x3x128xf32>
    %327 = arith.subf %0, %326 : vector<2x3x128xf32>
    %328 = arith.mulf %327, %327 : vector<2x3x128xf32>
    %329 = vector.extract_strided_slice %328 {offsets = [0, 0, 0], sizes = [2, 1, 128], strides = [1, 1, 1]} : vector<2x3x128xf32> to vector<2x1x128xf32>
    %330 = vector.extract_strided_slice %328 {offsets = [0, 1, 0], sizes = [2, 1, 128], strides = [1, 1, 1]} : vector<2x3x128xf32> to vector<2x1x128xf32>
    %331 = arith.addf %329, %330 : vector<2x1x128xf32>
    %332 = vector.extract_strided_slice %328 {offsets = [0, 2, 0], sizes = [2, 1, 128], strides = [1, 1, 1]} : vector<2x3x128xf32> to vector<2x1x128xf32>
    %333 = arith.addf %331, %332 : vector<2x1x128xf32>
    %334 = arith.minimumf %299, %333 : vector<2x1x128xf32>
    %c10_i32 = arith.constant 10 : i32
    %cst_38 = arith.constant dense<0xFF800000> : vector<2x1xf32>
    %335 = vector.multi_reduction <maximumf>, %334, %cst_38 [2] : vector<2x1x128xf32> to vector<2x1xf32>
    %336 = vector.shape_cast %335 : vector<2x1xf32> to vector<2x1x1xf32>
    %337 = vector.broadcast %336 : vector<2x1x1xf32> to vector<2x1x128xf32>
    %338 = arith.cmpf oge, %334, %337 : vector<2x1x128xf32>
    %c128_i32_39 = arith.constant 128 : i32
    %339 = vector.shape_cast %1 : vector<1x1x128xi32> to vector<1x1x128xi32>
    %340 = vector.broadcast %339 : vector<1x1x128xi32> to vector<2x1x128xi32>
    %341 = vector.broadcast %c128_i32_39 : i32 to vector<2x1x128xi32>
    %342 = arith.select %338, %340, %341 : vector<2x1x128xi1>, vector<2x1x128xi32>
    %cst_40 = arith.constant dense<2147483647> : vector<2x1xi32>
    %343 = vector.multi_reduction <minsi>, %342, %cst_40 [2] : vector<2x1x128xi32> to vector<2x1xi32>
    %344 = vector.shape_cast %343 : vector<2x1xi32> to vector<2x1x1xi32>
    %345 = vector.broadcast %1 : vector<1x1x128xi32> to vector<2x1x128xi32>
    %346 = vector.broadcast %344 : vector<2x1x1xi32> to vector<2x1x128xi32>
    %347 = arith.cmpi eq, %345, %346 : vector<2x1x128xi32>
    %348 = vector.shape_cast %347 : vector<2x1x128xi1> to vector<2x1x128xi1>
    %349 = vector.broadcast %348 : vector<2x1x128xi1> to vector<2x3x128xi1>
    %350 = vector.broadcast %cst_2 : f32 to vector<2x3x128xf32>
    %351 = arith.select %349, %0, %350 : vector<2x3x128xi1>, vector<2x3x128xf32>
    %cst_41 = arith.constant dense<0xFF800000> : vector<2x3xf32>
    %352 = vector.multi_reduction <maximumf>, %351, %cst_41 [2] : vector<2x3x128xf32> to vector<2x3xf32>
    %353 = vector.shape_cast %352 : vector<2x3xf32> to vector<2x3x1xf32>
    %354 = vector.broadcast %c10_i32 : i32 to vector<1x1x16xi32>
    %355 = arith.cmpi eq, %2, %354 : vector<1x1x16xi32>
    %356 = vector.shape_cast %355 : vector<1x1x16xi1> to vector<1x1x16xi1>
    %357 = vector.broadcast %356 : vector<1x1x16xi1> to vector<2x3x16xi1>
    %358 = vector.shape_cast %353 : vector<2x3x1xf32> to vector<2x3x1xf32>
    %359 = vector.broadcast %358 : vector<2x3x1xf32> to vector<2x3x16xf32>
    %360 = arith.select %357, %359, %325 : vector<2x3x16xi1>, vector<2x3x16xf32>
    %361 = vector.broadcast %353 : vector<2x3x1xf32> to vector<2x3x128xf32>
    %362 = arith.subf %0, %361 : vector<2x3x128xf32>
    %363 = arith.mulf %362, %362 : vector<2x3x128xf32>
    %364 = vector.extract_strided_slice %363 {offsets = [0, 0, 0], sizes = [2, 1, 128], strides = [1, 1, 1]} : vector<2x3x128xf32> to vector<2x1x128xf32>
    %365 = vector.extract_strided_slice %363 {offsets = [0, 1, 0], sizes = [2, 1, 128], strides = [1, 1, 1]} : vector<2x3x128xf32> to vector<2x1x128xf32>
    %366 = arith.addf %364, %365 : vector<2x1x128xf32>
    %367 = vector.extract_strided_slice %363 {offsets = [0, 2, 0], sizes = [2, 1, 128], strides = [1, 1, 1]} : vector<2x3x128xf32> to vector<2x1x128xf32>
    %368 = arith.addf %366, %367 : vector<2x1x128xf32>
    %369 = arith.minimumf %334, %368 : vector<2x1x128xf32>
    %c11_i32 = arith.constant 11 : i32
    %cst_42 = arith.constant dense<0xFF800000> : vector<2x1xf32>
    %370 = vector.multi_reduction <maximumf>, %369, %cst_42 [2] : vector<2x1x128xf32> to vector<2x1xf32>
    %371 = vector.shape_cast %370 : vector<2x1xf32> to vector<2x1x1xf32>
    %372 = vector.broadcast %371 : vector<2x1x1xf32> to vector<2x1x128xf32>
    %373 = arith.cmpf oge, %369, %372 : vector<2x1x128xf32>
    %c128_i32_43 = arith.constant 128 : i32
    %374 = vector.shape_cast %1 : vector<1x1x128xi32> to vector<1x1x128xi32>
    %375 = vector.broadcast %374 : vector<1x1x128xi32> to vector<2x1x128xi32>
    %376 = vector.broadcast %c128_i32_43 : i32 to vector<2x1x128xi32>
    %377 = arith.select %373, %375, %376 : vector<2x1x128xi1>, vector<2x1x128xi32>
    %cst_44 = arith.constant dense<2147483647> : vector<2x1xi32>
    %378 = vector.multi_reduction <minsi>, %377, %cst_44 [2] : vector<2x1x128xi32> to vector<2x1xi32>
    %379 = vector.shape_cast %378 : vector<2x1xi32> to vector<2x1x1xi32>
    %380 = vector.broadcast %1 : vector<1x1x128xi32> to vector<2x1x128xi32>
    %381 = vector.broadcast %379 : vector<2x1x1xi32> to vector<2x1x128xi32>
    %382 = arith.cmpi eq, %380, %381 : vector<2x1x128xi32>
    %383 = vector.shape_cast %382 : vector<2x1x128xi1> to vector<2x1x128xi1>
    %384 = vector.broadcast %383 : vector<2x1x128xi1> to vector<2x3x128xi1>
    %385 = vector.broadcast %cst_2 : f32 to vector<2x3x128xf32>
    %386 = arith.select %384, %0, %385 : vector<2x3x128xi1>, vector<2x3x128xf32>
    %cst_45 = arith.constant dense<0xFF800000> : vector<2x3xf32>
    %387 = vector.multi_reduction <maximumf>, %386, %cst_45 [2] : vector<2x3x128xf32> to vector<2x3xf32>
    %388 = vector.shape_cast %387 : vector<2x3xf32> to vector<2x3x1xf32>
    %389 = vector.broadcast %c11_i32 : i32 to vector<1x1x16xi32>
    %390 = arith.cmpi eq, %2, %389 : vector<1x1x16xi32>
    %391 = vector.shape_cast %390 : vector<1x1x16xi1> to vector<1x1x16xi1>
    %392 = vector.broadcast %391 : vector<1x1x16xi1> to vector<2x3x16xi1>
    %393 = vector.shape_cast %388 : vector<2x3x1xf32> to vector<2x3x1xf32>
    %394 = vector.broadcast %393 : vector<2x3x1xf32> to vector<2x3x16xf32>
    %395 = arith.select %392, %394, %360 : vector<2x3x16xi1>, vector<2x3x16xf32>
    %396 = vector.broadcast %388 : vector<2x3x1xf32> to vector<2x3x128xf32>
    %397 = arith.subf %0, %396 : vector<2x3x128xf32>
    %398 = arith.mulf %397, %397 : vector<2x3x128xf32>
    %399 = vector.extract_strided_slice %398 {offsets = [0, 0, 0], sizes = [2, 1, 128], strides = [1, 1, 1]} : vector<2x3x128xf32> to vector<2x1x128xf32>
    %400 = vector.extract_strided_slice %398 {offsets = [0, 1, 0], sizes = [2, 1, 128], strides = [1, 1, 1]} : vector<2x3x128xf32> to vector<2x1x128xf32>
    %401 = arith.addf %399, %400 : vector<2x1x128xf32>
    %402 = vector.extract_strided_slice %398 {offsets = [0, 2, 0], sizes = [2, 1, 128], strides = [1, 1, 1]} : vector<2x3x128xf32> to vector<2x1x128xf32>
    %403 = arith.addf %401, %402 : vector<2x1x128xf32>
    %404 = arith.minimumf %369, %403 : vector<2x1x128xf32>
    %c12_i32 = arith.constant 12 : i32
    %cst_46 = arith.constant dense<0xFF800000> : vector<2x1xf32>
    %405 = vector.multi_reduction <maximumf>, %404, %cst_46 [2] : vector<2x1x128xf32> to vector<2x1xf32>
    %406 = vector.shape_cast %405 : vector<2x1xf32> to vector<2x1x1xf32>
    %407 = vector.broadcast %406 : vector<2x1x1xf32> to vector<2x1x128xf32>
    %408 = arith.cmpf oge, %404, %407 : vector<2x1x128xf32>
    %c128_i32_47 = arith.constant 128 : i32
    %409 = vector.shape_cast %1 : vector<1x1x128xi32> to vector<1x1x128xi32>
    %410 = vector.broadcast %409 : vector<1x1x128xi32> to vector<2x1x128xi32>
    %411 = vector.broadcast %c128_i32_47 : i32 to vector<2x1x128xi32>
    %412 = arith.select %408, %410, %411 : vector<2x1x128xi1>, vector<2x1x128xi32>
    %cst_48 = arith.constant dense<2147483647> : vector<2x1xi32>
    %413 = vector.multi_reduction <minsi>, %412, %cst_48 [2] : vector<2x1x128xi32> to vector<2x1xi32>
    %414 = vector.shape_cast %413 : vector<2x1xi32> to vector<2x1x1xi32>
    %415 = vector.broadcast %1 : vector<1x1x128xi32> to vector<2x1x128xi32>
    %416 = vector.broadcast %414 : vector<2x1x1xi32> to vector<2x1x128xi32>
    %417 = arith.cmpi eq, %415, %416 : vector<2x1x128xi32>
    %418 = vector.shape_cast %417 : vector<2x1x128xi1> to vector<2x1x128xi1>
    %419 = vector.broadcast %418 : vector<2x1x128xi1> to vector<2x3x128xi1>
    %420 = vector.broadcast %cst_2 : f32 to vector<2x3x128xf32>
    %421 = arith.select %419, %0, %420 : vector<2x3x128xi1>, vector<2x3x128xf32>
    %cst_49 = arith.constant dense<0xFF800000> : vector<2x3xf32>
    %422 = vector.multi_reduction <maximumf>, %421, %cst_49 [2] : vector<2x3x128xf32> to vector<2x3xf32>
    %423 = vector.shape_cast %422 : vector<2x3xf32> to vector<2x3x1xf32>
    %424 = vector.broadcast %c12_i32 : i32 to vector<1x1x16xi32>
    %425 = arith.cmpi eq, %2, %424 : vector<1x1x16xi32>
    %426 = vector.shape_cast %425 : vector<1x1x16xi1> to vector<1x1x16xi1>
    %427 = vector.broadcast %426 : vector<1x1x16xi1> to vector<2x3x16xi1>
    %428 = vector.shape_cast %423 : vector<2x3x1xf32> to vector<2x3x1xf32>
    %429 = vector.broadcast %428 : vector<2x3x1xf32> to vector<2x3x16xf32>
    %430 = arith.select %427, %429, %395 : vector<2x3x16xi1>, vector<2x3x16xf32>
    %431 = vector.broadcast %423 : vector<2x3x1xf32> to vector<2x3x128xf32>
    %432 = arith.subf %0, %431 : vector<2x3x128xf32>
    %433 = arith.mulf %432, %432 : vector<2x3x128xf32>
    %434 = vector.extract_strided_slice %433 {offsets = [0, 0, 0], sizes = [2, 1, 128], strides = [1, 1, 1]} : vector<2x3x128xf32> to vector<2x1x128xf32>
    %435 = vector.extract_strided_slice %433 {offsets = [0, 1, 0], sizes = [2, 1, 128], strides = [1, 1, 1]} : vector<2x3x128xf32> to vector<2x1x128xf32>
    %436 = arith.addf %434, %435 : vector<2x1x128xf32>
    %437 = vector.extract_strided_slice %433 {offsets = [0, 2, 0], sizes = [2, 1, 128], strides = [1, 1, 1]} : vector<2x3x128xf32> to vector<2x1x128xf32>
    %438 = arith.addf %436, %437 : vector<2x1x128xf32>
    %439 = arith.minimumf %404, %438 : vector<2x1x128xf32>
    %c13_i32 = arith.constant 13 : i32
    %cst_50 = arith.constant dense<0xFF800000> : vector<2x1xf32>
    %440 = vector.multi_reduction <maximumf>, %439, %cst_50 [2] : vector<2x1x128xf32> to vector<2x1xf32>
    %441 = vector.shape_cast %440 : vector<2x1xf32> to vector<2x1x1xf32>
    %442 = vector.broadcast %441 : vector<2x1x1xf32> to vector<2x1x128xf32>
    %443 = arith.cmpf oge, %439, %442 : vector<2x1x128xf32>
    %c128_i32_51 = arith.constant 128 : i32
    %444 = vector.shape_cast %1 : vector<1x1x128xi32> to vector<1x1x128xi32>
    %445 = vector.broadcast %444 : vector<1x1x128xi32> to vector<2x1x128xi32>
    %446 = vector.broadcast %c128_i32_51 : i32 to vector<2x1x128xi32>
    %447 = arith.select %443, %445, %446 : vector<2x1x128xi1>, vector<2x1x128xi32>
    %cst_52 = arith.constant dense<2147483647> : vector<2x1xi32>
    %448 = vector.multi_reduction <minsi>, %447, %cst_52 [2] : vector<2x1x128xi32> to vector<2x1xi32>
    %449 = vector.shape_cast %448 : vector<2x1xi32> to vector<2x1x1xi32>
    %450 = vector.broadcast %1 : vector<1x1x128xi32> to vector<2x1x128xi32>
    %451 = vector.broadcast %449 : vector<2x1x1xi32> to vector<2x1x128xi32>
    %452 = arith.cmpi eq, %450, %451 : vector<2x1x128xi32>
    %453 = vector.shape_cast %452 : vector<2x1x128xi1> to vector<2x1x128xi1>
    %454 = vector.broadcast %453 : vector<2x1x128xi1> to vector<2x3x128xi1>
    %455 = vector.broadcast %cst_2 : f32 to vector<2x3x128xf32>
    %456 = arith.select %454, %0, %455 : vector<2x3x128xi1>, vector<2x3x128xf32>
    %cst_53 = arith.constant dense<0xFF800000> : vector<2x3xf32>
    %457 = vector.multi_reduction <maximumf>, %456, %cst_53 [2] : vector<2x3x128xf32> to vector<2x3xf32>
    %458 = vector.shape_cast %457 : vector<2x3xf32> to vector<2x3x1xf32>
    %459 = vector.broadcast %c13_i32 : i32 to vector<1x1x16xi32>
    %460 = arith.cmpi eq, %2, %459 : vector<1x1x16xi32>
    %461 = vector.shape_cast %460 : vector<1x1x16xi1> to vector<1x1x16xi1>
    %462 = vector.broadcast %461 : vector<1x1x16xi1> to vector<2x3x16xi1>
    %463 = vector.shape_cast %458 : vector<2x3x1xf32> to vector<2x3x1xf32>
    %464 = vector.broadcast %463 : vector<2x3x1xf32> to vector<2x3x16xf32>
    %465 = arith.select %462, %464, %430 : vector<2x3x16xi1>, vector<2x3x16xf32>
    %466 = vector.broadcast %458 : vector<2x3x1xf32> to vector<2x3x128xf32>
    %467 = arith.subf %0, %466 : vector<2x3x128xf32>
    %468 = arith.mulf %467, %467 : vector<2x3x128xf32>
    %469 = vector.extract_strided_slice %468 {offsets = [0, 0, 0], sizes = [2, 1, 128], strides = [1, 1, 1]} : vector<2x3x128xf32> to vector<2x1x128xf32>
    %470 = vector.extract_strided_slice %468 {offsets = [0, 1, 0], sizes = [2, 1, 128], strides = [1, 1, 1]} : vector<2x3x128xf32> to vector<2x1x128xf32>
    %471 = arith.addf %469, %470 : vector<2x1x128xf32>
    %472 = vector.extract_strided_slice %468 {offsets = [0, 2, 0], sizes = [2, 1, 128], strides = [1, 1, 1]} : vector<2x3x128xf32> to vector<2x1x128xf32>
    %473 = arith.addf %471, %472 : vector<2x1x128xf32>
    %474 = arith.minimumf %439, %473 : vector<2x1x128xf32>
    %c14_i32 = arith.constant 14 : i32
    %cst_54 = arith.constant dense<0xFF800000> : vector<2x1xf32>
    %475 = vector.multi_reduction <maximumf>, %474, %cst_54 [2] : vector<2x1x128xf32> to vector<2x1xf32>
    %476 = vector.shape_cast %475 : vector<2x1xf32> to vector<2x1x1xf32>
    %477 = vector.broadcast %476 : vector<2x1x1xf32> to vector<2x1x128xf32>
    %478 = arith.cmpf oge, %474, %477 : vector<2x1x128xf32>
    %c128_i32_55 = arith.constant 128 : i32
    %479 = vector.shape_cast %1 : vector<1x1x128xi32> to vector<1x1x128xi32>
    %480 = vector.broadcast %479 : vector<1x1x128xi32> to vector<2x1x128xi32>
    %481 = vector.broadcast %c128_i32_55 : i32 to vector<2x1x128xi32>
    %482 = arith.select %478, %480, %481 : vector<2x1x128xi1>, vector<2x1x128xi32>
    %cst_56 = arith.constant dense<2147483647> : vector<2x1xi32>
    %483 = vector.multi_reduction <minsi>, %482, %cst_56 [2] : vector<2x1x128xi32> to vector<2x1xi32>
    %484 = vector.shape_cast %483 : vector<2x1xi32> to vector<2x1x1xi32>
    %485 = vector.broadcast %1 : vector<1x1x128xi32> to vector<2x1x128xi32>
    %486 = vector.broadcast %484 : vector<2x1x1xi32> to vector<2x1x128xi32>
    %487 = arith.cmpi eq, %485, %486 : vector<2x1x128xi32>
    %488 = vector.shape_cast %487 : vector<2x1x128xi1> to vector<2x1x128xi1>
    %489 = vector.broadcast %488 : vector<2x1x128xi1> to vector<2x3x128xi1>
    %490 = vector.broadcast %cst_2 : f32 to vector<2x3x128xf32>
    %491 = arith.select %489, %0, %490 : vector<2x3x128xi1>, vector<2x3x128xf32>
    %cst_57 = arith.constant dense<0xFF800000> : vector<2x3xf32>
    %492 = vector.multi_reduction <maximumf>, %491, %cst_57 [2] : vector<2x3x128xf32> to vector<2x3xf32>
    %493 = vector.shape_cast %492 : vector<2x3xf32> to vector<2x3x1xf32>
    %494 = vector.broadcast %c14_i32 : i32 to vector<1x1x16xi32>
    %495 = arith.cmpi eq, %2, %494 : vector<1x1x16xi32>
    %496 = vector.shape_cast %495 : vector<1x1x16xi1> to vector<1x1x16xi1>
    %497 = vector.broadcast %496 : vector<1x1x16xi1> to vector<2x3x16xi1>
    %498 = vector.shape_cast %493 : vector<2x3x1xf32> to vector<2x3x1xf32>
    %499 = vector.broadcast %498 : vector<2x3x1xf32> to vector<2x3x16xf32>
    %500 = arith.select %497, %499, %465 : vector<2x3x16xi1>, vector<2x3x16xf32>
    %501 = vector.broadcast %493 : vector<2x3x1xf32> to vector<2x3x128xf32>
    %502 = arith.subf %0, %501 : vector<2x3x128xf32>
    %503 = arith.mulf %502, %502 : vector<2x3x128xf32>
    %504 = vector.extract_strided_slice %503 {offsets = [0, 0, 0], sizes = [2, 1, 128], strides = [1, 1, 1]} : vector<2x3x128xf32> to vector<2x1x128xf32>
    %505 = vector.extract_strided_slice %503 {offsets = [0, 1, 0], sizes = [2, 1, 128], strides = [1, 1, 1]} : vector<2x3x128xf32> to vector<2x1x128xf32>
    %506 = arith.addf %504, %505 : vector<2x1x128xf32>
    %507 = vector.extract_strided_slice %503 {offsets = [0, 2, 0], sizes = [2, 1, 128], strides = [1, 1, 1]} : vector<2x3x128xf32> to vector<2x1x128xf32>
    %508 = arith.addf %506, %507 : vector<2x1x128xf32>
    %509 = arith.minimumf %474, %508 : vector<2x1x128xf32>
    %c15_i32 = arith.constant 15 : i32
    %cst_58 = arith.constant dense<0xFF800000> : vector<2x1xf32>
    %510 = vector.multi_reduction <maximumf>, %509, %cst_58 [2] : vector<2x1x128xf32> to vector<2x1xf32>
    %511 = vector.shape_cast %510 : vector<2x1xf32> to vector<2x1x1xf32>
    %512 = vector.broadcast %511 : vector<2x1x1xf32> to vector<2x1x128xf32>
    %513 = arith.cmpf oge, %509, %512 : vector<2x1x128xf32>
    %c128_i32_59 = arith.constant 128 : i32
    %514 = vector.shape_cast %1 : vector<1x1x128xi32> to vector<1x1x128xi32>
    %515 = vector.broadcast %514 : vector<1x1x128xi32> to vector<2x1x128xi32>
    %516 = vector.broadcast %c128_i32_59 : i32 to vector<2x1x128xi32>
    %517 = arith.select %513, %515, %516 : vector<2x1x128xi1>, vector<2x1x128xi32>
    %cst_60 = arith.constant dense<2147483647> : vector<2x1xi32>
    %518 = vector.multi_reduction <minsi>, %517, %cst_60 [2] : vector<2x1x128xi32> to vector<2x1xi32>
    %519 = vector.shape_cast %518 : vector<2x1xi32> to vector<2x1x1xi32>
    %520 = vector.broadcast %1 : vector<1x1x128xi32> to vector<2x1x128xi32>
    %521 = vector.broadcast %519 : vector<2x1x1xi32> to vector<2x1x128xi32>
    %522 = arith.cmpi eq, %520, %521 : vector<2x1x128xi32>
    %523 = vector.shape_cast %522 : vector<2x1x128xi1> to vector<2x1x128xi1>
    %524 = vector.broadcast %523 : vector<2x1x128xi1> to vector<2x3x128xi1>
    %525 = vector.broadcast %cst_2 : f32 to vector<2x3x128xf32>
    %526 = arith.select %524, %0, %525 : vector<2x3x128xi1>, vector<2x3x128xf32>
    %cst_61 = arith.constant dense<0xFF800000> : vector<2x3xf32>
    %527 = vector.multi_reduction <maximumf>, %526, %cst_61 [2] : vector<2x3x128xf32> to vector<2x3xf32>
    %528 = vector.shape_cast %527 : vector<2x3xf32> to vector<2x3x1xf32>
    %529 = vector.broadcast %c15_i32 : i32 to vector<1x1x16xi32>
    %530 = arith.cmpi eq, %2, %529 : vector<1x1x16xi32>
    %531 = vector.shape_cast %530 : vector<1x1x16xi1> to vector<1x1x16xi1>
    %532 = vector.broadcast %531 : vector<1x1x16xi1> to vector<2x3x16xi1>
    %533 = vector.shape_cast %528 : vector<2x3x1xf32> to vector<2x3x1xf32>
    %534 = vector.broadcast %533 : vector<2x3x1xf32> to vector<2x3x16xf32>
    %535 = arith.select %532, %534, %500 : vector<2x3x16xi1>, vector<2x3x16xf32>
    %536 = vector.broadcast %528 : vector<2x3x1xf32> to vector<2x3x128xf32>
    %537 = arith.subf %0, %536 : vector<2x3x128xf32>
    %538 = arith.mulf %537, %537 : vector<2x3x128xf32>
    %539 = vector.extract_strided_slice %538 {offsets = [0, 0, 0], sizes = [2, 1, 128], strides = [1, 1, 1]} : vector<2x3x128xf32> to vector<2x1x128xf32>
    %540 = vector.extract_strided_slice %538 {offsets = [0, 1, 0], sizes = [2, 1, 128], strides = [1, 1, 1]} : vector<2x3x128xf32> to vector<2x1x128xf32>
    %541 = arith.addf %539, %540 : vector<2x1x128xf32>
    %542 = vector.extract_strided_slice %538 {offsets = [0, 2, 0], sizes = [2, 1, 128], strides = [1, 1, 1]} : vector<2x3x128xf32> to vector<2x1x128xf32>
    %543 = arith.addf %541, %542 : vector<2x1x128xf32>
    %544 = arith.minimumf %509, %543 : vector<2x1x128xf32>
    %c15_i32_62 = arith.constant 15 : i32
    %c0_63 = arith.constant 0 : index
    %c0_64 = arith.constant 0 : index
    %c0_65 = arith.constant 0 : index
    %545 = vector.load %arg3[%c0_63, %c0_64, %c0_65] : memref<2x3x16xf32, #tpu.memory_space<vmem>>, vector<2x3x16xf32>
    tpu.vector_store %arg3[%c0_63, %c0_64, %c0_65], %535 {strides = array<i32>} : memref<2x3x16xf32, #tpu.memory_space<vmem>>, vector<2x3x16xf32>,
    %546 = tpu.transpose %535, [0, 2, 1] : vector<2x3x16xf32> -> vector<2x16x3xf32>
    %547 = vector.extract_strided_slice %0 {offsets = [0, 0, 0], sizes = [2, 1, 128], strides = [1, 1, 1]} : vector<2x3x128xf32> to vector<2x1x128xf32>
    %548 = vector.extract_strided_slice %546 {offsets = [0, 0, 0], sizes = [2, 16, 1], strides = [1, 1, 1]} : vector<2x16x3xf32> to vector<2x16x1xf32>
    %549 = vector.broadcast %547 : vector<2x1x128xf32> to vector<2x16x128xf32>
    %550 = vector.broadcast %548 : vector<2x16x1xf32> to vector<2x16x128xf32>
    %551 = arith.subf %549, %550 : vector<2x16x128xf32>
    %552 = vector.extract_strided_slice %0 {offsets = [0, 1, 0], sizes = [2, 1, 128], strides = [1, 1, 1]} : vector<2x3x128xf32> to vector<2x1x128xf32>
    %553 = vector.extract_strided_slice %546 {offsets = [0, 0, 1], sizes = [2, 16, 1], strides = [1, 1, 1]} : vector<2x16x3xf32> to vector<2x16x1xf32>
    %554 = vector.broadcast %552 : vector<2x1x128xf32> to vector<2x16x128xf32>
    %555 = vector.broadcast %553 : vector<2x16x1xf32> to vector<2x16x128xf32>
    %556 = arith.subf %554, %555 : vector<2x16x128xf32>
    %557 = vector.extract_strided_slice %0 {offsets = [0, 2, 0], sizes = [2, 1, 128], strides = [1, 1, 1]} : vector<2x3x128xf32> to vector<2x1x128xf32>
    %558 = vector.extract_strided_slice %546 {offsets = [0, 0, 2], sizes = [2, 16, 1], strides = [1, 1, 1]} : vector<2x16x3xf32> to vector<2x16x1xf32>
    %559 = vector.broadcast %557 : vector<2x1x128xf32> to vector<2x16x128xf32>
    %560 = vector.broadcast %558 : vector<2x16x1xf32> to vector<2x16x128xf32>
    %561 = arith.subf %559, %560 : vector<2x16x128xf32>
    %562 = arith.mulf %551, %551 : vector<2x16x128xf32>
    %563 = arith.mulf %556, %556 : vector<2x16x128xf32>
    %564 = arith.addf %562, %563 : vector<2x16x128xf32>
    %565 = arith.mulf %561, %561 : vector<2x16x128xf32>
    %566 = arith.addf %564, %565 : vector<2x16x128xf32>
    %cst_66 = arith.constant dense<0x7F800000> : vector<2x16xf32>
    %567 = vector.multi_reduction <minimumf>, %566, %cst_66 [2] : vector<2x16x128xf32> to vector<2x16xf32>
    %568 = vector.shape_cast %567 : vector<2x16xf32> to vector<2x16x1xf32>
    %569 = vector.broadcast %568 : vector<2x16x1xf32> to vector<2x16x128xf32>
    %570 = arith.cmpf ole, %566, %569 : vector<2x16x128xf32>
    %c128_i32_67 = arith.constant 128 : i32
    %571 = vector.shape_cast %1 : vector<1x1x128xi32> to vector<1x1x128xi32>
    %572 = vector.broadcast %571 : vector<1x1x128xi32> to vector<2x16x128xi32>
    %573 = vector.broadcast %c128_i32_67 : i32 to vector<2x16x128xi32>
    %574 = arith.select %570, %572, %573 : vector<2x16x128xi1>, vector<2x16x128xi32>
    %cst_68 = arith.constant dense<2147483647> : vector<2x16xi32>
    %575 = vector.multi_reduction <minsi>, %574, %cst_68 [2] : vector<2x16x128xi32> to vector<2x16xi32>
    %576 = vector.shape_cast %575 : vector<2x16xi32> to vector<2x16x1xi32>
    %577 = vector.broadcast %1 : vector<1x1x128xi32> to vector<2x16x128xi32>
    %578 = vector.broadcast %576 : vector<2x16x1xi32> to vector<2x16x128xi32>
    %579 = arith.cmpi eq, %577, %578 : vector<2x16x128xi32>
    %580 = arith.extui %579 : vector<2x16x128xi1> to vector<2x16x128xi32>
    %581 = arith.sitofp %580 : vector<2x16x128xi32> to vector<2x16x128xf32>
    "tpu.trace_start"() <{level = 10 : i32, message = "bcn,bgn->bcg"}> : () -> ()
    %cst_69 = arith.constant dense<0.000000e+00> : vector<2x3x16xf32>
    %582 = tpu.matmul %0, %581, %cst_69 {dimension_numbers = #tpu.dot_dimension_numbers<[2], [2], [1], [1], [0, 0, 0, 1, 1, 1], [0], [0]>} : vector<2x3x128xf32>, vector<2x16x128xf32>, vector<2x3x16xf32> -> vector<2x3x16xf32>
    "tpu.trace_stop"() : () -> ()
    %583 = arith.subf %582, %535 : vector<2x3x16xf32>
    %c0_70 = arith.constant 0 : index
    %c0_71 = arith.constant 0 : index
    %c0_72 = arith.constant 0 : index
    %584 = vector.load %arg2[%c0_70, %c0_71, %c0_72] : memref<2x3x128xf32, #tpu.memory_space<vmem>>, vector<2x3x16xf32>
    tpu.vector_store %arg2[%c0_70, %c0_71, %c0_72], %583 {strides = array<i32>} : memref<2x3x128xf32, #tpu.memory_space<vmem>>, vector<2x3x16xf32>,
    %cst_73 = arith.constant 1.000000e+30 : f32
    %585 = vector.broadcast %cst_73 : f32 to vector<2x16x128xf32>
    %586 = arith.select %579, %585, %566 : vector<2x16x128xi1>, vector<2x16x128xf32>
    %cst_74 = arith.constant dense<0x7F800000> : vector<2x16xf32>
    %587 = vector.multi_reduction <minimumf>, %586, %cst_74 [2] : vector<2x16x128xf32> to vector<2x16xf32>
    %588 = vector.shape_cast %587 : vector<2x16xf32> to vector<2x16x1xf32>
    %589 = vector.broadcast %588 : vector<2x16x1xf32> to vector<2x16x128xf32>
    %590 = arith.cmpf ole, %586, %589 : vector<2x16x128xf32>
    %c128_i32_75 = arith.constant 128 : i32
    %591 = vector.shape_cast %1 : vector<1x1x128xi32> to vector<1x1x128xi32>
    %592 = vector.broadcast %591 : vector<1x1x128xi32> to vector<2x16x128xi32>
    %593 = vector.broadcast %c128_i32_75 : i32 to vector<2x16x128xi32>
    %594 = arith.select %590, %592, %593 : vector<2x16x128xi1>, vector<2x16x128xi32>
    %cst_76 = arith.constant dense<2147483647> : vector<2x16xi32>
    %595 = vector.multi_reduction <minsi>, %594, %cst_76 [2] : vector<2x16x128xi32> to vector<2x16xi32>
    %596 = vector.shape_cast %595 : vector<2x16xi32> to vector<2x16x1xi32>
    %597 = vector.broadcast %1 : vector<1x1x128xi32> to vector<2x16x128xi32>
    %598 = vector.broadcast %596 : vector<2x16x1xi32> to vector<2x16x128xi32>
    %599 = arith.cmpi eq, %597, %598 : vector<2x16x128xi32>
    %600 = arith.extui %599 : vector<2x16x128xi1> to vector<2x16x128xi32>
    %601 = arith.sitofp %600 : vector<2x16x128xi32> to vector<2x16x128xf32>
    "tpu.trace_start"() <{level = 10 : i32, message = "bcn,bgn->bcg"}> : () -> ()
    %cst_77 = arith.constant dense<0.000000e+00> : vector<2x3x16xf32>
    %602 = tpu.matmul %0, %601, %cst_77 {dimension_numbers = #tpu.dot_dimension_numbers<[2], [2], [1], [1], [0, 0, 0, 1, 1, 1], [0], [0]>} : vector<2x3x128xf32>, vector<2x16x128xf32>, vector<2x3x16xf32> -> vector<2x3x16xf32>
    "tpu.trace_stop"() : () -> ()
    %603 = arith.subf %602, %535 : vector<2x3x16xf32>
    %c0_78 = arith.constant 0 : index
    %c0_79 = arith.constant 0 : index
    %c16 = arith.constant 16 : index
    %604 = vector.load %arg2[%c0_78, %c0_79, %c16] : memref<2x3x128xf32, #tpu.memory_space<vmem>>, vector<2x3x16xf32>
    tpu.vector_store %arg2[%c0_78, %c0_79, %c16], %603 {strides = array<i32>} : memref<2x3x128xf32, #tpu.memory_space<vmem>>, vector<2x3x16xf32>,
    %cst_80 = arith.constant 1.000000e+30 : f32
    %605 = vector.broadcast %cst_80 : f32 to vector<2x16x128xf32>
    %606 = arith.select %599, %605, %586 : vector<2x16x128xi1>, vector<2x16x128xf32>
    %cst_81 = arith.constant dense<0x7F800000> : vector<2x16xf32>
    %607 = vector.multi_reduction <minimumf>, %606, %cst_81 [2] : vector<2x16x128xf32> to vector<2x16xf32>
    %608 = vector.shape_cast %607 : vector<2x16xf32> to vector<2x16x1xf32>
    %609 = vector.broadcast %608 : vector<2x16x1xf32> to vector<2x16x128xf32>
    %610 = arith.cmpf ole, %606, %609 : vector<2x16x128xf32>
    %c128_i32_82 = arith.constant 128 : i32
    %611 = vector.shape_cast %1 : vector<1x1x128xi32> to vector<1x1x128xi32>
    %612 = vector.broadcast %611 : vector<1x1x128xi32> to vector<2x16x128xi32>
    %613 = vector.broadcast %c128_i32_82 : i32 to vector<2x16x128xi32>
    %614 = arith.select %610, %612, %613 : vector<2x16x128xi1>, vector<2x16x128xi32>
    %cst_83 = arith.constant dense<2147483647> : vector<2x16xi32>
    %615 = vector.multi_reduction <minsi>, %614, %cst_83 [2] : vector<2x16x128xi32> to vector<2x16xi32>
    %616 = vector.shape_cast %615 : vector<2x16xi32> to vector<2x16x1xi32>
    %617 = vector.broadcast %1 : vector<1x1x128xi32> to vector<2x16x128xi32>
    %618 = vector.broadcast %616 : vector<2x16x1xi32> to vector<2x16x128xi32>
    %619 = arith.cmpi eq, %617, %618 : vector<2x16x128xi32>
    %620 = arith.extui %619 : vector<2x16x128xi1> to vector<2x16x128xi32>
    %621 = arith.sitofp %620 : vector<2x16x128xi32> to vector<2x16x128xf32>
    "tpu.trace_start"() <{level = 10 : i32, message = "bcn,bgn->bcg"}> : () -> ()
    %cst_84 = arith.constant dense<0.000000e+00> : vector<2x3x16xf32>
    %622 = tpu.matmul %0, %621, %cst_84 {dimension_numbers = #tpu.dot_dimension_numbers<[2], [2], [1], [1], [0, 0, 0, 1, 1, 1], [0], [0]>} : vector<2x3x128xf32>, vector<2x16x128xf32>, vector<2x3x16xf32> -> vector<2x3x16xf32>
    "tpu.trace_stop"() : () -> ()
    %623 = arith.subf %622, %535 : vector<2x3x16xf32>
    %c0_85 = arith.constant 0 : index
    %c0_86 = arith.constant 0 : index
    %c32 = arith.constant 32 : index
    %624 = vector.load %arg2[%c0_85, %c0_86, %c32] : memref<2x3x128xf32, #tpu.memory_space<vmem>>, vector<2x3x16xf32>
    tpu.vector_store %arg2[%c0_85, %c0_86, %c32], %623 {strides = array<i32>} : memref<2x3x128xf32, #tpu.memory_space<vmem>>, vector<2x3x16xf32>,
    %cst_87 = arith.constant 1.000000e+30 : f32
    %625 = vector.broadcast %cst_87 : f32 to vector<2x16x128xf32>
    %626 = arith.select %619, %625, %606 : vector<2x16x128xi1>, vector<2x16x128xf32>
    %cst_88 = arith.constant dense<0x7F800000> : vector<2x16xf32>
    %627 = vector.multi_reduction <minimumf>, %626, %cst_88 [2] : vector<2x16x128xf32> to vector<2x16xf32>
    %628 = vector.shape_cast %627 : vector<2x16xf32> to vector<2x16x1xf32>
    %629 = vector.broadcast %628 : vector<2x16x1xf32> to vector<2x16x128xf32>
    %630 = arith.cmpf ole, %626, %629 : vector<2x16x128xf32>
    %c128_i32_89 = arith.constant 128 : i32
    %631 = vector.shape_cast %1 : vector<1x1x128xi32> to vector<1x1x128xi32>
    %632 = vector.broadcast %631 : vector<1x1x128xi32> to vector<2x16x128xi32>
    %633 = vector.broadcast %c128_i32_89 : i32 to vector<2x16x128xi32>
    %634 = arith.select %630, %632, %633 : vector<2x16x128xi1>, vector<2x16x128xi32>
    %cst_90 = arith.constant dense<2147483647> : vector<2x16xi32>
    %635 = vector.multi_reduction <minsi>, %634, %cst_90 [2] : vector<2x16x128xi32> to vector<2x16xi32>
    %636 = vector.shape_cast %635 : vector<2x16xi32> to vector<2x16x1xi32>
    %637 = vector.broadcast %1 : vector<1x1x128xi32> to vector<2x16x128xi32>
    %638 = vector.broadcast %636 : vector<2x16x1xi32> to vector<2x16x128xi32>
    %639 = arith.cmpi eq, %637, %638 : vector<2x16x128xi32>
    %640 = arith.extui %639 : vector<2x16x128xi1> to vector<2x16x128xi32>
    %641 = arith.sitofp %640 : vector<2x16x128xi32> to vector<2x16x128xf32>
    "tpu.trace_start"() <{level = 10 : i32, message = "bcn,bgn->bcg"}> : () -> ()
    %cst_91 = arith.constant dense<0.000000e+00> : vector<2x3x16xf32>
    %642 = tpu.matmul %0, %641, %cst_91 {dimension_numbers = #tpu.dot_dimension_numbers<[2], [2], [1], [1], [0, 0, 0, 1, 1, 1], [0], [0]>} : vector<2x3x128xf32>, vector<2x16x128xf32>, vector<2x3x16xf32> -> vector<2x3x16xf32>
    "tpu.trace_stop"() : () -> ()
    %643 = arith.subf %642, %535 : vector<2x3x16xf32>
    %c0_92 = arith.constant 0 : index
    %c0_93 = arith.constant 0 : index
    %c48 = arith.constant 48 : index
    %644 = vector.load %arg2[%c0_92, %c0_93, %c48] : memref<2x3x128xf32, #tpu.memory_space<vmem>>, vector<2x3x16xf32>
    tpu.vector_store %arg2[%c0_92, %c0_93, %c48], %643 {strides = array<i32>} : memref<2x3x128xf32, #tpu.memory_space<vmem>>, vector<2x3x16xf32>,
    %cst_94 = arith.constant 1.000000e+30 : f32
    %645 = vector.broadcast %cst_94 : f32 to vector<2x16x128xf32>
    %646 = arith.select %639, %645, %626 : vector<2x16x128xi1>, vector<2x16x128xf32>
    %cst_95 = arith.constant dense<0x7F800000> : vector<2x16xf32>
    %647 = vector.multi_reduction <minimumf>, %646, %cst_95 [2] : vector<2x16x128xf32> to vector<2x16xf32>
    %648 = vector.shape_cast %647 : vector<2x16xf32> to vector<2x16x1xf32>
    %649 = vector.broadcast %648 : vector<2x16x1xf32> to vector<2x16x128xf32>
    %650 = arith.cmpf ole, %646, %649 : vector<2x16x128xf32>
    %c128_i32_96 = arith.constant 128 : i32
    %651 = vector.shape_cast %1 : vector<1x1x128xi32> to vector<1x1x128xi32>
    %652 = vector.broadcast %651 : vector<1x1x128xi32> to vector<2x16x128xi32>
    %653 = vector.broadcast %c128_i32_96 : i32 to vector<2x16x128xi32>
    %654 = arith.select %650, %652, %653 : vector<2x16x128xi1>, vector<2x16x128xi32>
    %cst_97 = arith.constant dense<2147483647> : vector<2x16xi32>
    %655 = vector.multi_reduction <minsi>, %654, %cst_97 [2] : vector<2x16x128xi32> to vector<2x16xi32>
    %656 = vector.shape_cast %655 : vector<2x16xi32> to vector<2x16x1xi32>
    %657 = vector.broadcast %1 : vector<1x1x128xi32> to vector<2x16x128xi32>
    %658 = vector.broadcast %656 : vector<2x16x1xi32> to vector<2x16x128xi32>
    %659 = arith.cmpi eq, %657, %658 : vector<2x16x128xi32>
    %660 = arith.extui %659 : vector<2x16x128xi1> to vector<2x16x128xi32>
    %661 = arith.sitofp %660 : vector<2x16x128xi32> to vector<2x16x128xf32>
    "tpu.trace_start"() <{level = 10 : i32, message = "bcn,bgn->bcg"}> : () -> ()
    %cst_98 = arith.constant dense<0.000000e+00> : vector<2x3x16xf32>
    %662 = tpu.matmul %0, %661, %cst_98 {dimension_numbers = #tpu.dot_dimension_numbers<[2], [2], [1], [1], [0, 0, 0, 1, 1, 1], [0], [0]>} : vector<2x3x128xf32>, vector<2x16x128xf32>, vector<2x3x16xf32> -> vector<2x3x16xf32>
    "tpu.trace_stop"() : () -> ()
    %663 = arith.subf %662, %535 : vector<2x3x16xf32>
    %c0_99 = arith.constant 0 : index
    %c0_100 = arith.constant 0 : index
    %c64 = arith.constant 64 : index
    %664 = vector.load %arg2[%c0_99, %c0_100, %c64] : memref<2x3x128xf32, #tpu.memory_space<vmem>>, vector<2x3x16xf32>
    tpu.vector_store %arg2[%c0_99, %c0_100, %c64], %663 {strides = array<i32>} : memref<2x3x128xf32, #tpu.memory_space<vmem>>, vector<2x3x16xf32>,
    %cst_101 = arith.constant 1.000000e+30 : f32
    %665 = vector.broadcast %cst_101 : f32 to vector<2x16x128xf32>
    %666 = arith.select %659, %665, %646 : vector<2x16x128xi1>, vector<2x16x128xf32>
    %cst_102 = arith.constant dense<0x7F800000> : vector<2x16xf32>
    %667 = vector.multi_reduction <minimumf>, %666, %cst_102 [2] : vector<2x16x128xf32> to vector<2x16xf32>
    %668 = vector.shape_cast %667 : vector<2x16xf32> to vector<2x16x1xf32>
    %669 = vector.broadcast %668 : vector<2x16x1xf32> to vector<2x16x128xf32>
    %670 = arith.cmpf ole, %666, %669 : vector<2x16x128xf32>
    %c128_i32_103 = arith.constant 128 : i32
    %671 = vector.shape_cast %1 : vector<1x1x128xi32> to vector<1x1x128xi32>
    %672 = vector.broadcast %671 : vector<1x1x128xi32> to vector<2x16x128xi32>
    %673 = vector.broadcast %c128_i32_103 : i32 to vector<2x16x128xi32>
    %674 = arith.select %670, %672, %673 : vector<2x16x128xi1>, vector<2x16x128xi32>
    %cst_104 = arith.constant dense<2147483647> : vector<2x16xi32>
    %675 = vector.multi_reduction <minsi>, %674, %cst_104 [2] : vector<2x16x128xi32> to vector<2x16xi32>
    %676 = vector.shape_cast %675 : vector<2x16xi32> to vector<2x16x1xi32>
    %677 = vector.broadcast %1 : vector<1x1x128xi32> to vector<2x16x128xi32>
    %678 = vector.broadcast %676 : vector<2x16x1xi32> to vector<2x16x128xi32>
    %679 = arith.cmpi eq, %677, %678 : vector<2x16x128xi32>
    %680 = arith.extui %679 : vector<2x16x128xi1> to vector<2x16x128xi32>
    %681 = arith.sitofp %680 : vector<2x16x128xi32> to vector<2x16x128xf32>
    "tpu.trace_start"() <{level = 10 : i32, message = "bcn,bgn->bcg"}> : () -> ()
    %cst_105 = arith.constant dense<0.000000e+00> : vector<2x3x16xf32>
    %682 = tpu.matmul %0, %681, %cst_105 {dimension_numbers = #tpu.dot_dimension_numbers<[2], [2], [1], [1], [0, 0, 0, 1, 1, 1], [0], [0]>} : vector<2x3x128xf32>, vector<2x16x128xf32>, vector<2x3x16xf32> -> vector<2x3x16xf32>
    "tpu.trace_stop"() : () -> ()
    %683 = arith.subf %682, %535 : vector<2x3x16xf32>
    %c0_106 = arith.constant 0 : index
    %c0_107 = arith.constant 0 : index
    %c80 = arith.constant 80 : index
    %684 = vector.load %arg2[%c0_106, %c0_107, %c80] : memref<2x3x128xf32, #tpu.memory_space<vmem>>, vector<2x3x16xf32>
    tpu.vector_store %arg2[%c0_106, %c0_107, %c80], %683 {strides = array<i32>} : memref<2x3x128xf32, #tpu.memory_space<vmem>>, vector<2x3x16xf32>,
    %cst_108 = arith.constant 1.000000e+30 : f32
    %685 = vector.broadcast %cst_108 : f32 to vector<2x16x128xf32>
    %686 = arith.select %679, %685, %666 : vector<2x16x128xi1>, vector<2x16x128xf32>
    %cst_109 = arith.constant dense<0x7F800000> : vector<2x16xf32>
    %687 = vector.multi_reduction <minimumf>, %686, %cst_109 [2] : vector<2x16x128xf32> to vector<2x16xf32>
    %688 = vector.shape_cast %687 : vector<2x16xf32> to vector<2x16x1xf32>
    %689 = vector.broadcast %688 : vector<2x16x1xf32> to vector<2x16x128xf32>
    %690 = arith.cmpf ole, %686, %689 : vector<2x16x128xf32>
    %c128_i32_110 = arith.constant 128 : i32
    %691 = vector.shape_cast %1 : vector<1x1x128xi32> to vector<1x1x128xi32>
    %692 = vector.broadcast %691 : vector<1x1x128xi32> to vector<2x16x128xi32>
    %693 = vector.broadcast %c128_i32_110 : i32 to vector<2x16x128xi32>
    %694 = arith.select %690, %692, %693 : vector<2x16x128xi1>, vector<2x16x128xi32>
    %cst_111 = arith.constant dense<2147483647> : vector<2x16xi32>
    %695 = vector.multi_reduction <minsi>, %694, %cst_111 [2] : vector<2x16x128xi32> to vector<2x16xi32>
    %696 = vector.shape_cast %695 : vector<2x16xi32> to vector<2x16x1xi32>
    %697 = vector.broadcast %1 : vector<1x1x128xi32> to vector<2x16x128xi32>
    %698 = vector.broadcast %696 : vector<2x16x1xi32> to vector<2x16x128xi32>
    %699 = arith.cmpi eq, %697, %698 : vector<2x16x128xi32>
    %700 = arith.extui %699 : vector<2x16x128xi1> to vector<2x16x128xi32>
    %701 = arith.sitofp %700 : vector<2x16x128xi32> to vector<2x16x128xf32>
    "tpu.trace_start"() <{level = 10 : i32, message = "bcn,bgn->bcg"}> : () -> ()
    %cst_112 = arith.constant dense<0.000000e+00> : vector<2x3x16xf32>
    %702 = tpu.matmul %0, %701, %cst_112 {dimension_numbers = #tpu.dot_dimension_numbers<[2], [2], [1], [1], [0, 0, 0, 1, 1, 1], [0], [0]>} : vector<2x3x128xf32>, vector<2x16x128xf32>, vector<2x3x16xf32> -> vector<2x3x16xf32>
    "tpu.trace_stop"() : () -> ()
    %703 = arith.subf %702, %535 : vector<2x3x16xf32>
    %c0_113 = arith.constant 0 : index
    %c0_114 = arith.constant 0 : index
    %c96 = arith.constant 96 : index
    %704 = vector.load %arg2[%c0_113, %c0_114, %c96] : memref<2x3x128xf32, #tpu.memory_space<vmem>>, vector<2x3x16xf32>
    tpu.vector_store %arg2[%c0_113, %c0_114, %c96], %703 {strides = array<i32>} : memref<2x3x128xf32, #tpu.memory_space<vmem>>, vector<2x3x16xf32>,
    %cst_115 = arith.constant 1.000000e+30 : f32
    %705 = vector.broadcast %cst_115 : f32 to vector<2x16x128xf32>
    %706 = arith.select %699, %705, %686 : vector<2x16x128xi1>, vector<2x16x128xf32>
    %cst_116 = arith.constant dense<0x7F800000> : vector<2x16xf32>
    %707 = vector.multi_reduction <minimumf>, %706, %cst_116 [2] : vector<2x16x128xf32> to vector<2x16xf32>
    %708 = vector.shape_cast %707 : vector<2x16xf32> to vector<2x16x1xf32>
    %709 = vector.broadcast %708 : vector<2x16x1xf32> to vector<2x16x128xf32>
    %710 = arith.cmpf ole, %706, %709 : vector<2x16x128xf32>
    %c128_i32_117 = arith.constant 128 : i32
    %711 = vector.shape_cast %1 : vector<1x1x128xi32> to vector<1x1x128xi32>
    %712 = vector.broadcast %711 : vector<1x1x128xi32> to vector<2x16x128xi32>
    %713 = vector.broadcast %c128_i32_117 : i32 to vector<2x16x128xi32>
    %714 = arith.select %710, %712, %713 : vector<2x16x128xi1>, vector<2x16x128xi32>
    %cst_118 = arith.constant dense<2147483647> : vector<2x16xi32>
    %715 = vector.multi_reduction <minsi>, %714, %cst_118 [2] : vector<2x16x128xi32> to vector<2x16xi32>
    %716 = vector.shape_cast %715 : vector<2x16xi32> to vector<2x16x1xi32>
    %717 = vector.broadcast %1 : vector<1x1x128xi32> to vector<2x16x128xi32>
    %718 = vector.broadcast %716 : vector<2x16x1xi32> to vector<2x16x128xi32>
    %719 = arith.cmpi eq, %717, %718 : vector<2x16x128xi32>
    %720 = arith.extui %719 : vector<2x16x128xi1> to vector<2x16x128xi32>
    %721 = arith.sitofp %720 : vector<2x16x128xi32> to vector<2x16x128xf32>
    "tpu.trace_start"() <{level = 10 : i32, message = "bcn,bgn->bcg"}> : () -> ()
    %cst_119 = arith.constant dense<0.000000e+00> : vector<2x3x16xf32>
    %722 = tpu.matmul %0, %721, %cst_119 {dimension_numbers = #tpu.dot_dimension_numbers<[2], [2], [1], [1], [0, 0, 0, 1, 1, 1], [0], [0]>} : vector<2x3x128xf32>, vector<2x16x128xf32>, vector<2x3x16xf32> -> vector<2x3x16xf32>
    "tpu.trace_stop"() : () -> ()
    %723 = arith.subf %722, %535 : vector<2x3x16xf32>
    %c0_120 = arith.constant 0 : index
    %c0_121 = arith.constant 0 : index
    %c112 = arith.constant 112 : index
    %724 = vector.load %arg2[%c0_120, %c0_121, %c112] : memref<2x3x128xf32, #tpu.memory_space<vmem>>, vector<2x3x16xf32>
    tpu.vector_store %arg2[%c0_120, %c0_121, %c112], %723 {strides = array<i32>} : memref<2x3x128xf32, #tpu.memory_space<vmem>>, vector<2x3x16xf32>,
    return
  }
  func.func @transform_0(%arg0: i32) -> (i32, i32, i32) {
    %c0_i32 = arith.constant 0 : i32
    %c0_i32_0 = arith.constant 0 : i32
    %c0_i32_1 = arith.constant 0 : i32
    return %arg0, %c0_i32, %c0_i32_0 : i32, i32, i32
  }
  func.func @transform_1(%arg0: i32) -> (i32, i32, i32) {
    %c0_i32 = arith.constant 0 : i32
    %c0_i32_0 = arith.constant 0 : i32
    %c0_i32_1 = arith.constant 0 : i32
    return %arg0, %c0_i32, %c0_i32_0 : i32, i32, i32
  }
  func.func @transform_2(%arg0: i32) -> (i32, i32, i32) {
    %c0_i32 = arith.constant 0 : i32
    %c0_i32_0 = arith.constant 0 : i32
    %c0_i32_1 = arith.constant 0 : i32
    return %arg0, %c0_i32, %c0_i32_0 : i32, i32, i32
  }
}

</mosaic_0001>

<llo_original>
// kernel: tpu_custom_call.1
$region0: #{tpu_custom_call.1}
  #allocation0 [shape = 'u32[]', space=smem, size = 0x4, offset = 0x4, fixed_abs, tag = 'smem constant byte address 0x4 - core index']
  #allocation1 [shape = 'u32[144,128]{1,0:T(1,128)}', space=vmem, size = 0x12000, scoped, tag = 'internal scratch']
  %s0 = inlined_call_operand.vmem [shape: f32[2,3,128], index: 0, kind: input, shape index: {}]
  %s1 = inlined_call_operand.vmem [shape: f32[2,3,128], index: 1, kind: output, shape index: {0}]
  %s2 = inlined_call_operand.vmem [shape: f32[2,3,16], index: 2, kind: output, shape index: {1}]
  %3 = xla_tuple %s1, %s2
  %s4 = sld [smem:[#allocation0]]
  $region22: #{tpu_custom_call.1} parent=0
    _
  %s6 = ssub.s32 1, %s4
  %s7 = scalar_select 0, %s6, %s4
  // Predicated region
  $region2: #{tpu_custom_call.1} parent=0 // pred_check
    _
  $region3: #{tpu_custom_call.1} parent=0 // pred_check_branch
    %9 = sbr.rel (0) target = $region5
  $region4: #{tpu_custom_call.1} parent=0 // pred_region
    _
  $region5: #{tpu_custom_call.1} parent=0 // pred_fallthru
    _
  %v10 = vld [vmem:[%s0] sm:$0x7]
  %v11 = vld [vmem:[%s0 + $0x4] sm:$0x7]
  %v12 = vlaneseq
  %v13 = vand.u32 %v12, 127
  %15 = vset.pattern.permute.xlu0 0
  %16 = vperm.xlu0 %15, %v10
  %v17 = vpop.permute.xlu0 %16
  %20 = vset.pattern.permute.xlu0 0
  %21 = vperm.xlu0 %20, %v11
  %v22 = vpop.permute.xlu0 %21
  %v24 = vsub.f32 %v10, %v17
  %v25 = vsub.f32 %v11, %v22
  %v26 = vmul.f32 %v24, %v24
  %v27 = vmul.f32 %v25, %v25
  %v30 = vrot.slane %v26, 1
  %v31 = vrot.slane %v27, 1
  %v34 = vadd.f32 %v26, %v30
  %v35 = vadd.f32 %v27, %v31
  %v36 = vrot.slane %v26, 2
  %v37 = vrot.slane %v27, 2
  %v40 = vadd.f32 %v34, %v36
  %v41 = vadd.f32 %v35, %v37
  %vm42 = vcmp.eq.s32.totalorder %v13, 0
  %v43 = vsel %vm42, 1, 0
  %vm44 = vcmp.eq.s32.totalorder %v43, 1
  %v45 = vsel %vm44, %v17, 0.0
  %v46 = vsel %vm44, %v22, 0.0
  %vm47 = vcmask 1040384
  %v48 = vsel %vm47, %v40, -inf
  %49 = vmax.xlane.f32.xlu0 %v48
  %v50 = vpop.xlane.xlu0 %49
  %v51 = vsel %vm47, %v41, -inf
  %52 = vmax.xlane.f32.xlu0 %v51
  %v53 = vpop.xlane.xlu0 %52
  %vm54 = vcmp.ge.f32.partialorder %v40, %v50
  %vm55 = vcmp.ge.f32.partialorder %v41, %v53
  %v56 = vsel %vm54, %v13, 128
  %v57 = vsel %vm55, %v13, 128
  %v58 = vsel %vm47, %v56, 2147483647
  %v59 = vand.u32 %v58, 65535
  %v60 = vshra.s32 %v58, 16
  %v61 = vcvt.s32.f32 %v59
  %v62 = vcvt.s32.f32 %v60
  %63 = vmin.xlane.f32.xlu0 %v62
  %v64 = vpop.xlane.xlu0 %63
  %vm65 = vcmp.eq.f32.partialorder %v62, %v64
  %v66 = vsel %vm65, %v61, inf
  %67 = vmin.xlane.f32.xlu0 %v66
  %v68 = vpop.xlane.xlu0 %67
  %v69 = vcvt.f32.s32 %v68
  %v70 = vcvt.f32.s32 %v64
  %v71 = vshll.u32 %v70, 16
  %v72 = vadd.s32 %v71, %v69
  %v73 = vsel %vm47, %v57, 2147483647
  %v74 = vand.u32 %v73, 65535
  %v75 = vshra.s32 %v73, 16
  %v76 = vcvt.s32.f32 %v74
  %v77 = vcvt.s32.f32 %v75
  %78 = vmin.xlane.f32.xlu0 %v77
  %v79 = vpop.xlane.xlu0 %78
  %vm80 = vcmp.eq.f32.partialorder %v77, %v79
  %v81 = vsel %vm80, %v76, inf
  %82 = vmin.xlane.f32.xlu0 %v81
  %v83 = vpop.xlane.xlu0 %82
  %v84 = vcvt.f32.s32 %v83
  %v85 = vcvt.f32.s32 %v79
  %v86 = vshll.u32 %v85, 16
  %v87 = vadd.s32 %v86, %v84
  %vm88 = vcmp.eq.s32.totalorder %v13, %v72
  %vm89 = vcmp.eq.s32.totalorder %v13, %v87
  %v90 = vsel %vm88, 1, 0
  %v91 = vsel %vm89, 1, 0
  %v92 = vlaneseq
  %v93 = vshrl.u32 %v92, 7
  %v94 = vsub.s32 0, %v93
  %v95 = vrot.slane %v90, %v94
  %v96 = vlaneseq
  %v97 = vshrl.u32 %v96, 7
  %v98 = vsub.s32 0, %v97
  %v99 = vrot.slane %v91, %v98
  %vm100 = vcmp.eq.s32.totalorder %v95, 1
  %vm101 = vcmp.eq.s32.totalorder %v99, 1
  %v102 = vsel %vm100, %v10, -1e+30
  %v103 = vsel %vm101, %v11, -1e+30
  %vm104 = vcmask 1042432
  %v105 = vsel %vm104, %v102, -inf
  %106 = vmax.xlane.f32.xlu0 %v105
  %v107 = vpop.xlane.xlu0 %106
  %v108 = vsel %vm104, %v103, -inf
  %109 = vmax.xlane.f32.xlu0 %v108
  %v110 = vpop.xlane.xlu0 %109
  %vm111 = vcmp.eq.s32.totalorder %v13, 1
  %v112 = vsel %vm111, 1, 0
  %vm113 = vcmp.eq.s32.totalorder %v112, 1
  %v114 = vsel %vm113, %v107, %v45
  %v115 = vsel %vm113, %v110, %v46
  %v116 = vsub.f32 %v10, %v107
  %v117 = vsub.f32 %v11, %v110
  %v118 = vmul.f32 %v116, %v116
  %v119 = vmul.f32 %v117, %v117
  %v122 = vrot.slane %v118, 1
  %v123 = vrot.slane %v119, 1
  %v126 = vadd.f32 %v118, %v122
  %v127 = vadd.f32 %v119, %v123
  %v128 = vrot.slane %v118, 2
  %v129 = vrot.slane %v119, 2
  %v132 = vadd.f32 %v126, %v128
  %v133 = vadd.f32 %v127, %v129
  %v134 = vmin.f32 %v40, %v132
  %v135 = vmin.f32 %v41, %v133
  %v136 = vsel %vm47, %v134, -inf
  %137 = vmax.xlane.f32.xlu0 %v136
  %v138 = vpop.xlane.xlu0 %137
  %v139 = vsel %vm47, %v135, -inf
  %140 = vmax.xlane.f32.xlu0 %v139
  %v141 = vpop.xlane.xlu0 %140
  %vm142 = vcmp.ge.f32.partialorder %v134, %v138
  %vm143 = vcmp.ge.f32.partialorder %v135, %v141
  %v144 = vsel %vm142, %v13, 128
  %v145 = vsel %vm143, %v13, 128
  %v146 = vsel %vm47, %v144, 2147483647
  %v147 = vand.u32 %v146, 65535
  %v148 = vshra.s32 %v146, 16
  %v149 = vcvt.s32.f32 %v147
  %v150 = vcvt.s32.f32 %v148
  %151 = vmin.xlane.f32.xlu0 %v150
  %v152 = vpop.xlane.xlu0 %151
  %vm153 = vcmp.eq.f32.partialorder %v150, %v152
  %v154 = vsel %vm153, %v149, inf
  %155 = vmin.xlane.f32.xlu0 %v154
  %v156 = vpop.xlane.xlu0 %155
  %v157 = vcvt.f32.s32 %v156
  %v158 = vcvt.f32.s32 %v152
  %v159 = vshll.u32 %v158, 16
  %v160 = vadd.s32 %v159, %v157
  %v161 = vsel %vm47, %v145, 2147483647
  %v162 = vand.u32 %v161, 65535
  %v163 = vshra.s32 %v161, 16
  %v164 = vcvt.s32.f32 %v162
  %v165 = vcvt.s32.f32 %v163
  %166 = vmin.xlane.f32.xlu0 %v165
  %v167 = vpop.xlane.xlu0 %166
  %vm168 = vcmp.eq.f32.partialorder %v165, %v167
  %v169 = vsel %vm168, %v164, inf
  %170 = vmin.xlane.f32.xlu0 %v169
  %v171 = vpop.xlane.xlu0 %170
  %v172 = vcvt.f32.s32 %v171
  %v173 = vcvt.f32.s32 %v167
  %v174 = vshll.u32 %v173, 16
  %v175 = vadd.s32 %v174, %v172
  %vm176 = vcmp.eq.s32.totalorder %v13, %v160
  %vm177 = vcmp.eq.s32.totalorder %v13, %v175
  %v178 = vsel %vm176, 1, 0
  %v179 = vsel %vm177, 1, 0
  %v180 = vlaneseq
  %v181 = vshrl.u32 %v180, 7
  %v182 = vsub.s32 0, %v181
  %v183 = vrot.slane %v178, %v182
  %v184 = vlaneseq
  %v185 = vshrl.u32 %v184, 7
  %v186 = vsub.s32 0, %v185
  %v187 = vrot.slane %v179, %v186
  %vm188 = vcmp.eq.s32.totalorder %v183, 1
  %vm189 = vcmp.eq.s32.totalorder %v187, 1
  %v190 = vsel %vm188, %v10, -1e+30
  %v191 = vsel %vm189, %v11, -1e+30
  %v192 = vsel %vm104, %v190, -inf
  %193 = vmax.xlane.f32.xlu0 %v192
  %v194 = vpop.xlane.xlu0 %193
  %v195 = vsel %vm104, %v191, -inf
  %196 = vmax.xlane.f32.xlu0 %v195
  %v197 = vpop.xlane.xlu0 %196
  %vm198 = vcmp.eq.s32.totalorder %v13, 2
  %v199 = vsel %vm198, 1, 0
  %vm200 = vcmp.eq.s32.totalorder %v199, 1
  %v201 = vsel %vm200, %v194, %v114
  %v202 = vsel %vm200, %v197, %v115
  %v203 = vsub.f32 %v10, %v194
  %v204 = vsub.f32 %v11, %v197
  %v205 = vmul.f32 %v203, %v203
  %v206 = vmul.f32 %v204, %v204
  %v209 = vrot.slane %v205, 1
  %v210 = vrot.slane %v206, 1
  %v213 = vadd.f32 %v205, %v209
  %v214 = vadd.f32 %v206, %v210
  %v215 = vrot.slane %v205, 2
  %v216 = vrot.slane %v206, 2
  %v219 = vadd.f32 %v213, %v215
  %v220 = vadd.f32 %v214, %v216
  %v221 = vmin.f32 %v134, %v219
  %v222 = vmin.f32 %v135, %v220
  %v223 = vsel %vm47, %v221, -inf
  %224 = vmax.xlane.f32.xlu0 %v223
  %v225 = vpop.xlane.xlu0 %224
  %v226 = vsel %vm47, %v222, -inf
  %227 = vmax.xlane.f32.xlu0 %v226
  %v228 = vpop.xlane.xlu0 %227
  %vm229 = vcmp.ge.f32.partialorder %v221, %v225
  %vm230 = vcmp.ge.f32.partialorder %v222, %v228
  %v231 = vsel %vm229, %v13, 128
  %v232 = vsel %vm230, %v13, 128
  %v233 = vsel %vm47, %v231, 2147483647
  %v234 = vand.u32 %v233, 65535
  %v235 = vshra.s32 %v233, 16
  %v236 = vcvt.s32.f32 %v234
  %v237 = vcvt.s32.f32 %v235
  %238 = vmin.xlane.f32.xlu0 %v237
  %v239 = vpop.xlane.xlu0 %238
  %vm240 = vcmp.eq.f32.partialorder %v237, %v239
  %v241 = vsel %vm240, %v236, inf
  %242 = vmin.xlane.f32.xlu0 %v241
  %v243 = vpop.xlane.xlu0 %242
  %v244 = vcvt.f32.s32 %v243
  %v245 = vcvt.f32.s32 %v239
  %v246 = vshll.u32 %v245, 16
  %v247 = vadd.s32 %v246, %v244
  %v248 = vsel %vm47, %v232, 2147483647
  %v249 = vand.u32 %v248, 65535
  %v250 = vshra.s32 %v248, 16
  %v251 = vcvt.s32.f32 %v249
  %v252 = vcvt.s32.f32 %v250
  %253 = vmin.xlane.f32.xlu0 %v252
  %v254 = vpop.xlane.xlu0 %253
  %vm255 = vcmp.eq.f32.partialorder %v252, %v254
  %v256 = vsel %vm255, %v251, inf
  %257 = vmin.xlane.f32.xlu0 %v256
  %v258 = vpop.xlane.xlu0 %257
  %v259 = vcvt.f32.s32 %v258
  %v260 = vcvt.f32.s32 %v254
  %v261 = vshll.u32 %v260, 16
  %v262 = vadd.s32 %v261, %v259
  %vm263 = vcmp.eq.s32.totalorder %v13, %v247
  %vm264 = vcmp.eq.s32.totalorder %v13, %v262
  %v265 = vsel %vm263, 1, 0
  %v266 = vsel %vm264, 1, 0
  %v267 = vlaneseq
  %v268 = vshrl.u32 %v267, 7
  %v269 = vsub.s32 0, %v268
  %v270 = vrot.slane %v265, %v269
  %v271 = vlaneseq
  %v272 = vshrl.u32 %v271, 7
  %v273 = vsub.s32 0, %v272
  %v274 = vrot.slane %v266, %v273
  %vm275 = vcmp.eq.s32.totalorder %v270, 1
  %vm276 = vcmp.eq.s32.totalorder %v274, 1
  %v277 = vsel %vm275, %v10, -1e+30
  %v278 = vsel %vm276, %v11, -1e+30
  %v279 = vsel %vm104, %v277, -inf
  %280 = vmax.xlane.f32.xlu0 %v279
  %v281 = vpop.xlane.xlu0 %280
  %v282 = vsel %vm104, %v278, -inf
  %283 = vmax.xlane.f32.xlu0 %v282
  %v284 = vpop.xlane.xlu0 %283
  %vm285 = vcmp.eq.s32.totalorder %v13, 3
  %v286 = vsel %vm285, 1, 0
  %vm287 = vcmp.eq.s32.totalorder %v286, 1
  %v288 = vsel %vm287, %v281, %v201
  %v289 = vsel %vm287, %v284, %v202
  %v290 = vsub.f32 %v10, %v281
  %v291 = vsub.f32 %v11, %v284
  %v292 = vmul.f32 %v290, %v290
  %v293 = vmul.f32 %v291, %v291
  %v296 = vrot.slane %v292, 1
  %v297 = vrot.slane %v293, 1
  %v300 = vadd.f32 %v292, %v296
  %v301 = vadd.f32 %v293, %v297
  %v302 = vrot.slane %v292, 2
  %v303 = vrot.slane %v293, 2
  %v306 = vadd.f32 %v300, %v302
  %v307 = vadd.f32 %v301, %v303
  %v308 = vmin.f32 %v221, %v306
  %v309 = vmin.f32 %v222, %v307
  %v310 = vsel %vm47, %v308, -inf
  %311 = vmax.xlane.f32.xlu0 %v310
  %v312 = vpop.xlane.xlu0 %311
  %v313 = vsel %vm47, %v309, -inf
  %314 = vmax.xlane.f32.xlu0 %v313
  %v315 = vpop.xlane.xlu0 %314
  %vm316 = vcmp.ge.f32.partialorder %v308, %v312
  %vm317 = vcmp.ge.f32.partialorder %v309, %v315
  %v318 = vsel %vm316, %v13, 128
  %v319 = vsel %vm317, %v13, 128
  %v320 = vsel %vm47, %v318, 2147483647
  %v321 = vand.u32 %v320, 65535
  %v322 = vshra.s32 %v320, 16
  %v323 = vcvt.s32.f32 %v321
  %v324 = vcvt.s32.f32 %v322
  %325 = vmin.xlane.f32.xlu0 %v324
  %v326 = vpop.xlane.xlu0 %325
  %vm327 = vcmp.eq.f32.partialorder %v324, %v326
  %v328 = vsel %vm327, %v323, inf
  %329 = vmin.xlane.f32.xlu0 %v328
  %v330 = vpop.xlane.xlu0 %329
  %v331 = vcvt.f32.s32 %v330
  %v332 = vcvt.f32.s32 %v326
  %v333 = vshll.u32 %v332, 16
  %v334 = vadd.s32 %v333, %v331
  %v335 = vsel %vm47, %v319, 2147483647
  %v336 = vand.u32 %v335, 65535
  %v337 = vshra.s32 %v335, 16
  %v338 = vcvt.s32.f32 %v336
  %v339 = vcvt.s32.f32 %v337
  %340 = vmin.xlane.f32.xlu0 %v339
  %v341 = vpop.xlane.xlu0 %340
  %vm342 = vcmp.eq.f32.partialorder %v339, %v341
  %v343 = vsel %vm342, %v338, inf
  %344 = vmin.xlane.f32.xlu0 %v343
  %v345 = vpop.xlane.xlu0 %344
  %v346 = vcvt.f32.s32 %v345
  %v347 = vcvt.f32.s32 %v341
  %v348 = vshll.u32 %v347, 16
  %v349 = vadd.s32 %v348, %v346
  %vm350 = vcmp.eq.s32.totalorder %v13, %v334
  %vm351 = vcmp.eq.s32.totalorder %v13, %v349
  %v352 = vsel %vm350, 1, 0
  %v353 = vsel %vm351, 1, 0
  %v354 = vlaneseq
  %v355 = vshrl.u32 %v354, 7
  %v356 = vsub.s32 0, %v355
  %v357 = vrot.slane %v352, %v356
  %v358 = vlaneseq
  %v359 = vshrl.u32 %v358, 7
  %v360 = vsub.s32 0, %v359
  %v361 = vrot.slane %v353, %v360
  %vm362 = vcmp.eq.s32.totalorder %v357, 1
  %vm363 = vcmp.eq.s32.totalorder %v361, 1
  %v364 = vsel %vm362, %v10, -1e+30
  %v365 = vsel %vm363, %v11, -1e+30
  %v366 = vsel %vm104, %v364, -inf
  %367 = vmax.xlane.f32.xlu0 %v366
  %v368 = vpop.xlane.xlu0 %367
  %v369 = vsel %vm104, %v365, -inf
  %370 = vmax.xlane.f32.xlu0 %v369
  %v371 = vpop.xlane.xlu0 %370
  %vm372 = vcmp.eq.s32.totalorder %v13, 4
  %v373 = vsel %vm372, 1, 0
  %vm374 = vcmp.eq.s32.totalorder %v373, 1
  %v375 = vsel %vm374, %v368, %v288
  %v376 = vsel %vm374, %v371, %v289
  %v377 = vsub.f32 %v10, %v368
  %v378 = vsub.f32 %v11, %v371
  %v379 = vmul.f32 %v377, %v377
  %v380 = vmul.f32 %v378, %v378
  %v383 = vrot.slane %v379, 1
  %v384 = vrot.slane %v380, 1
  %v387 = vadd.f32 %v379, %v383
  %v388 = vadd.f32 %v380, %v384
  %v389 = vrot.slane %v379, 2
  %v390 = vrot.slane %v380, 2
  %v393 = vadd.f32 %v387, %v389
  %v394 = vadd.f32 %v388, %v390
  %v395 = vmin.f32 %v308, %v393
  %v396 = vmin.f32 %v309, %v394
  %v397 = vsel %vm47, %v395, -inf
  %398 = vmax.xlane.f32.xlu0 %v397
  %v399 = vpop.xlane.xlu0 %398
  %v400 = vsel %vm47, %v396, -inf
  %401 = vmax.xlane.f32.xlu0 %v400
  %v402 = vpop.xlane.xlu0 %401
  %vm403 = vcmp.ge.f32.partialorder %v395, %v399
  %vm404 = vcmp.ge.f32.partialorder %v396, %v402
  %v405 = vsel %vm403, %v13, 128
  %v406 = vsel %vm404, %v13, 128
  %v407 = vsel %vm47, %v405, 2147483647
  %v408 = vand.u32 %v407, 65535
  %v409 = vshra.s32 %v407, 16
  %v410 = vcvt.s32.f32 %v408
  %v411 = vcvt.s32.f32 %v409
  %412 = vmin.xlane.f32.xlu0 %v411
  %v413 = vpop.xlane.xlu0 %412
  %vm414 = vcmp.eq.f32.partialorder %v411, %v413
  %v415 = vsel %vm414, %v410, inf
  %416 = vmin.xlane.f32.xlu0 %v415
  %v417 = vpop.xlane.xlu0 %416
  %v418 = vcvt.f32.s32 %v417
  %v419 = vcvt.f32.s32 %v413
  %v420 = vshll.u32 %v419, 16
  %v421 = vadd.s32 %v420, %v418
  %v422 = vsel %vm47, %v406, 2147483647
  %v423 = vand.u32 %v422, 65535
  %v424 = vshra.s32 %v422, 16
  %v425 = vcvt.s32.f32 %v423
  %v426 = vcvt.s32.f32 %v424
  %427 = vmin.xlane.f32.xlu0 %v426
  %v428 = vpop.xlane.xlu0 %427
  %vm429 = vcmp.eq.f32.partialorder %v426, %v428
  %v430 = vsel %vm429, %v425, inf
  %431 = vmin.xlane.f32.xlu0 %v430
  %v432 = vpop.xlane.xlu0 %431
  %v433 = vcvt.f32.s32 %v432
  %v434 = vcvt.f32.s32 %v428
  %v435 = vshll.u32 %v434, 16
  %v436 = vadd.s32 %v435, %v433
  %vm437 = vcmp.eq.s32.totalorder %v13, %v421
  %vm438 = vcmp.eq.s32.totalorder %v13, %v436
  %v439 = vsel %vm437, 1, 0
  %v440 = vsel %vm438, 1, 0
  %v441 = vlaneseq
  %v442 = vshrl.u32 %v441, 7
  %v443 = vsub.s32 0, %v442
  %v444 = vrot.slane %v439, %v443
  %v445 = vlaneseq
  %v446 = vshrl.u32 %v445, 7
  %v447 = vsub.s32 0, %v446
  %v448 = vrot.slane %v440, %v447
  %vm449 = vcmp.eq.s32.totalorder %v444, 1
  %vm450 = vcmp.eq.s32.totalorder %v448, 1
  %v451 = vsel %vm449, %v10, -1e+30
  %v452 = vsel %vm450, %v11, -1e+30
  %v453 = vsel %vm104, %v451, -inf
  %454 = vmax.xlane.f32.xlu0 %v453
  %v455 = vpop.xlane.xlu0 %454
  %v456 = vsel %vm104, %v452, -inf
  %457 = vmax.xlane.f32.xlu0 %v456
  %v458 = vpop.xlane.xlu0 %457
  %vm459 = vcmp.eq.s32.totalorder %v13, 5
  %v460 = vsel %vm459, 1, 0
  %vm461 = vcmp.eq.s32.totalorder %v460, 1
  %v462 = vsel %vm461, %v455, %v375
  %v463 = vsel %vm461, %v458, %v376
  %v464 = vsub.f32 %v10, %v455
  %v465 = vsub.f32 %v11, %v458
  %v466 = vmul.f32 %v464, %v464
  %v467 = vmul.f32 %v465, %v465
  %v470 = vrot.slane %v466, 1
  %v471 = vrot.slane %v467, 1
  %v474 = vadd.f32 %v466, %v470
  %v475 = vadd.f32 %v467, %v471
  %v476 = vrot.slane %v466, 2
  %v477 = vrot.slane %v467, 2
  %v480 = vadd.f32 %v474, %v476
  %v481 = vadd.f32 %v475, %v477
  %v482 = vmin.f32 %v395, %v480
  %v483 = vmin.f32 %v396, %v481
  %v484 = vsel %vm47, %v482, -inf
  %485 = vmax.xlane.f32.xlu0 %v484
  %v486 = vpop.xlane.xlu0 %485
  %v487 = vsel %vm47, %v483, -inf
  %488 = vmax.xlane.f32.xlu0 %v487
  %v489 = vpop.xlane.xlu0 %488
  %vm490 = vcmp.ge.f32.partialorder %v482, %v486
  %vm491 = vcmp.ge.f32.partialorder %v483, %v489
  %v492 = vsel %vm490, %v13, 128
  %v493 = vsel %vm491, %v13, 128
  %v494 = vsel %vm47, %v492, 2147483647
  %v495 = vand.u32 %v494, 65535
  %v496 = vshra.s32 %v494, 16
  %v497 = vcvt.s32.f32 %v495
  %v498 = vcvt.s32.f32 %v496
  %499 = vmin.xlane.f32.xlu0 %v498
  %v500 = vpop.xlane.xlu0 %499
  %vm501 = vcmp.eq.f32.partialorder %v498, %v500
  %v502 = vsel %vm501, %v497, inf
  %503 = vmin.xlane.f32.xlu0 %v502
  %v504 = vpop.xlane.xlu0 %503
  %v505 = vcvt.f32.s32 %v504
  %v506 = vcvt.f32.s32 %v500
  %v507 = vshll.u32 %v506, 16
  %v508 = vadd.s32 %v507, %v505
  %v509 = vsel %vm47, %v493, 2147483647
  %v510 = vand.u32 %v509, 65535
  %v511 = vshra.s32 %v509, 16
  %v512 = vcvt.s32.f32 %v510
  %v513 = vcvt.s32.f32 %v511
  %514 = vmin.xlane.f32.xlu0 %v513
  %v515 = vpop.xlane.xlu0 %514
  %vm516 = vcmp.eq.f32.partialorder %v513, %v515
  %v517 = vsel %vm516, %v512, inf
  %518 = vmin.xlane.f32.xlu0 %v517
  %v519 = vpop.xlane.xlu0 %518
  %v520 = vcvt.f32.s32 %v519
  %v521 = vcvt.f32.s32 %v515
  %v522 = vshll.u32 %v521, 16
  %v523 = vadd.s32 %v522, %v520
  %vm524 = vcmp.eq.s32.totalorder %v13, %v508
  %vm525 = vcmp.eq.s32.totalorder %v13, %v523
  %v526 = vsel %vm524, 1, 0
  %v527 = vsel %vm525, 1, 0
  %v528 = vlaneseq
  %v529 = vshrl.u32 %v528, 7
  %v530 = vsub.s32 0, %v529
  %v531 = vrot.slane %v526, %v530
  %v532 = vlaneseq
  %v533 = vshrl.u32 %v532, 7
  %v534 = vsub.s32 0, %v533
  %v535 = vrot.slane %v527, %v534
  %vm536 = vcmp.eq.s32.totalorder %v531, 1
  %vm537 = vcmp.eq.s32.totalorder %v535, 1
  %v538 = vsel %vm536, %v10, -1e+30
  %v539 = vsel %vm537, %v11, -1e+30
  %v540 = vsel %vm104, %v538, -inf
  %541 = vmax.xlane.f32.xlu0 %v540
  %v542 = vpop.xlane.xlu0 %541
  %v543 = vsel %vm104, %v539, -inf
  %544 = vmax.xlane.f32.xlu0 %v543
  %v545 = vpop.xlane.xlu0 %544
  %vm546 = vcmp.eq.s32.totalorder %v13, 6
  %v547 = vsel %vm546, 1, 0
  %vm548 = vcmp.eq.s32.totalorder %v547, 1
  %v549 = vsel %vm548, %v542, %v462
  %v550 = vsel %vm548, %v545, %v463
  %v551 = vsub.f32 %v10, %v542
  %v552 = vsub.f32 %v11, %v545
  %v553 = vmul.f32 %v551, %v551
  %v554 = vmul.f32 %v552, %v552
  %v557 = vrot.slane %v553, 1
  %v558 = vrot.slane %v554, 1
  %v561 = vadd.f32 %v553, %v557
  %v562 = vadd.f32 %v554, %v558
  %v563 = vrot.slane %v553, 2
  %v564 = vrot.slane %v554, 2
  %v567 = vadd.f32 %v561, %v563
  %v568 = vadd.f32 %v562, %v564
  %v569 = vmin.f32 %v482, %v567
  %v570 = vmin.f32 %v483, %v568
  %v571 = vsel %vm47, %v569, -inf
  %572 = vmax.xlane.f32.xlu0 %v571
  %v573 = vpop.xlane.xlu0 %572
  %v574 = vsel %vm47, %v570, -inf
  %575 = vmax.xlane.f32.xlu0 %v574
  %v576 = vpop.xlane.xlu0 %575
  %vm577 = vcmp.ge.f32.partialorder %v569, %v573
  %vm578 = vcmp.ge.f32.partialorder %v570, %v576
  %v579 = vsel %vm577, %v13, 128
  %v580 = vsel %vm578, %v13, 128
  %v581 = vsel %vm47, %v579, 2147483647
  %v582 = vand.u32 %v581, 65535
  %v583 = vshra.s32 %v581, 16
  %v584 = vcvt.s32.f32 %v582
  %v585 = vcvt.s32.f32 %v583
  %586 = vmin.xlane.f32.xlu0 %v585
  %v587 = vpop.xlane.xlu0 %586
  %vm588 = vcmp.eq.f32.partialorder %v585, %v587
  %v589 = vsel %vm588, %v584, inf
  %590 = vmin.xlane.f32.xlu0 %v589
  %v591 = vpop.xlane.xlu0 %590
  %v592 = vcvt.f32.s32 %v591
  %v593 = vcvt.f32.s32 %v587
  %v594 = vshll.u32 %v593, 16
  %v595 = vadd.s32 %v594, %v592
  %v596 = vsel %vm47, %v580, 2147483647
  %v597 = vand.u32 %v596, 65535
  %v598 = vshra.s32 %v596, 16
  %v599 = vcvt.s32.f32 %v597
  %v600 = vcvt.s32.f32 %v598
  %601 = vmin.xlane.f32.xlu0 %v600
  %v602 = vpop.xlane.xlu0 %601
  %vm603 = vcmp.eq.f32.partialorder %v600, %v602
  %v604 = vsel %vm603, %v599, inf
  %605 = vmin.xlane.f32.xlu0 %v604
  %v606 = vpop.xlane.xlu0 %605
  %v607 = vcvt.f32.s32 %v606
  %v608 = vcvt.f32.s32 %v602
  %v609 = vshll.u32 %v608, 16
  %v610 = vadd.s32 %v609, %v607
  %vm611 = vcmp.eq.s32.totalorder %v13, %v595
  %vm612 = vcmp.eq.s32.totalorder %v13, %v610
  %v613 = vsel %vm611, 1, 0
  %v614 = vsel %vm612, 1, 0
  %v615 = vlaneseq
  %v616 = vshrl.u32 %v615, 7
  %v617 = vsub.s32 0, %v616
  %v618 = vrot.slane %v613, %v617
  %v619 = vlaneseq
  %v620 = vshrl.u32 %v619, 7
  %v621 = vsub.s32 0, %v620
  %v622 = vrot.slane %v614, %v621
  %vm623 = vcmp.eq.s32.totalorder %v618, 1
  %vm624 = vcmp.eq.s32.totalorder %v622, 1
  %v625 = vsel %vm623, %v10, -1e+30
  %v626 = vsel %vm624, %v11, -1e+30
  %v627 = vsel %vm104, %v625, -inf
  %628 = vmax.xlane.f32.xlu0 %v627
  %v629 = vpop.xlane.xlu0 %628
  %v630 = vsel %vm104, %v626, -inf
  %631 = vmax.xlane.f32.xlu0 %v630
  %v632 = vpop.xlane.xlu0 %631
  %vm633 = vcmp.eq.s32.totalorder %v13, 7
  %v634 = vsel %vm633, 1, 0
  %vm635 = vcmp.eq.s32.totalorder %v634, 1
  %v636 = vsel %vm635, %v629, %v549
  %v637 = vsel %vm635, %v632, %v550
  %v638 = vsub.f32 %v10, %v629
  %v639 = vsub.f32 %v11, %v632
  %v640 = vmul.f32 %v638, %v638
  %v641 = vmul.f32 %v639, %v639
  %v644 = vrot.slane %v640, 1
  %v645 = vrot.slane %v641, 1
  %v648 = vadd.f32 %v640, %v644
  %v649 = vadd.f32 %v641, %v645
  %v650 = vrot.slane %v640, 2
  %v651 = vrot.slane %v641, 2
  %v654 = vadd.f32 %v648, %v650
  %v655 = vadd.f32 %v649, %v651
  %v656 = vmin.f32 %v569, %v654
  %v657 = vmin.f32 %v570, %v655
  %v658 = vsel %vm47, %v656, -inf
  %659 = vmax.xlane.f32.xlu0 %v658
  %v660 = vpop.xlane.xlu0 %659
  %v661 = vsel %vm47, %v657, -inf
  %662 = vmax.xlane.f32.xlu0 %v661
  %v663 = vpop.xlane.xlu0 %662
  %vm664 = vcmp.ge.f32.partialorder %v656, %v660
  %vm665 = vcmp.ge.f32.partialorder %v657, %v663
  %v666 = vsel %vm664, %v13, 128
  %v667 = vsel %vm665, %v13, 128
  %v668 = vsel %vm47, %v666, 2147483647
  %v669 = vand.u32 %v668, 65535
  %v670 = vshra.s32 %v668, 16
  %v671 = vcvt.s32.f32 %v669
  %v672 = vcvt.s32.f32 %v670
  %673 = vmin.xlane.f32.xlu0 %v672
  %v674 = vpop.xlane.xlu0 %673
  %vm675 = vcmp.eq.f32.partialorder %v672, %v674
  %v676 = vsel %vm675, %v671, inf
  %677 = vmin.xlane.f32.xlu0 %v676
  %v678 = vpop.xlane.xlu0 %677
  %v679 = vcvt.f32.s32 %v678
  %v680 = vcvt.f32.s32 %v674
  %v681 = vshll.u32 %v680, 16
  %v682 = vadd.s32 %v681, %v679
  %v683 = vsel %vm47, %v667, 2147483647
  %v684 = vand.u32 %v683, 65535
  %v685 = vshra.s32 %v683, 16
  %v686 = vcvt.s32.f32 %v684
  %v687 = vcvt.s32.f32 %v685
  %688 = vmin.xlane.f32.xlu0 %v687
  %v689 = vpop.xlane.xlu0 %688
  %vm690 = vcmp.eq.f32.partialorder %v687, %v689
  %v691 = vsel %vm690, %v686, inf
  %692 = vmin.xlane.f32.xlu0 %v691
  %v693 = vpop.xlane.xlu0 %692
  %v694 = vcvt.f32.s32 %v693
  %v695 = vcvt.f32.s32 %v689
  %v696 = vshll.u32 %v695, 16
  %v697 = vadd.s32 %v696, %v694
  %vm698 = vcmp.eq.s32.totalorder %v13, %v682
  %vm699 = vcmp.eq.s32.totalorder %v13, %v697
  %v700 = vsel %vm698, 1, 0
  %v701 = vsel %vm699, 1, 0
  %v702 = vlaneseq
  %v703 = vshrl.u32 %v702, 7
  %v704 = vsub.s32 0, %v703
  %v705 = vrot.slane %v700, %v704
  %v706 = vlaneseq
  %v707 = vshrl.u32 %v706, 7
  %v708 = vsub.s32 0, %v707
  %v709 = vrot.slane %v701, %v708
  %vm710 = vcmp.eq.s32.totalorder %v705, 1
  %vm711 = vcmp.eq.s32.totalorder %v709, 1
  %v712 = vsel %vm710, %v10, -1e+30
  %v713 = vsel %vm711, %v11, -1e+30
  %v714 = vsel %vm104, %v712, -inf
  %715 = vmax.xlane.f32.xlu0 %v714
  %v716 = vpop.xlane.xlu0 %715
  %v717 = vsel %vm104, %v713, -inf
  %718 = vmax.xlane.f32.xlu0 %v717
  %v719 = vpop.xlane.xlu0 %718
  %vm720 = vcmp.eq.s32.totalorder %v13, 8
  %v721 = vsel %vm720, 1, 0
  %vm722 = vcmp.eq.s32.totalorder %v721, 1
  %v723 = vsel %vm722, %v716, %v636
  %v724 = vsel %vm722, %v719, %v637
  %v725 = vsub.f32 %v10, %v716
  %v726 = vsub.f32 %v11, %v719
  %v727 = vmul.f32 %v725, %v725
  %v728 = vmul.f32 %v726, %v726
  %v731 = vrot.slane %v727, 1
  %v732 = vrot.slane %v728, 1
  %v735 = vadd.f32 %v727, %v731
  %v736 = vadd.f32 %v728, %v732
  %v737 = vrot.slane %v727, 2
  %v738 = vrot.slane %v728, 2
  %v741 = vadd.f32 %v735, %v737
  %v742 = vadd.f32 %v736, %v738
  %v743 = vmin.f32 %v656, %v741
  %v744 = vmin.f32 %v657, %v742
  %v745 = vsel %vm47, %v743, -inf
  %746 = vmax.xlane.f32.xlu0 %v745
  %v747 = vpop.xlane.xlu0 %746
  %v748 = vsel %vm47, %v744, -inf
  %749 = vmax.xlane.f32.xlu0 %v748
  %v750 = vpop.xlane.xlu0 %749
  %vm751 = vcmp.ge.f32.partialorder %v743, %v747
  %vm752 = vcmp.ge.f32.partialorder %v744, %v750
  %v753 = vsel %vm751, %v13, 128
  %v754 = vsel %vm752, %v13, 128
  %v755 = vsel %vm47, %v753, 2147483647
  %v756 = vand.u32 %v755, 65535
  %v757 = vshra.s32 %v755, 16
  %v758 = vcvt.s32.f32 %v756
  %v759 = vcvt.s32.f32 %v757
  %760 = vmin.xlane.f32.xlu0 %v759
  %v761 = vpop.xlane.xlu0 %760
  %vm762 = vcmp.eq.f32.partialorder %v759, %v761
  %v763 = vsel %vm762, %v758, inf
  %764 = vmin.xlane.f32.xlu0 %v763
  %v765 = vpop.xlane.xlu0 %764
  %v766 = vcvt.f32.s32 %v765
  %v767 = vcvt.f32.s32 %v761
  %v768 = vshll.u32 %v767, 16
  %v769 = vadd.s32 %v768, %v766
  %v770 = vsel %vm47, %v754, 2147483647
  %v771 = vand.u32 %v770, 65535
  %v772 = vshra.s32 %v770, 16
  %v773 = vcvt.s32.f32 %v771
  %v774 = vcvt.s32.f32 %v772
  %775 = vmin.xlane.f32.xlu0 %v774
  %v776 = vpop.xlane.xlu0 %775
  %vm777 = vcmp.eq.f32.partialorder %v774, %v776
  %v778 = vsel %vm777, %v773, inf
  %779 = vmin.xlane.f32.xlu0 %v778
  %v780 = vpop.xlane.xlu0 %779
  %v781 = vcvt.f32.s32 %v780
  %v782 = vcvt.f32.s32 %v776
  %v783 = vshll.u32 %v782, 16
  %v784 = vadd.s32 %v783, %v781
  %vm785 = vcmp.eq.s32.totalorder %v13, %v769
  %vm786 = vcmp.eq.s32.totalorder %v13, %v784
  %v787 = vsel %vm785, 1, 0
  %v788 = vsel %vm786, 1, 0
  %v789 = vlaneseq
  %v790 = vshrl.u32 %v789, 7
  %v791 = vsub.s32 0, %v790
  %v792 = vrot.slane %v787, %v791
  %v793 = vlaneseq
  %v794 = vshrl.u32 %v793, 7
  %v795 = vsub.s32 0, %v794
  %v796 = vrot.slane %v788, %v795
  %vm797 = vcmp.eq.s32.totalorder %v792, 1
  %vm798 = vcmp.eq.s32.totalorder %v796, 1
  %v799 = vsel %vm797, %v10, -1e+30
  %v800 = vsel %vm798, %v11, -1e+30
  %v801 = vsel %vm104, %v799, -inf
  %802 = vmax.xlane.f32.xlu0 %v801
  %v803 = vpop.xlane.xlu0 %802
  %v804 = vsel %vm104, %v800, -inf
  %805 = vmax.xlane.f32.xlu0 %v804
  %v806 = vpop.xlane.xlu0 %805
  %vm807 = vcmp.eq.s32.totalorder %v13, 9
  %v808 = vsel %vm807, 1, 0
  %vm809 = vcmp.eq.s32.totalorder %v808, 1
  %v810 = vsel %vm809, %v803, %v723
  %v811 = vsel %vm809, %v806, %v724
  %v812 = vsub.f32 %v10, %v803
  %v813 = vsub.f32 %v11, %v806
  %v814 = vmul.f32 %v812, %v812
  %v815 = vmul.f32 %v813, %v813
  %v818 = vrot.slane %v814, 1
  %v819 = vrot.slane %v815, 1
  %v822 = vadd.f32 %v814, %v818
  %v823 = vadd.f32 %v815, %v819
  %v824 = vrot.slane %v814, 2
  %v825 = vrot.slane %v815, 2
  %v828 = vadd.f32 %v822, %v824
  %v829 = vadd.f32 %v823, %v825
  %v830 = vmin.f32 %v743, %v828
  %v831 = vmin.f32 %v744, %v829
  %v832 = vsel %vm47, %v830, -inf
  %833 = vmax.xlane.f32.xlu0 %v832
  %v834 = vpop.xlane.xlu0 %833
  %v835 = vsel %vm47, %v831, -inf
  %836 = vmax.xlane.f32.xlu0 %v835
  %v837 = vpop.xlane.xlu0 %836
  %vm838 = vcmp.ge.f32.partialorder %v830, %v834
  %vm839 = vcmp.ge.f32.partialorder %v831, %v837
  %v840 = vsel %vm838, %v13, 128
  %v841 = vsel %vm839, %v13, 128
  %v842 = vsel %vm47, %v840, 2147483647
  %v843 = vand.u32 %v842, 65535
  %v844 = vshra.s32 %v842, 16
  %v845 = vcvt.s32.f32 %v843
  %v846 = vcvt.s32.f32 %v844
  %847 = vmin.xlane.f32.xlu0 %v846
  %v848 = vpop.xlane.xlu0 %847
  %vm849 = vcmp.eq.f32.partialorder %v846, %v848
  %v850 = vsel %vm849, %v845, inf
  %851 = vmin.xlane.f32.xlu0 %v850
  %v852 = vpop.xlane.xlu0 %851
  %v853 = vcvt.f32.s32 %v852
  %v854 = vcvt.f32.s32 %v848
  %v855 = vshll.u32 %v854, 16
  %v856 = vadd.s32 %v855, %v853
  %v857 = vsel %vm47, %v841, 2147483647
  %v858 = vand.u32 %v857, 65535
  %v859 = vshra.s32 %v857, 16
  %v860 = vcvt.s32.f32 %v858
  %v861 = vcvt.s32.f32 %v859
  %862 = vmin.xlane.f32.xlu0 %v861
  %v863 = vpop.xlane.xlu0 %862
  %vm864 = vcmp.eq.f32.partialorder %v861, %v863
  %v865 = vsel %vm864, %v860, inf
  %866 = vmin.xlane.f32.xlu0 %v865
  %v867 = vpop.xlane.xlu0 %866
  %v868 = vcvt.f32.s32 %v867
  %v869 = vcvt.f32.s32 %v863
  %v870 = vshll.u32 %v869, 16
  %v871 = vadd.s32 %v870, %v868
  %vm872 = vcmp.eq.s32.totalorder %v13, %v856
  %vm873 = vcmp.eq.s32.totalorder %v13, %v871
  %v874 = vsel %vm872, 1, 0
  %v875 = vsel %vm873, 1, 0
  %v876 = vlaneseq
  %v877 = vshrl.u32 %v876, 7
  %v878 = vsub.s32 0, %v877
  %v879 = vrot.slane %v874, %v878
  %v880 = vlaneseq
  %v881 = vshrl.u32 %v880, 7
  %v882 = vsub.s32 0, %v881
  %v883 = vrot.slane %v875, %v882
  %vm884 = vcmp.eq.s32.totalorder %v879, 1
  %vm885 = vcmp.eq.s32.totalorder %v883, 1
  %v886 = vsel %vm884, %v10, -1e+30
  %v887 = vsel %vm885, %v11, -1e+30
  %v888 = vsel %vm104, %v886, -inf
  %889 = vmax.xlane.f32.xlu0 %v888
  %v890 = vpop.xlane.xlu0 %889
  %v891 = vsel %vm104, %v887, -inf
  %892 = vmax.xlane.f32.xlu0 %v891
  %v893 = vpop.xlane.xlu0 %892
  %vm894 = vcmp.eq.s32.totalorder %v13, 10
  %v895 = vsel %vm894, 1, 0
  %vm896 = vcmp.eq.s32.totalorder %v895, 1
  %v897 = vsel %vm896, %v890, %v810
  %v898 = vsel %vm896, %v893, %v811
  %v899 = vsub.f32 %v10, %v890
  %v900 = vsub.f32 %v11, %v893
  %v901 = vmul.f32 %v899, %v899
  %v902 = vmul.f32 %v900, %v900
  %v905 = vrot.slane %v901, 1
  %v906 = vrot.slane %v902, 1
  %v909 = vadd.f32 %v901, %v905
  %v910 = vadd.f32 %v902, %v906
  %v911 = vrot.slane %v901, 2
  %v912 = vrot.slane %v902, 2
  %v915 = vadd.f32 %v909, %v911
  %v916 = vadd.f32 %v910, %v912
  %v917 = vmin.f32 %v830, %v915
  %v918 = vmin.f32 %v831, %v916
  %v919 = vsel %vm47, %v917, -inf
  %920 = vmax.xlane.f32.xlu0 %v919
  %v921 = vpop.xlane.xlu0 %920
  %v922 = vsel %vm47, %v918, -inf
  %923 = vmax.xlane.f32.xlu0 %v922
  %v924 = vpop.xlane.xlu0 %923
  %vm925 = vcmp.ge.f32.partialorder %v917, %v921
  %vm926 = vcmp.ge.f32.partialorder %v918, %v924
  %v927 = vsel %vm925, %v13, 128
  %v928 = vsel %vm926, %v13, 128
  %v929 = vsel %vm47, %v927, 2147483647
  %v930 = vand.u32 %v929, 65535
  %v931 = vshra.s32 %v929, 16
  %v932 = vcvt.s32.f32 %v930
  %v933 = vcvt.s32.f32 %v931
  %934 = vmin.xlane.f32.xlu0 %v933
  %v935 = vpop.xlane.xlu0 %934
  %vm936 = vcmp.eq.f32.partialorder %v933, %v935
  %v937 = vsel %vm936, %v932, inf
  %938 = vmin.xlane.f32.xlu0 %v937
  %v939 = vpop.xlane.xlu0 %938
  %v940 = vcvt.f32.s32 %v939
  %v941 = vcvt.f32.s32 %v935
  %v942 = vshll.u32 %v941, 16
  %v943 = vadd.s32 %v942, %v940
  %v944 = vsel %vm47, %v928, 2147483647
  %v945 = vand.u32 %v944, 65535
  %v946 = vshra.s32 %v944, 16
  %v947 = vcvt.s32.f32 %v945
  %v948 = vcvt.s32.f32 %v946
  %949 = vmin.xlane.f32.xlu0 %v948
  %v950 = vpop.xlane.xlu0 %949
  %vm951 = vcmp.eq.f32.partialorder %v948, %v950
  %v952 = vsel %vm951, %v947, inf
  %953 = vmin.xlane.f32.xlu0 %v952
  %v954 = vpop.xlane.xlu0 %953
  %v955 = vcvt.f32.s32 %v954
  %v956 = vcvt.f32.s32 %v950
  %v957 = vshll.u32 %v956, 16
  %v958 = vadd.s32 %v957, %v955
  %vm959 = vcmp.eq.s32.totalorder %v13, %v943
  %vm960 = vcmp.eq.s32.totalorder %v13, %v958
  %v961 = vsel %vm959, 1, 0
  %v962 = vsel %vm960, 1, 0
  %v963 = vlaneseq
  %v964 = vshrl.u32 %v963, 7
  %v965 = vsub.s32 0, %v964
  %v966 = vrot.slane %v961, %v965
  %v967 = vlaneseq
  %v968 = vshrl.u32 %v967, 7
  %v969 = vsub.s32 0, %v968
  %v970 = vrot.slane %v962, %v969
  %vm971 = vcmp.eq.s32.totalorder %v966, 1
  %vm972 = vcmp.eq.s32.totalorder %v970, 1
  %v973 = vsel %vm971, %v10, -1e+30
  %v974 = vsel %vm972, %v11, -1e+30
  %v975 = vsel %vm104, %v973, -inf
  %976 = vmax.xlane.f32.xlu0 %v975
  %v977 = vpop.xlane.xlu0 %976
  %v978 = vsel %vm104, %v974, -inf
  %979 = vmax.xlane.f32.xlu0 %v978
  %v980 = vpop.xlane.xlu0 %979
  %vm981 = vcmp.eq.s32.totalorder %v13, 11
  %v982 = vsel %vm981, 1, 0
  %vm983 = vcmp.eq.s32.totalorder %v982, 1
  %v984 = vsel %vm983, %v977, %v897
  %v985 = vsel %vm983, %v980, %v898
  %v986 = vsub.f32 %v10, %v977
  %v987 = vsub.f32 %v11, %v980
  %v988 = vmul.f32 %v986, %v986
  %v989 = vmul.f32 %v987, %v987
  %v992 = vrot.slane %v988, 1
  %v993 = vrot.slane %v989, 1
  %v996 = vadd.f32 %v988, %v992
  %v997 = vadd.f32 %v989, %v993
  %v998 = vrot.slane %v988, 2
  %v999 = vrot.slane %v989, 2
  %v1002 = vadd.f32 %v996, %v998
  %v1003 = vadd.f32 %v997, %v999
  %v1004 = vmin.f32 %v917, %v1002
  %v1005 = vmin.f32 %v918, %v1003
  %v1006 = vsel %vm47, %v1004, -inf
  %1007 = vmax.xlane.f32.xlu0 %v1006
  %v1008 = vpop.xlane.xlu0 %1007
  %v1009 = vsel %vm47, %v1005, -inf
  %1010 = vmax.xlane.f32.xlu0 %v1009
  %v1011 = vpop.xlane.xlu0 %1010
  %vm1012 = vcmp.ge.f32.partialorder %v1004, %v1008
  %vm1013 = vcmp.ge.f32.partialorder %v1005, %v1011
  %v1014 = vsel %vm1012, %v13, 128
  %v1015 = vsel %vm1013, %v13, 128
  %v1016 = vsel %vm47, %v1014, 2147483647
  %v1017 = vand.u32 %v1016, 65535
  %v1018 = vshra.s32 %v1016, 16
  %v1019 = vcvt.s32.f32 %v1017
  %v1020 = vcvt.s32.f32 %v1018
  %1021 = vmin.xlane.f32.xlu0 %v1020
  %v1022 = vpop.xlane.xlu0 %1021
  %vm1023 = vcmp.eq.f32.partialorder %v1020, %v1022
  %v1024 = vsel %vm1023, %v1019, inf
  %1025 = vmin.xlane.f32.xlu0 %v1024
  %v1026 = vpop.xlane.xlu0 %1025
  %v1027 = vcvt.f32.s32 %v1026
  %v1028 = vcvt.f32.s32 %v1022
  %v1029 = vshll.u32 %v1028, 16
  %v1030 = vadd.s32 %v1029, %v1027
  %v1031 = vsel %vm47, %v1015, 2147483647
  %v1032 = vand.u32 %v1031, 65535
  %v1033 = vshra.s32 %v1031, 16
  %v1034 = vcvt.s32.f32 %v1032
  %v1035 = vcvt.s32.f32 %v1033
  %1036 = vmin.xlane.f32.xlu0 %v1035
  %v1037 = vpop.xlane.xlu0 %1036
  %vm1038 = vcmp.eq.f32.partialorder %v1035, %v1037
  %v1039 = vsel %vm1038, %v1034, inf
  %1040 = vmin.xlane.f32.xlu0 %v1039
  %v1041 = vpop.xlane.xlu0 %1040
  %v1042 = vcvt.f32.s32 %v1041
  %v1043 = vcvt.f32.s32 %v1037
  %v1044 = vshll.u32 %v1043, 16
  %v1045 = vadd.s32 %v1044, %v1042
  %vm1046 = vcmp.eq.s32.totalorder %v13, %v1030
  %vm1047 = vcmp.eq.s32.totalorder %v13, %v1045
  %v1048 = vsel %vm1046, 1, 0
  %v1049 = vsel %vm1047, 1, 0
  %v1050 = vlaneseq
  %v1051 = vshrl.u32 %v1050, 7
  %v1052 = vsub.s32 0, %v1051
  %v1053 = vrot.slane %v1048, %v1052
  %v1054 = vlaneseq
  %v1055 = vshrl.u32 %v1054, 7
  %v1056 = vsub.s32 0, %v1055
  %v1057 = vrot.slane %v1049, %v1056
  %vm1058 = vcmp.eq.s32.totalorder %v1053, 1
  %vm1059 = vcmp.eq.s32.totalorder %v1057, 1
  %v1060 = vsel %vm1058, %v10, -1e+30
  %v1061 = vsel %vm1059, %v11, -1e+30
  %v1062 = vsel %vm104, %v1060, -inf
  %1063 = vmax.xlane.f32.xlu0 %v1062
  %v1064 = vpop.xlane.xlu0 %1063
  %v1065 = vsel %vm104, %v1061, -inf
  %1066 = vmax.xlane.f32.xlu0 %v1065
  %v1067 = vpop.xlane.xlu0 %1066
  %vm1068 = vcmp.eq.s32.totalorder %v13, 12
  %v1069 = vsel %vm1068, 1, 0
  %vm1070 = vcmp.eq.s32.totalorder %v1069, 1
  %v1071 = vsel %vm1070, %v1064, %v984
  %v1072 = vsel %vm1070, %v1067, %v985
  %v1073 = vsub.f32 %v10, %v1064
  %v1074 = vsub.f32 %v11, %v1067
  %v1075 = vmul.f32 %v1073, %v1073
  %v1076 = vmul.f32 %v1074, %v1074
  %v1079 = vrot.slane %v1075, 1
  %v1080 = vrot.slane %v1076, 1
  %v1083 = vadd.f32 %v1075, %v1079
  %v1084 = vadd.f32 %v1076, %v1080
  %v1085 = vrot.slane %v1075, 2
  %v1086 = vrot.slane %v1076, 2
  %v1089 = vadd.f32 %v1083, %v1085
  %v1090 = vadd.f32 %v1084, %v1086
  %v1091 = vmin.f32 %v1004, %v1089
  %v1092 = vmin.f32 %v1005, %v1090
  %v1093 = vsel %vm47, %v1091, -inf
  %1094 = vmax.xlane.f32.xlu0 %v1093
  %v1095 = vpop.xlane.xlu0 %1094
  %v1096 = vsel %vm47, %v1092, -inf
  %1097 = vmax.xlane.f32.xlu0 %v1096
  %v1098 = vpop.xlane.xlu0 %1097
  %vm1099 = vcmp.ge.f32.partialorder %v1091, %v1095
  %vm1100 = vcmp.ge.f32.partialorder %v1092, %v1098
  %v1101 = vsel %vm1099, %v13, 128
  %v1102 = vsel %vm1100, %v13, 128
  %v1103 = vsel %vm47, %v1101, 2147483647
  %v1104 = vand.u32 %v1103, 65535
  %v1105 = vshra.s32 %v1103, 16
  %v1106 = vcvt.s32.f32 %v1104
  %v1107 = vcvt.s32.f32 %v1105
  %1108 = vmin.xlane.f32.xlu0 %v1107
  %v1109 = vpop.xlane.xlu0 %1108
  %vm1110 = vcmp.eq.f32.partialorder %v1107, %v1109
  %v1111 = vsel %vm1110, %v1106, inf
  %1112 = vmin.xlane.f32.xlu0 %v1111
  %v1113 = vpop.xlane.xlu0 %1112
  %v1114 = vcvt.f32.s32 %v1113
  %v1115 = vcvt.f32.s32 %v1109
  %v1116 = vshll.u32 %v1115, 16
  %v1117 = vadd.s32 %v1116, %v1114
  %v1118 = vsel %vm47, %v1102, 2147483647
  %v1119 = vand.u32 %v1118, 65535
  %v1120 = vshra.s32 %v1118, 16
  %v1121 = vcvt.s32.f32 %v1119
  %v1122 = vcvt.s32.f32 %v1120
  %1123 = vmin.xlane.f32.xlu0 %v1122
  %v1124 = vpop.xlane.xlu0 %1123
  %vm1125 = vcmp.eq.f32.partialorder %v1122, %v1124
  %v1126 = vsel %vm1125, %v1121, inf
  %1127 = vmin.xlane.f32.xlu0 %v1126
  %v1128 = vpop.xlane.xlu0 %1127
  %v1129 = vcvt.f32.s32 %v1128
  %v1130 = vcvt.f32.s32 %v1124
  %v1131 = vshll.u32 %v1130, 16
  %v1132 = vadd.s32 %v1131, %v1129
  %vm1133 = vcmp.eq.s32.totalorder %v13, %v1117
  %vm1134 = vcmp.eq.s32.totalorder %v13, %v1132
  %v1135 = vsel %vm1133, 1, 0
  %v1136 = vsel %vm1134, 1, 0
  %v1137 = vlaneseq
  %v1138 = vshrl.u32 %v1137, 7
  %v1139 = vsub.s32 0, %v1138
  %v1140 = vrot.slane %v1135, %v1139
  %v1141 = vlaneseq
  %v1142 = vshrl.u32 %v1141, 7
  %v1143 = vsub.s32 0, %v1142
  %v1144 = vrot.slane %v1136, %v1143
  %vm1145 = vcmp.eq.s32.totalorder %v1140, 1
  %vm1146 = vcmp.eq.s32.totalorder %v1144, 1
  %v1147 = vsel %vm1145, %v10, -1e+30
  %v1148 = vsel %vm1146, %v11, -1e+30
  %v1149 = vsel %vm104, %v1147, -inf
  %1150 = vmax.xlane.f32.xlu0 %v1149
  %v1151 = vpop.xlane.xlu0 %1150
  %v1152 = vsel %vm104, %v1148, -inf
  %1153 = vmax.xlane.f32.xlu0 %v1152
  %v1154 = vpop.xlane.xlu0 %1153
  %vm1155 = vcmp.eq.s32.totalorder %v13, 13
  %v1156 = vsel %vm1155, 1, 0
  %vm1157 = vcmp.eq.s32.totalorder %v1156, 1
  %v1158 = vsel %vm1157, %v1151, %v1071
  %v1159 = vsel %vm1157, %v1154, %v1072
  %v1160 = vsub.f32 %v10, %v1151
  %v1161 = vsub.f32 %v11, %v1154
  %v1162 = vmul.f32 %v1160, %v1160
  %v1163 = vmul.f32 %v1161, %v1161
  %v1166 = vrot.slane %v1162, 1
  %v1167 = vrot.slane %v1163, 1
  %v1170 = vadd.f32 %v1162, %v1166
  %v1171 = vadd.f32 %v1163, %v1167
  %v1172 = vrot.slane %v1162, 2
  %v1173 = vrot.slane %v1163, 2
  %v1176 = vadd.f32 %v1170, %v1172
  %v1177 = vadd.f32 %v1171, %v1173
  %v1178 = vmin.f32 %v1091, %v1176
  %v1179 = vmin.f32 %v1092, %v1177
  %v1180 = vsel %vm47, %v1178, -inf
  %1181 = vmax.xlane.f32.xlu0 %v1180
  %v1182 = vpop.xlane.xlu0 %1181
  %v1183 = vsel %vm47, %v1179, -inf
  %1184 = vmax.xlane.f32.xlu0 %v1183
  %v1185 = vpop.xlane.xlu0 %1184
  %vm1186 = vcmp.ge.f32.partialorder %v1178, %v1182
  %vm1187 = vcmp.ge.f32.partialorder %v1179, %v1185
  %v1188 = vsel %vm1186, %v13, 128
  %v1189 = vsel %vm1187, %v13, 128
  %v1190 = vsel %vm47, %v1188, 2147483647
  %v1191 = vand.u32 %v1190, 65535
  %v1192 = vshra.s32 %v1190, 16
  %v1193 = vcvt.s32.f32 %v1191
  %v1194 = vcvt.s32.f32 %v1192
  %1195 = vmin.xlane.f32.xlu0 %v1194
  %v1196 = vpop.xlane.xlu0 %1195
  %vm1197 = vcmp.eq.f32.partialorder %v1194, %v1196
  %v1198 = vsel %vm1197, %v1193, inf
  %1199 = vmin.xlane.f32.xlu0 %v1198
  %v1200 = vpop.xlane.xlu0 %1199
  %v1201 = vcvt.f32.s32 %v1200
  %v1202 = vcvt.f32.s32 %v1196
  %v1203 = vshll.u32 %v1202, 16
  %v1204 = vadd.s32 %v1203, %v1201
  %v1205 = vsel %vm47, %v1189, 2147483647
  %v1206 = vand.u32 %v1205, 65535
  %v1207 = vshra.s32 %v1205, 16
  %v1208 = vcvt.s32.f32 %v1206
  %v1209 = vcvt.s32.f32 %v1207
  %1210 = vmin.xlane.f32.xlu0 %v1209
  %v1211 = vpop.xlane.xlu0 %1210
  %vm1212 = vcmp.eq.f32.partialorder %v1209, %v1211
  %v1213 = vsel %vm1212, %v1208, inf
  %1214 = vmin.xlane.f32.xlu0 %v1213
  %v1215 = vpop.xlane.xlu0 %1214
  %v1216 = vcvt.f32.s32 %v1215
  %v1217 = vcvt.f32.s32 %v1211
  %v1218 = vshll.u32 %v1217, 16
  %v1219 = vadd.s32 %v1218, %v1216
  %vm1220 = vcmp.eq.s32.totalorder %v13, %v1204
  %vm1221 = vcmp.eq.s32.totalorder %v13, %v1219
  %v1222 = vsel %vm1220, 1, 0
  %v1223 = vsel %vm1221, 1, 0
  %v1224 = vlaneseq
  %v1225 = vshrl.u32 %v1224, 7
  %v1226 = vsub.s32 0, %v1225
  %v1227 = vrot.slane %v1222, %v1226
  %v1228 = vlaneseq
  %v1229 = vshrl.u32 %v1228, 7
  %v1230 = vsub.s32 0, %v1229
  %v1231 = vrot.slane %v1223, %v1230
  %vm1232 = vcmp.eq.s32.totalorder %v1227, 1
  %vm1233 = vcmp.eq.s32.totalorder %v1231, 1
  %v1234 = vsel %vm1232, %v10, -1e+30
  %v1235 = vsel %vm1233, %v11, -1e+30
  %v1236 = vsel %vm104, %v1234, -inf
  %1237 = vmax.xlane.f32.xlu0 %v1236
  %v1238 = vpop.xlane.xlu0 %1237
  %v1239 = vsel %vm104, %v1235, -inf
  %1240 = vmax.xlane.f32.xlu0 %v1239
  %v1241 = vpop.xlane.xlu0 %1240
  %vm1242 = vcmp.eq.s32.totalorder %v13, 14
  %v1243 = vsel %vm1242, 1, 0
  %vm1244 = vcmp.eq.s32.totalorder %v1243, 1
  %v1245 = vsel %vm1244, %v1238, %v1158
  %v1246 = vsel %vm1244, %v1241, %v1159
  %v1247 = vsub.f32 %v10, %v1238
  %v1248 = vsub.f32 %v11, %v1241
  %v1249 = vmul.f32 %v1247, %v1247
  %v1250 = vmul.f32 %v1248, %v1248
  %v1253 = vrot.slane %v1249, 1
  %v1254 = vrot.slane %v1250, 1
  %v1257 = vadd.f32 %v1249, %v1253
  %v1258 = vadd.f32 %v1250, %v1254
  %v1259 = vrot.slane %v1249, 2
  %v1260 = vrot.slane %v1250, 2
  %v1263 = vadd.f32 %v1257, %v1259
  %v1264 = vadd.f32 %v1258, %v1260
  %v1265 = vmin.f32 %v1178, %v1263
  %v1266 = vmin.f32 %v1179, %v1264
  %v1267 = vsel %vm47, %v1265, -inf
  %1268 = vmax.xlane.f32.xlu0 %v1267
  %v1269 = vpop.xlane.xlu0 %1268
  %v1270 = vsel %vm47, %v1266, -inf
  %1271 = vmax.xlane.f32.xlu0 %v1270
  %v1272 = vpop.xlane.xlu0 %1271
  %vm1273 = vcmp.ge.f32.partialorder %v1265, %v1269
  %vm1274 = vcmp.ge.f32.partialorder %v1266, %v1272
  %v1275 = vsel %vm1273, %v13, 128
  %v1276 = vsel %vm1274, %v13, 128
  %v1277 = vsel %vm47, %v1275, 2147483647
  %v1278 = vand.u32 %v1277, 65535
  %v1279 = vshra.s32 %v1277, 16
  %v1280 = vcvt.s32.f32 %v1278
  %v1281 = vcvt.s32.f32 %v1279
  %1282 = vmin.xlane.f32.xlu0 %v1281
  %v1283 = vpop.xlane.xlu0 %1282
  %vm1284 = vcmp.eq.f32.partialorder %v1281, %v1283
  %v1285 = vsel %vm1284, %v1280, inf
  %1286 = vmin.xlane.f32.xlu0 %v1285
  %v1287 = vpop.xlane.xlu0 %1286
  %v1288 = vcvt.f32.s32 %v1287
  %v1289 = vcvt.f32.s32 %v1283
  %v1290 = vshll.u32 %v1289, 16
  %v1291 = vadd.s32 %v1290, %v1288
  %v1292 = vsel %vm47, %v1276, 2147483647
  %v1293 = vand.u32 %v1292, 65535
  %v1294 = vshra.s32 %v1292, 16
  %v1295 = vcvt.s32.f32 %v1293
  %v1296 = vcvt.s32.f32 %v1294
  %1297 = vmin.xlane.f32.xlu0 %v1296
  %v1298 = vpop.xlane.xlu0 %1297
  %vm1299 = vcmp.eq.f32.partialorder %v1296, %v1298
  %v1300 = vsel %vm1299, %v1295, inf
  %1301 = vmin.xlane.f32.xlu0 %v1300
  %v1302 = vpop.xlane.xlu0 %1301
  %v1303 = vcvt.f32.s32 %v1302
  %v1304 = vcvt.f32.s32 %v1298
  %v1305 = vshll.u32 %v1304, 16
  %v1306 = vadd.s32 %v1305, %v1303
  %vm1307 = vcmp.eq.s32.totalorder %v13, %v1291
  %vm1308 = vcmp.eq.s32.totalorder %v13, %v1306
  %v1309 = vsel %vm1307, 1, 0
  %v1310 = vsel %vm1308, 1, 0
  %v1311 = vlaneseq
  %v1312 = vshrl.u32 %v1311, 7
  %v1313 = vsub.s32 0, %v1312
  %v1314 = vrot.slane %v1309, %v1313
  %v1315 = vlaneseq
  %v1316 = vshrl.u32 %v1315, 7
  %v1317 = vsub.s32 0, %v1316
  %v1318 = vrot.slane %v1310, %v1317
  %vm1319 = vcmp.eq.s32.totalorder %v1314, 1
  %vm1320 = vcmp.eq.s32.totalorder %v1318, 1
  %v1321 = vsel %vm1319, %v10, -1e+30
  %v1322 = vsel %vm1320, %v11, -1e+30
  %v1323 = vsel %vm104, %v1321, -inf
  %1324 = vmax.xlane.f32.xlu0 %v1323
  %v1325 = vpop.xlane.xlu0 %1324
  %v1326 = vsel %vm104, %v1322, -inf
  %1327 = vmax.xlane.f32.xlu0 %v1326
  %v1328 = vpop.xlane.xlu0 %1327
  %vm1329 = vcmp.eq.s32.totalorder %v13, 15
  %v1330 = vsel %vm1329, 1, 0
  %vm1331 = vcmp.eq.s32.totalorder %v1330, 1
  %v1332 = vsel %vm1331, %v1325, %v1245
  %v1333 = vsel %vm1331, %v1328, %v1246
  %vm1334 = vcmask 124928
  %1335 = vst.msk [vmem:[%s2] sm:$0x7] %vm1334, %v1332
  %1336 = vst.msk [vmem:[%s2 + $0x4] sm:$0x7] %vm1334, %v1333
  %1337 = vxpose.xlu0.b32.start [1/16] %v1332, 128
  %1338 = vxpose.xlu0.b32.cont [2/16] 0.0, 128
  %1339 = vxpose.xlu0.b32.cont [3/16] 0.0, 128
  %1340 = vxpose.xlu0.b32.cont [4/16] 0.0, 128
  %1341 = vxpose.xlu0.b32.cont [5/16] 0.0, 128
  %1342 = vxpose.xlu0.b32.cont [6/16] 0.0, 128
  %1343 = vxpose.xlu0.b32.cont [7/16] 0.0, 128
  %1344 = vxpose.xlu0.b32.cont [8/16] 0.0, 128
  %1345 = vxpose.xlu0.b32.cont [9/16] 0.0, 128
  %1346 = vxpose.xlu0.b32.cont [10/16] 0.0, 128
  %1347 = vxpose.xlu0.b32.cont [11/16] 0.0, 128
  %1348 = vxpose.xlu0.b32.cont [12/16] 0.0, 128
  %1349 = vxpose.xlu0.b32.cont [13/16] 0.0, 128
  %1350 = vxpose.xlu0.b32.cont [14/16] 0.0, 128
  %1351 = vxpose.xlu0.b32.cont [15/16] 0.0, 128
  %1352 = vxpose.xlu0.b32.end [16/16] 0.0, 128
  %v1353 = vpop.trf.xlu0
  %v1354 = vpop.trf.xlu0
  %v1355 = vpop.trf.xlu0
  %v1356 = vpop.trf.xlu0
  %v1357 = vpop.trf.xlu0
  %v1358 = vpop.trf.xlu0
  %v1359 = vpop.trf.xlu0
  %v1360 = vpop.trf.xlu0
  %v1361 = vpop.trf.xlu0
  %v1362 = vpop.trf.xlu0
  %v1363 = vpop.trf.xlu0
  %v1364 = vpop.trf.xlu0
  %v1365 = vpop.trf.xlu0
  %v1366 = vpop.trf.xlu0
  %v1367 = vpop.trf.xlu0
  %v1368 = vpop.trf.xlu0
  %1369 = vxpose.xlu0.b32.start [1/16] %v1333, 128
  %1370 = vxpose.xlu0.b32.cont [2/16] 0.0, 128
  %1371 = vxpose.xlu0.b32.cont [3/16] 0.0, 128
  %1372 = vxpose.xlu0.b32.cont [4/16] 0.0, 128
  %1373 = vxpose.xlu0.b32.cont [5/16] 0.0, 128
  %1374 = vxpose.xlu0.b32.cont [6/16] 0.0, 128
  %1375 = vxpose.xlu0.b32.cont [7/16] 0.0, 128
  %1376 = vxpose.xlu0.b32.cont [8/16] 0.0, 128
  %1377 = vxpose.xlu0.b32.cont [9/16] 0.0, 128
  %1378 = vxpose.xlu0.b32.cont [10/16] 0.0, 128
  %1379 = vxpose.xlu0.b32.cont [11/16] 0.0, 128
  %1380 = vxpose.xlu0.b32.cont [12/16] 0.0, 128
  %1381 = vxpose.xlu0.b32.cont [13/16] 0.0, 128
  %1382 = vxpose.xlu0.b32.cont [14/16] 0.0, 128
  %1383 = vxpose.xlu0.b32.cont [15/16] 0.0, 128
  %1384 = vxpose.xlu0.b32.end [16/16] 0.0, 128
  %v1385 = vpop.trf.xlu0
  %v1386 = vpop.trf.xlu0
  %v1387 = vpop.trf.xlu0
  %v1388 = vpop.trf.xlu0
  %v1389 = vpop.trf.xlu0
  %v1390 = vpop.trf.xlu0
  %v1391 = vpop.trf.xlu0
  %v1392 = vpop.trf.xlu0
  %v1393 = vpop.trf.xlu0
  %v1394 = vpop.trf.xlu0
  %v1395 = vpop.trf.xlu0
  %v1396 = vpop.trf.xlu0
  %v1397 = vpop.trf.xlu0
  %v1398 = vpop.trf.xlu0
  %v1399 = vpop.trf.xlu0
  %v1400 = vpop.trf.xlu0
  %v1401 = vlaneseq
  %v1402 = vshrl.u32 %v1401, 7
  %v1403 = vsub.s32 0, %v1402
  %v1404 = vrot.slane %v10, %v1403
  %v1405 = vlaneseq
  %v1406 = vshrl.u32 %v1405, 7
  %v1407 = vsub.s32 0, %v1406
  %v1408 = vrot.slane %v11, %v1407
  %1410 = vset.pattern.permute.xlu0 0
  %1411 = vperm.xlu0 %1410, %v1353
  %v1412 = vpop.permute.xlu0 %1411
  %1415 = vset.pattern.permute.xlu0 0
  %1416 = vperm.xlu0 %1415, %v1354
  %v1417 = vpop.permute.xlu0 %1416
  %1420 = vset.pattern.permute.xlu0 0
  %1421 = vperm.xlu0 %1420, %v1385
  %v1422 = vpop.permute.xlu0 %1421
  %1425 = vset.pattern.permute.xlu0 0
  %1426 = vperm.xlu0 %1425, %v1386
  %v1427 = vpop.permute.xlu0 %1426
  %v1429 = vsub.f32 %v1404, %v1412
  %v1430 = vsub.f32 %v1404, %v1417
  %v1431 = vsub.f32 %v1408, %v1422
  %v1432 = vsub.f32 %v1408, %v1427
  %v1433 = vlaneseq
  %v1434 = vshrl.u32 %v1433, 7
  %v1435 = vsub.s32 1, %v1434
  %v1436 = vrot.slane %v10, %v1435
  %v1437 = vlaneseq
  %v1438 = vshrl.u32 %v1437, 7
  %v1439 = vsub.s32 1, %v1438
  %v1440 = vrot.slane %v11, %v1439
  %1441 = vset.pattern.permute.xlu0 1
  %1442 = vperm.xlu0 %1441, %v1353
  %v1443 = vpop.permute.xlu0 %1442
  %1445 = vset.pattern.permute.xlu0 1
  %1446 = vperm.xlu0 %1445, %v1354
  %v1447 = vpop.permute.xlu0 %1446
  %1449 = vset.pattern.permute.xlu0 1
  %1450 = vperm.xlu0 %1449, %v1385
  %v1451 = vpop.permute.xlu0 %1450
  %1453 = vset.pattern.permute.xlu0 1
  %1454 = vperm.xlu0 %1453, %v1386
  %v1455 = vpop.permute.xlu0 %1454
  %v1457 = vsub.f32 %v1436, %v1443
  %v1458 = vsub.f32 %v1436, %v1447
  %v1459 = vsub.f32 %v1440, %v1451
  %v1460 = vsub.f32 %v1440, %v1455
  %v1461 = vlaneseq
  %v1462 = vshrl.u32 %v1461, 7
  %v1463 = vsub.s32 2, %v1462
  %v1464 = vrot.slane %v10, %v1463
  %v1465 = vlaneseq
  %v1466 = vshrl.u32 %v1465, 7
  %v1467 = vsub.s32 2, %v1466
  %v1468 = vrot.slane %v11, %v1467
  %1469 = vset.pattern.permute.xlu0 2
  %1470 = vperm.xlu0 %1469, %v1353
  %v1471 = vpop.permute.xlu0 %1470
  %1473 = vset.pattern.permute.xlu0 2
  %1474 = vperm.xlu0 %1473, %v1354
  %v1475 = vpop.permute.xlu0 %1474
  %1477 = vset.pattern.permute.xlu0 2
  %1478 = vperm.xlu0 %1477, %v1385
  %v1479 = vpop.permute.xlu0 %1478
  %1481 = vset.pattern.permute.xlu0 2
  %1482 = vperm.xlu0 %1481, %v1386
  %v1483 = vpop.permute.xlu0 %1482
  %v1485 = vsub.f32 %v1464, %v1471
  %v1486 = vsub.f32 %v1464, %v1475
  %v1487 = vsub.f32 %v1468, %v1479
  %v1488 = vsub.f32 %v1468, %v1483
  %v1489 = vmul.f32 %v1429, %v1429
  %v1490 = vmul.f32 %v1430, %v1430
  %v1491 = vmul.f32 %v1431, %v1431
  %v1492 = vmul.f32 %v1432, %v1432
  %v1493 = vmul.f32 %v1457, %v1457
  %v1494 = vmul.f32 %v1458, %v1458
  %v1495 = vmul.f32 %v1459, %v1459
  %v1496 = vmul.f32 %v1460, %v1460
  %v1497 = vadd.f32 %v1489, %v1493
  %v1498 = vadd.f32 %v1490, %v1494
  %v1499 = vadd.f32 %v1491, %v1495
  %v1500 = vadd.f32 %v1492, %v1496
  %v1501 = vmul.f32 %v1485, %v1485
  %v1502 = vmul.f32 %v1486, %v1486
  %v1503 = vmul.f32 %v1487, %v1487
  %v1504 = vmul.f32 %v1488, %v1488
  %v1505 = vadd.f32 %v1497, %v1501
  %v1506 = vadd.f32 %v1498, %v1502
  %v1507 = vadd.f32 %v1499, %v1503
  %v1508 = vadd.f32 %v1500, %v1504
  %1509 = vmin.xlane.f32.xlu0 %v1505
  %v1510 = vpop.xlane.xlu0 %1509
  %1511 = vmin.xlane.f32.xlu0 %v1506
  %v1512 = vpop.xlane.xlu0 %1511
  %1513 = vmin.xlane.f32.xlu0 %v1507
  %v1514 = vpop.xlane.xlu0 %1513
  %1515 = vmin.xlane.f32.xlu0 %v1508
  %v1516 = vpop.xlane.xlu0 %1515
  %vm1517 = vcmp.le.f32.partialorder %v1505, %v1510
  %vm1518 = vcmp.le.f32.partialorder %v1506, %v1512
  %vm1519 = vcmp.le.f32.partialorder %v1507, %v1514
  %vm1520 = vcmp.le.f32.partialorder %v1508, %v1516
  %v1521 = vsel %vm1517, %v13, 128
  %v1522 = vsel %vm1518, %v13, 128
  %v1523 = vsel %vm1519, %v13, 128
  %v1524 = vsel %vm1520, %v13, 128
  %v1525 = vand.u32 %v1521, 65535
  %v1526 = vshra.s32 %v1521, 16
  %v1527 = vcvt.s32.f32 %v1525
  %v1528 = vcvt.s32.f32 %v1526
  %1529 = vmin.xlane.f32.xlu0 %v1528
  %v1530 = vpop.xlane.xlu0 %1529
  %vm1531 = vcmp.eq.f32.partialorder %v1528, %v1530
  %v1532 = vsel %vm1531, %v1527, inf
  %1533 = vmin.xlane.f32.xlu0 %v1532
  %v1534 = vpop.xlane.xlu0 %1533
  %v1535 = vcvt.f32.s32 %v1534
  %v1536 = vcvt.f32.s32 %v1530
  %v1537 = vshll.u32 %v1536, 16
  %v1538 = vadd.s32 %v1537, %v1535
  %v1539 = vand.u32 %v1522, 65535
  %v1540 = vshra.s32 %v1522, 16
  %v1541 = vcvt.s32.f32 %v1539
  %v1542 = vcvt.s32.f32 %v1540
  %1543 = vmin.xlane.f32.xlu0 %v1542
  %v1544 = vpop.xlane.xlu0 %1543
  %vm1545 = vcmp.eq.f32.partialorder %v1542, %v1544
  %v1546 = vsel %vm1545, %v1541, inf
  %1547 = vmin.xlane.f32.xlu0 %v1546
  %v1548 = vpop.xlane.xlu0 %1547
  %v1549 = vcvt.f32.s32 %v1548
  %v1550 = vcvt.f32.s32 %v1544
  %v1551 = vshll.u32 %v1550, 16
  %v1552 = vadd.s32 %v1551, %v1549
  %v1553 = vand.u32 %v1523, 65535
  %v1554 = vshra.s32 %v1523, 16
  %v1555 = vcvt.s32.f32 %v1553
  %v1556 = vcvt.s32.f32 %v1554
  %1557 = vmin.xlane.f32.xlu0 %v1556
  %v1558 = vpop.xlane.xlu0 %1557
  %vm1559 = vcmp.eq.f32.partialorder %v1556, %v1558
  %v1560 = vsel %vm1559, %v1555, inf
  %1561 = vmin.xlane.f32.xlu0 %v1560
  %v1562 = vpop.xlane.xlu0 %1561
  %v1563 = vcvt.f32.s32 %v1562
  %v1564 = vcvt.f32.s32 %v1558
  %v1565 = vshll.u32 %v1564, 16
  %v1566 = vadd.s32 %v1565, %v1563
  %v1567 = vand.u32 %v1524, 65535
  %v1568 = vshra.s32 %v1524, 16
  %v1569 = vcvt.s32.f32 %v1567
  %v1570 = vcvt.s32.f32 %v1568
  %1571 = vmin.xlane.f32.xlu0 %v1570
  %v1572 = vpop.xlane.xlu0 %1571
  %vm1573 = vcmp.eq.f32.partialorder %v1570, %v1572
  %v1574 = vsel %vm1573, %v1569, inf
  %1575 = vmin.xlane.f32.xlu0 %v1574
  %v1576 = vpop.xlane.xlu0 %1575
  %v1577 = vcvt.f32.s32 %v1576
  %v1578 = vcvt.f32.s32 %v1572
  %v1579 = vshll.u32 %v1578, 16
  %v1580 = vadd.s32 %v1579, %v1577
  %vm1581 = vcmp.eq.s32.totalorder %v13, %v1538
  %vm1582 = vcmp.eq.s32.totalorder %v13, %v1552
  %vm1583 = vcmp.eq.s32.totalorder %v13, %v1566
  %vm1584 = vcmp.eq.s32.totalorder %v13, %v1580
  %v1585 = vsel %vm1581, 1, 0
  %v1586 = vsel %vm1582, 1, 0
  %v1587 = vsel %vm1583, 1, 0
  %v1588 = vsel %vm1584, 1, 0
  %v1589 = vcvt.s32.f32 %v1585
  %v1590 = vcvt.s32.f32 %v1586
  %v1591 = vcvt.s32.f32 %v1587
  %v1592 = vcvt.s32.f32 %v1588
  %1593 = vmatprep.subr.mxu0 0.0
  %1594 = vmatpush1.xpose.msra.mxu0 %v1589
  %1595 = vmatprep.subr.mxu0 0.0
  %1596 = vmatpush1.xpose.msra.mxu0 %v1590
  %1597 = vmatprep.subr.mxu0 0.0
  %1598 = vmatpush1.xpose.msra.mxu0 0.0
  %1599 = vmatprep.subr.mxu0 0.0
  %1600 = vmatpush1.xpose.msra.mxu0 0.0
  %1601 = vmatprep.subr.mxu0 0.0
  %1602 = vmatpush1.xpose.msra.mxu0 0.0
  %1603 = vmatprep.subr.mxu0 0.0
  %1604 = vmatpush1.xpose.msra.mxu0 0.0
  %1605 = vmatprep.subr.mxu0 0.0
  %1606 = vmatpush1.xpose.msra.mxu0 0.0
  %1607 = vmatprep.subr.mxu0 0.0
  %1608 = vmatpush1.xpose.msra.mxu0 0.0
  %1609 = vmatprep.subr.mxu0 0.0
  %1610 = vmatpush1.xpose.msra.mxu0 0.0
  %1611 = vmatprep.subr.mxu0 0.0
  %1612 = vmatpush1.xpose.msra.mxu0 0.0
  %1613 = vmatprep.subr.mxu0 0.0
  %1614 = vmatpush1.xpose.msra.mxu0 0.0
  %1615 = vmatprep.subr.mxu0 0.0
  %1616 = vmatpush1.xpose.msra.mxu0 0.0
  %1617 = vmatprep.subr.mxu0 0.0
  %1618 = vmatpush1.xpose.msra.mxu0 0.0
  %1619 = vmatprep.subr.mxu0 0.0
  %1620 = vmatpush1.xpose.msra.mxu0 0.0
  %1621 = vmatprep.subr.mxu0 0.0
  %1622 = vmatpush1.xpose.msra.mxu0 0.0
  %1623 = vmatprep.subr.mxu0 0.0
  %1624 = vmatpush1.xpose.msra.mxu0 0.0
  %1625 = vmatprep.subr.mxu0 0.0
  %1626 = vmatpush1.xpose.msra.mxu0 0.0
  %1627 = vmatprep.subr.mxu0 0.0
  %1628 = vmatpush1.xpose.msra.mxu0 0.0
  %1629 = vmatprep.subr.mxu0 0.0
  %1630 = vmatpush1.xpose.msra.mxu0 0.0
  %1631 = vmatprep.subr.mxu0 0.0
  %1632 = vmatpush1.xpose.msra.mxu0 0.0
  %1633 = vmatprep.subr.mxu0 0.0
  %1634 = vmatpush1.xpose.msra.mxu0 0.0
  %1635 = vmatprep.subr.mxu0 0.0
  %1636 = vmatpush1.xpose.msra.mxu0 0.0
  %1637 = vmatprep.subr.mxu0 0.0
  %1638 = vmatpush1.xpose.msra.mxu0 0.0
  %1639 = vmatprep.subr.mxu0 0.0
  %1640 = vmatpush1.xpose.msra.mxu0 0.0
  %1641 = vmatprep.subr.mxu0 0.0
  %1642 = vmatpush1.xpose.msra.mxu0 0.0
  %1643 = vmatprep.subr.mxu0 0.0
  %1644 = vmatpush1.xpose.msra.mxu0 0.0
  %1645 = vmatprep.subr.mxu0 0.0
  %1646 = vmatpush1.xpose.msra.mxu0 0.0
  %1647 = vmatprep.subr.mxu0 0.0
  %1648 = vmatpush1.xpose.msra.mxu0 0.0
  %1649 = vmatprep.subr.mxu0 0.0
  %1650 = vmatpush1.xpose.msra.mxu0 0.0
  %1651 = vmatprep.subr.mxu0 0.0
  %1652 = vmatpush1.xpose.msra.mxu0 0.0
  %1653 = vmatprep.subr.mxu0 0.0
  %1654 = vmatpush1.xpose.msra.mxu0 0.0
  %1655 = vmatprep.subr.mxu0 0.0
  %1656 = vmatpush1.xpose.msra.mxu0 0.0
  %1657 = vmatprep.mubr.f32.mxu0 0.0
  %1658 = vmatmul.mubr.f32.gmra.mrb[0].mxu0 %v10
  %v1659 = vpop.f32.mrb[0].mxu0
  %v1660 = vadd.f32 0.0, %v1659
  %v1661 = vpop.f32.mrb[0].mxu0
  %1662 = vdwg.mxu0
  %1663 = vmatprep.subr.mxu0 0.0
  %1664 = vmatpush1.xpose.msra.mxu0 %v1591
  %1665 = vmatprep.subr.mxu0 0.0
  %1666 = vmatpush1.xpose.msra.mxu0 %v1592
  %1667 = vmatprep.subr.mxu0 0.0
  %1668 = vmatpush1.xpose.msra.mxu0 0.0
  %1669 = vmatprep.subr.mxu0 0.0
  %1670 = vmatpush1.xpose.msra.mxu0 0.0
  %1671 = vmatprep.subr.mxu0 0.0
  %1672 = vmatpush1.xpose.msra.mxu0 0.0
  %1673 = vmatprep.subr.mxu0 0.0
  %1674 = vmatpush1.xpose.msra.mxu0 0.0
  %1675 = vmatprep.subr.mxu0 0.0
  %1676 = vmatpush1.xpose.msra.mxu0 0.0
  %1677 = vmatprep.subr.mxu0 0.0
  %1678 = vmatpush1.xpose.msra.mxu0 0.0
  %1679 = vmatprep.subr.mxu0 0.0
  %1680 = vmatpush1.xpose.msra.mxu0 0.0
  %1681 = vmatprep.subr.mxu0 0.0
  %1682 = vmatpush1.xpose.msra.mxu0 0.0
  %1683 = vmatprep.subr.mxu0 0.0
  %1684 = vmatpush1.xpose.msra.mxu0 0.0
  %1685 = vmatprep.subr.mxu0 0.0
  %1686 = vmatpush1.xpose.msra.mxu0 0.0
  %1687 = vmatprep.subr.mxu0 0.0
  %1688 = vmatpush1.xpose.msra.mxu0 0.0
  %1689 = vmatprep.subr.mxu0 0.0
  %1690 = vmatpush1.xpose.msra.mxu0 0.0
  %1691 = vmatprep.subr.mxu0 0.0
  %1692 = vmatpush1.xpose.msra.mxu0 0.0
  %1693 = vmatprep.subr.mxu0 0.0
  %1694 = vmatpush1.xpose.msra.mxu0 0.0
  %1695 = vmatprep.subr.mxu0 0.0
  %1696 = vmatpush1.xpose.msra.mxu0 0.0
  %1697 = vmatprep.subr.mxu0 0.0
  %1698 = vmatpush1.xpose.msra.mxu0 0.0
  %1699 = vmatprep.subr.mxu0 0.0
  %1700 = vmatpush1.xpose.msra.mxu0 0.0
  %1701 = vmatprep.subr.mxu0 0.0
  %1702 = vmatpush1.xpose.msra.mxu0 0.0
  %1703 = vmatprep.subr.mxu0 0.0
  %1704 = vmatpush1.xpose.msra.mxu0 0.0
  %1705 = vmatprep.subr.mxu0 0.0
  %1706 = vmatpush1.xpose.msra.mxu0 0.0
  %1707 = vmatprep.subr.mxu0 0.0
  %1708 = vmatpush1.xpose.msra.mxu0 0.0
  %1709 = vmatprep.subr.mxu0 0.0
  %1710 = vmatpush1.xpose.msra.mxu0 0.0
  %1711 = vmatprep.subr.mxu0 0.0
  %1712 = vmatpush1.xpose.msra.mxu0 0.0
  %1713 = vmatprep.subr.mxu0 0.0
  %1714 = vmatpush1.xpose.msra.mxu0 0.0
  %1715 = vmatprep.subr.mxu0 0.0
  %1716 = vmatpush1.xpose.msra.mxu0 0.0
  %1717 = vmatprep.subr.mxu0 0.0
  %1718 = vmatpush1.xpose.msra.mxu0 0.0
  %1719 = vmatprep.subr.mxu0 0.0
  %1720 = vmatpush1.xpose.msra.mxu0 0.0
  %1721 = vmatprep.subr.mxu0 0.0
  %1722 = vmatpush1.xpose.msra.mxu0 0.0
  %1723 = vmatprep.subr.mxu0 0.0
  %1724 = vmatpush1.xpose.msra.mxu0 0.0
  %1725 = vmatprep.subr.mxu0 0.0
  %1726 = vmatpush1.xpose.msra.mxu0 0.0
  %1727 = vmatprep.mubr.f32.mxu0 0.0
  %1728 = vmatmul.mubr.f32.gmra.mrb[0].mxu0 %v11
  %v1729 = vpop.f32.mrb[0].mxu0
  %v1730 = vadd.f32 0.0, %v1729
  %v1731 = vpop.f32.mrb[0].mxu0
  %1732 = vdwg.mxu0
  %v1733 = vsub.f32 %v1660, %v1332
  %v1734 = vsub.f32 %v1730, %v1333
  %1735 = vst.msk [vmem:[%s1] sm:$0x7] %vm1334, %v1733
  %1736 = vst.msk [vmem:[%s1 + $0x4] sm:$0x7] %vm1334, %v1734
  %v1737 = vsel %vm1581, 1e+30, %v1505
  %v1738 = vsel %vm1582, 1e+30, %v1506
  %v1739 = vsel %vm1583, 1e+30, %v1507
  %v1740 = vsel %vm1584, 1e+30, %v1508
  %1741 = vmin.xlane.f32.xlu0 %v1737
  %v1742 = vpop.xlane.xlu0 %1741
  %1743 = vmin.xlane.f32.xlu0 %v1738
  %v1744 = vpop.xlane.xlu0 %1743
  %1745 = vmin.xlane.f32.xlu0 %v1739
  %v1746 = vpop.xlane.xlu0 %1745
  %1747 = vmin.xlane.f32.xlu0 %v1740
  %v1748 = vpop.xlane.xlu0 %1747
  %vm1749 = vcmp.le.f32.partialorder %v1737, %v1742
  %vm1750 = vcmp.le.f32.partialorder %v1738, %v1744
  %vm1751 = vcmp.le.f32.partialorder %v1739, %v1746
  %vm1752 = vcmp.le.f32.partialorder %v1740, %v1748
  %v1753 = vsel %vm1749, %v13, 128
  %v1754 = vsel %vm1750, %v13, 128
  %v1755 = vsel %vm1751, %v13, 128
  %v1756 = vsel %vm1752, %v13, 128
  %v1757 = vand.u32 %v1753, 65535
  %v1758 = vshra.s32 %v1753, 16
  %v1759 = vcvt.s32.f32 %v1757
  %v1760 = vcvt.s32.f32 %v1758
  %1761 = vmin.xlane.f32.xlu0 %v1760
  %v1762 = vpop.xlane.xlu0 %1761
  %vm1763 = vcmp.eq.f32.partialorder %v1760, %v1762
  %v1764 = vsel %vm1763, %v1759, inf
  %1765 = vmin.xlane.f32.xlu0 %v1764
  %v1766 = vpop.xlane.xlu0 %1765
  %v1767 = vcvt.f32.s32 %v1766
  %v1768 = vcvt.f32.s32 %v1762
  %v1769 = vshll.u32 %v1768, 16
  %v1770 = vadd.s32 %v1769, %v1767
  %v1771 = vand.u32 %v1754, 65535
  %v1772 = vshra.s32 %v1754, 16
  %v1773 = vcvt.s32.f32 %v1771
  %v1774 = vcvt.s32.f32 %v1772
  %1775 = vmin.xlane.f32.xlu0 %v1774
  %v1776 = vpop.xlane.xlu0 %1775
  %vm1777 = vcmp.eq.f32.partialorder %v1774, %v1776
  %v1778 = vsel %vm1777, %v1773, inf
  %1779 = vmin.xlane.f32.xlu0 %v1778
  %v1780 = vpop.xlane.xlu0 %1779
  %v1781 = vcvt.f32.s32 %v1780
  %v1782 = vcvt.f32.s32 %v1776
  %v1783 = vshll.u32 %v1782, 16
  %v1784 = vadd.s32 %v1783, %v1781
  %v1785 = vand.u32 %v1755, 65535
  %v1786 = vshra.s32 %v1755, 16
  %v1787 = vcvt.s32.f32 %v1785
  %v1788 = vcvt.s32.f32 %v1786
  %1789 = vmin.xlane.f32.xlu0 %v1788
  %v1790 = vpop.xlane.xlu0 %1789
  %vm1791 = vcmp.eq.f32.partialorder %v1788, %v1790
  %v1792 = vsel %vm1791, %v1787, inf
  %1793 = vmin.xlane.f32.xlu0 %v1792
  %v1794 = vpop.xlane.xlu0 %1793
  %v1795 = vcvt.f32.s32 %v1794
  %v1796 = vcvt.f32.s32 %v1790
  %v1797 = vshll.u32 %v1796, 16
  %v1798 = vadd.s32 %v1797, %v1795
  %v1799 = vand.u32 %v1756, 65535
  %v1800 = vshra.s32 %v1756, 16
  %v1801 = vcvt.s32.f32 %v1799
  %v1802 = vcvt.s32.f32 %v1800
  %1803 = vmin.xlane.f32.xlu0 %v1802
  %v1804 = vpop.xlane.xlu0 %1803
  %vm1805 = vcmp.eq.f32.partialorder %v1802, %v1804
  %v1806 = vsel %vm1805, %v1801, inf
  %1807 = vmin.xlane.f32.xlu0 %v1806
  %v1808 = vpop.xlane.xlu0 %1807
  %v1809 = vcvt.f32.s32 %v1808
  %v1810 = vcvt.f32.s32 %v1804
  %v1811 = vshll.u32 %v1810, 16
  %v1812 = vadd.s32 %v1811, %v1809
  %vm1813 = vcmp.eq.s32.totalorder %v13, %v1770
  %vm1814 = vcmp.eq.s32.totalorder %v13, %v1784
  %vm1815 = vcmp.eq.s32.totalorder %v13, %v1798
  %vm1816 = vcmp.eq.s32.totalorder %v13, %v1812
  %v1817 = vsel %vm1813, 1, 0
  %v1818 = vsel %vm1814, 1, 0
  %v1819 = vsel %vm1815, 1, 0
  %v1820 = vsel %vm1816, 1, 0
  %v1821 = vcvt.s32.f32 %v1817
  %v1822 = vcvt.s32.f32 %v1818
  %v1823 = vcvt.s32.f32 %v1819
  %v1824 = vcvt.s32.f32 %v1820
  %1825 = vmatprep.subr.mxu0 0.0
  %1826 = vmatpush1.xpose.msra.mxu0 %v1821
  %1827 = vmatprep.subr.mxu0 0.0
  %1828 = vmatpush1.xpose.msra.mxu0 %v1822
  %1829 = vmatprep.subr.mxu0 0.0
  %1830 = vmatpush1.xpose.msra.mxu0 0.0
  %1831 = vmatprep.subr.mxu0 0.0
  %1832 = vmatpush1.xpose.msra.mxu0 0.0
  %1833 = vmatprep.subr.mxu0 0.0
  %1834 = vmatpush1.xpose.msra.mxu0 0.0
  %1835 = vmatprep.subr.mxu0 0.0
  %1836 = vmatpush1.xpose.msra.mxu0 0.0
  %1837 = vmatprep.subr.mxu0 0.0
  %1838 = vmatpush1.xpose.msra.mxu0 0.0
  %1839 = vmatprep.subr.mxu0 0.0
  %1840 = vmatpush1.xpose.msra.mxu0 0.0
  %1841 = vmatprep.subr.mxu0 0.0
  %1842 = vmatpush1.xpose.msra.mxu0 0.0
  %1843 = vmatprep.subr.mxu0 0.0
  %1844 = vmatpush1.xpose.msra.mxu0 0.0
  %1845 = vmatprep.subr.mxu0 0.0
  %1846 = vmatpush1.xpose.msra.mxu0 0.0
  %1847 = vmatprep.subr.mxu0 0.0
  %1848 = vmatpush1.xpose.msra.mxu0 0.0
  %1849 = vmatprep.subr.mxu0 0.0
  %1850 = vmatpush1.xpose.msra.mxu0 0.0
  %1851 = vmatprep.subr.mxu0 0.0
  %1852 = vmatpush1.xpose.msra.mxu0 0.0
  %1853 = vmatprep.subr.mxu0 0.0
  %1854 = vmatpush1.xpose.msra.mxu0 0.0
  %1855 = vmatprep.subr.mxu0 0.0
  %1856 = vmatpush1.xpose.msra.mxu0 0.0
  %1857 = vmatprep.subr.mxu0 0.0
  %1858 = vmatpush1.xpose.msra.mxu0 0.0
  %1859 = vmatprep.subr.mxu0 0.0
  %1860 = vmatpush1.xpose.msra.mxu0 0.0
  %1861 = vmatprep.subr.mxu0 0.0
  %1862 = vmatpush1.xpose.msra.mxu0 0.0
  %1863 = vmatprep.subr.mxu0 0.0
  %1864 = vmatpush1.xpose.msra.mxu0 0.0
  %1865 = vmatprep.subr.mxu0 0.0
  %1866 = vmatpush1.xpose.msra.mxu0 0.0
  %1867 = vmatprep.subr.mxu0 0.0
  %1868 = vmatpush1.xpose.msra.mxu0 0.0
  %1869 = vmatprep.subr.mxu0 0.0
  %1870 = vmatpush1.xpose.msra.mxu0 0.0
  %1871 = vmatprep.subr.mxu0 0.0
  %1872 = vmatpush1.xpose.msra.mxu0 0.0
  %1873 = vmatprep.subr.mxu0 0.0
  %1874 = vmatpush1.xpose.msra.mxu0 0.0
  %1875 = vmatprep.subr.mxu0 0.0
  %1876 = vmatpush1.xpose.msra.mxu0 0.0
  %1877 = vmatprep.subr.mxu0 0.0
  %1878 = vmatpush1.xpose.msra.mxu0 0.0
  %1879 = vmatprep.subr.mxu0 0.0
  %1880 = vmatpush1.xpose.msra.mxu0 0.0
  %1881 = vmatprep.subr.mxu0 0.0
  %1882 = vmatpush1.xpose.msra.mxu0 0.0
  %1883 = vmatprep.subr.mxu0 0.0
  %1884 = vmatpush1.xpose.msra.mxu0 0.0
  %1885 = vmatprep.subr.mxu0 0.0
  %1886 = vmatpush1.xpose.msra.mxu0 0.0
  %1887 = vmatprep.subr.mxu0 0.0
  %1888 = vmatpush1.xpose.msra.mxu0 0.0
  %1889 = vmatprep.mubr.f32.mxu0 0.0
  %1890 = vmatmul.mubr.f32.gmra.mrb[0].mxu0 %v10
  %v1891 = vpop.f32.mrb[0].mxu0
  %v1892 = vadd.f32 0.0, %v1891
  %v1893 = vpop.f32.mrb[0].mxu0
  %1894 = vdwg.mxu0
  %1895 = vmatprep.subr.mxu0 0.0
  %1896 = vmatpush1.xpose.msra.mxu0 %v1823
  %1897 = vmatprep.subr.mxu0 0.0
  %1898 = vmatpush1.xpose.msra.mxu0 %v1824
  %1899 = vmatprep.subr.mxu0 0.0
  %1900 = vmatpush1.xpose.msra.mxu0 0.0
  %1901 = vmatprep.subr.mxu0 0.0
  %1902 = vmatpush1.xpose.msra.mxu0 0.0
  %1903 = vmatprep.subr.mxu0 0.0
  %1904 = vmatpush1.xpose.msra.mxu0 0.0
  %1905 = vmatprep.subr.mxu0 0.0
  %1906 = vmatpush1.xpose.msra.mxu0 0.0
  %1907 = vmatprep.subr.mxu0 0.0
  %1908 = vmatpush1.xpose.msra.mxu0 0.0
  %1909 = vmatprep.subr.mxu0 0.0
  %1910 = vmatpush1.xpose.msra.mxu0 0.0
  %1911 = vmatprep.subr.mxu0 0.0
  %1912 = vmatpush1.xpose.msra.mxu0 0.0
  %1913 = vmatprep.subr.mxu0 0.0
  %1914 = vmatpush1.xpose.msra.mxu0 0.0
  %1915 = vmatprep.subr.mxu0 0.0
  %1916 = vmatpush1.xpose.msra.mxu0 0.0
  %1917 = vmatprep.subr.mxu0 0.0
  %1918 = vmatpush1.xpose.msra.mxu0 0.0
  %1919 = vmatprep.subr.mxu0 0.0
  %1920 = vmatpush1.xpose.msra.mxu0 0.0
  %1921 = vmatprep.subr.mxu0 0.0
  %1922 = vmatpush1.xpose.msra.mxu0 0.0
  %1923 = vmatprep.subr.mxu0 0.0
  %1924 = vmatpush1.xpose.msra.mxu0 0.0
  %1925 = vmatprep.subr.mxu0 0.0
  %1926 = vmatpush1.xpose.msra.mxu0 0.0
  %1927 = vmatprep.subr.mxu0 0.0
  %1928 = vmatpush1.xpose.msra.mxu0 0.0
  %1929 = vmatprep.subr.mxu0 0.0
  %1930 = vmatpush1.xpose.msra.mxu0 0.0
  %1931 = vmatprep.subr.mxu0 0.0
  %1932 = vmatpush1.xpose.msra.mxu0 0.0
  %1933 = vmatprep.subr.mxu0 0.0
  %1934 = vmatpush1.xpose.msra.mxu0 0.0
  %1935 = vmatprep.subr.mxu0 0.0
  %1936 = vmatpush1.xpose.msra.mxu0 0.0
  %1937 = vmatprep.subr.mxu0 0.0
  %1938 = vmatpush1.xpose.msra.mxu0 0.0
  %1939 = vmatprep.subr.mxu0 0.0
  %1940 = vmatpush1.xpose.msra.mxu0 0.0
  %1941 = vmatprep.subr.mxu0 0.0
  %1942 = vmatpush1.xpose.msra.mxu0 0.0
  %1943 = vmatprep.subr.mxu0 0.0
  %1944 = vmatpush1.xpose.msra.mxu0 0.0
  %1945 = vmatprep.subr.mxu0 0.0
  %1946 = vmatpush1.xpose.msra.mxu0 0.0
  %1947 = vmatprep.subr.mxu0 0.0
  %1948 = vmatpush1.xpose.msra.mxu0 0.0
  %1949 = vmatprep.subr.mxu0 0.0
  %1950 = vmatpush1.xpose.msra.mxu0 0.0
  %1951 = vmatprep.subr.mxu0 0.0
  %1952 = vmatpush1.xpose.msra.mxu0 0.0
  %1953 = vmatprep.subr.mxu0 0.0
  %1954 = vmatpush1.xpose.msra.mxu0 0.0
  %1955 = vmatprep.subr.mxu0 0.0
  %1956 = vmatpush1.xpose.msra.mxu0 0.0
  %1957 = vmatprep.subr.mxu0 0.0
  %1958 = vmatpush1.xpose.msra.mxu0 0.0
  %1959 = vmatprep.mubr.f32.mxu0 0.0
  %1960 = vmatmul.mubr.f32.gmra.mrb[0].mxu0 %v11
  %v1961 = vpop.f32.mrb[0].mxu0
  %v1962 = vadd.f32 0.0, %v1961
  %v1963 = vpop.f32.mrb[0].mxu0
  %1964 = vdwg.mxu0
  %v1965 = vsub.f32 %v1892, %v1332
  %v1966 = vsub.f32 %v1962, %v1333
  %1969 = vrot.lane.b32.xlu0 %v1965, 16
  %v1970 = vpop.permute.xlu0 %1969
  %1971 = vrot.lane.b32.xlu0 %v1966, 16
  %v1972 = vpop.permute.xlu0 %1971
  %vm1975 = vcmask 256128
  %1976 = vst.msk [vmem:[%s1] sm:$0x7] %vm1975, %v1970
  %1977 = vst.msk [vmem:[%s1 + $0x4] sm:$0x7] %vm1975, %v1972
  %v1978 = vsel %vm1813, 1e+30, %v1737
  %v1979 = vsel %vm1814, 1e+30, %v1738
  %v1980 = vsel %vm1815, 1e+30, %v1739
  %v1981 = vsel %vm1816, 1e+30, %v1740
  %1982 = vmin.xlane.f32.xlu0 %v1978
  %v1983 = vpop.xlane.xlu0 %1982
  %1984 = vmin.xlane.f32.xlu0 %v1979
  %v1985 = vpop.xlane.xlu0 %1984
  %1986 = vmin.xlane.f32.xlu0 %v1980
  %v1987 = vpop.xlane.xlu0 %1986
  %1988 = vmin.xlane.f32.xlu0 %v1981
  %v1989 = vpop.xlane.xlu0 %1988
  %vm1990 = vcmp.le.f32.partialorder %v1978, %v1983
  %vm1991 = vcmp.le.f32.partialorder %v1979, %v1985
  %vm1992 = vcmp.le.f32.partialorder %v1980, %v1987
  %vm1993 = vcmp.le.f32.partialorder %v1981, %v1989
  %v1994 = vsel %vm1990, %v13, 128
  %v1995 = vsel %vm1991, %v13, 128
  %v1996 = vsel %vm1992, %v13, 128
  %v1997 = vsel %vm1993, %v13, 128
  %v1998 = vand.u32 %v1994, 65535
  %v1999 = vshra.s32 %v1994, 16
  %v2000 = vcvt.s32.f32 %v1998
  %v2001 = vcvt.s32.f32 %v1999
  %2002 = vmin.xlane.f32.xlu0 %v2001
  %v2003 = vpop.xlane.xlu0 %2002
  %vm2004 = vcmp.eq.f32.partialorder %v2001, %v2003
  %v2005 = vsel %vm2004, %v2000, inf
  %2006 = vmin.xlane.f32.xlu0 %v2005
  %v2007 = vpop.xlane.xlu0 %2006
  %v2008 = vcvt.f32.s32 %v2007
  %v2009 = vcvt.f32.s32 %v2003
  %v2010 = vshll.u32 %v2009, 16
  %v2011 = vadd.s32 %v2010, %v2008
  %v2012 = vand.u32 %v1995, 65535
  %v2013 = vshra.s32 %v1995, 16
  %v2014 = vcvt.s32.f32 %v2012
  %v2015 = vcvt.s32.f32 %v2013
  %2016 = vmin.xlane.f32.xlu0 %v2015
  %v2017 = vpop.xlane.xlu0 %2016
  %vm2018 = vcmp.eq.f32.partialorder %v2015, %v2017
  %v2019 = vsel %vm2018, %v2014, inf
  %2020 = vmin.xlane.f32.xlu0 %v2019
  %v2021 = vpop.xlane.xlu0 %2020
  %v2022 = vcvt.f32.s32 %v2021
  %v2023 = vcvt.f32.s32 %v2017
  %v2024 = vshll.u32 %v2023, 16
  %v2025 = vadd.s32 %v2024, %v2022
  %v2026 = vand.u32 %v1996, 65535
  %v2027 = vshra.s32 %v1996, 16
  %v2028 = vcvt.s32.f32 %v2026
  %v2029 = vcvt.s32.f32 %v2027
  %2030 = vmin.xlane.f32.xlu0 %v2029
  %v2031 = vpop.xlane.xlu0 %2030
  %vm2032 = vcmp.eq.f32.partialorder %v2029, %v2031
  %v2033 = vsel %vm2032, %v2028, inf
  %2034 = vmin.xlane.f32.xlu0 %v2033
  %v2035 = vpop.xlane.xlu0 %2034
  %v2036 = vcvt.f32.s32 %v2035
  %v2037 = vcvt.f32.s32 %v2031
  %v2038 = vshll.u32 %v2037, 16
  %v2039 = vadd.s32 %v2038, %v2036
  %v2040 = vand.u32 %v1997, 65535
  %v2041 = vshra.s32 %v1997, 16
  %v2042 = vcvt.s32.f32 %v2040
  %v2043 = vcvt.s32.f32 %v2041
  %2044 = vmin.xlane.f32.xlu0 %v2043
  %v2045 = vpop.xlane.xlu0 %2044
  %vm2046 = vcmp.eq.f32.partialorder %v2043, %v2045
  %v2047 = vsel %vm2046, %v2042, inf
  %2048 = vmin.xlane.f32.xlu0 %v2047
  %v2049 = vpop.xlane.xlu0 %2048
  %v2050 = vcvt.f32.s32 %v2049
  %v2051 = vcvt.f32.s32 %v2045
  %v2052 = vshll.u32 %v2051, 16
  %v2053 = vadd.s32 %v2052, %v2050
  %vm2054 = vcmp.eq.s32.totalorder %v13, %v2011
  %vm2055 = vcmp.eq.s32.totalorder %v13, %v2025
  %vm2056 = vcmp.eq.s32.totalorder %v13, %v2039
  %vm2057 = vcmp.eq.s32.totalorder %v13, %v2053
  %v2058 = vsel %vm2054, 1, 0
  %v2059 = vsel %vm2055, 1, 0
  %v2060 = vsel %vm2056, 1, 0
  %v2061 = vsel %vm2057, 1, 0
  %v2062 = vcvt.s32.f32 %v2058
  %v2063 = vcvt.s32.f32 %v2059
  %v2064 = vcvt.s32.f32 %v2060
  %v2065 = vcvt.s32.f32 %v2061
  %2066 = vmatprep.subr.mxu0 0.0
  %2067 = vmatpush1.xpose.msra.mxu0 %v2062
  %2068 = vmatprep.subr.mxu0 0.0
  %2069 = vmatpush1.xpose.msra.mxu0 %v2063
  %2070 = vmatprep.subr.mxu0 0.0
  %2071 = vmatpush1.xpose.msra.mxu0 0.0
  %2072 = vmatprep.subr.mxu0 0.0
  %2073 = vmatpush1.xpose.msra.mxu0 0.0
  %2074 = vmatprep.subr.mxu0 0.0
  %2075 = vmatpush1.xpose.msra.mxu0 0.0
  %2076 = vmatprep.subr.mxu0 0.0
  %2077 = vmatpush1.xpose.msra.mxu0 0.0
  %2078 = vmatprep.subr.mxu0 0.0
  %2079 = vmatpush1.xpose.msra.mxu0 0.0
  %2080 = vmatprep.subr.mxu0 0.0
  %2081 = vmatpush1.xpose.msra.mxu0 0.0
  %2082 = vmatprep.subr.mxu0 0.0
  %2083 = vmatpush1.xpose.msra.mxu0 0.0
  %2084 = vmatprep.subr.mxu0 0.0
  %2085 = vmatpush1.xpose.msra.mxu0 0.0
  %2086 = vmatprep.subr.mxu0 0.0
  %2087 = vmatpush1.xpose.msra.mxu0 0.0
  %2088 = vmatprep.subr.mxu0 0.0
  %2089 = vmatpush1.xpose.msra.mxu0 0.0
  %2090 = vmatprep.subr.mxu0 0.0
  %2091 = vmatpush1.xpose.msra.mxu0 0.0
  %2092 = vmatprep.subr.mxu0 0.0
  %2093 = vmatpush1.xpose.msra.mxu0 0.0
  %2094 = vmatprep.subr.mxu0 0.0
  %2095 = vmatpush1.xpose.msra.mxu0 0.0
  %2096 = vmatprep.subr.mxu0 0.0
  %2097 = vmatpush1.xpose.msra.mxu0 0.0
  %2098 = vmatprep.subr.mxu0 0.0
  %2099 = vmatpush1.xpose.msra.mxu0 0.0
  %2100 = vmatprep.subr.mxu0 0.0
  %2101 = vmatpush1.xpose.msra.mxu0 0.0
  %2102 = vmatprep.subr.mxu0 0.0
  %2103 = vmatpush1.xpose.msra.mxu0 0.0
  %2104 = vmatprep.subr.mxu0 0.0
  %2105 = vmatpush1.xpose.msra.mxu0 0.0
  %2106 = vmatprep.subr.mxu0 0.0
  %2107 = vmatpush1.xpose.msra.mxu0 0.0
  %2108 = vmatprep.subr.mxu0 0.0
  %2109 = vmatpush1.xpose.msra.mxu0 0.0
  %2110 = vmatprep.subr.mxu0 0.0
  %2111 = vmatpush1.xpose.msra.mxu0 0.0
  %2112 = vmatprep.subr.mxu0 0.0
  %2113 = vmatpush1.xpose.msra.mxu0 0.0
  %2114 = vmatprep.subr.mxu0 0.0
  %2115 = vmatpush1.xpose.msra.mxu0 0.0
  %2116 = vmatprep.subr.mxu0 0.0
  %2117 = vmatpush1.xpose.msra.mxu0 0.0
  %2118 = vmatprep.subr.mxu0 0.0
  %2119 = vmatpush1.xpose.msra.mxu0 0.0
  %2120 = vmatprep.subr.mxu0 0.0
  %2121 = vmatpush1.xpose.msra.mxu0 0.0
  %2122 = vmatprep.subr.mxu0 0.0
  %2123 = vmatpush1.xpose.msra.mxu0 0.0
  %2124 = vmatprep.subr.mxu0 0.0
  %2125 = vmatpush1.xpose.msra.mxu0 0.0
  %2126 = vmatprep.subr.mxu0 0.0
  %2127 = vmatpush1.xpose.msra.mxu0 0.0
  %2128 = vmatprep.subr.mxu0 0.0
  %2129 = vmatpush1.xpose.msra.mxu0 0.0
  %2130 = vmatprep.mubr.f32.mxu0 0.0
  %2131 = vmatmul.mubr.f32.gmra.mrb[0].mxu0 %v10
  %v2132 = vpop.f32.mrb[0].mxu0
  %v2133 = vadd.f32 0.0, %v2132
  %v2134 = vpop.f32.mrb[0].mxu0
  %2135 = vdwg.mxu0
  %2136 = vmatprep.subr.mxu0 0.0
  %2137 = vmatpush1.xpose.msra.mxu0 %v2064
  %2138 = vmatprep.subr.mxu0 0.0
  %2139 = vmatpush1.xpose.msra.mxu0 %v2065
  %2140 = vmatprep.subr.mxu0 0.0
  %2141 = vmatpush1.xpose.msra.mxu0 0.0
  %2142 = vmatprep.subr.mxu0 0.0
  %2143 = vmatpush1.xpose.msra.mxu0 0.0
  %2144 = vmatprep.subr.mxu0 0.0
  %2145 = vmatpush1.xpose.msra.mxu0 0.0
  %2146 = vmatprep.subr.mxu0 0.0
  %2147 = vmatpush1.xpose.msra.mxu0 0.0
  %2148 = vmatprep.subr.mxu0 0.0
  %2149 = vmatpush1.xpose.msra.mxu0 0.0
  %2150 = vmatprep.subr.mxu0 0.0
  %2151 = vmatpush1.xpose.msra.mxu0 0.0
  %2152 = vmatprep.subr.mxu0 0.0
  %2153 = vmatpush1.xpose.msra.mxu0 0.0
  %2154 = vmatprep.subr.mxu0 0.0
  %2155 = vmatpush1.xpose.msra.mxu0 0.0
  %2156 = vmatprep.subr.mxu0 0.0
  %2157 = vmatpush1.xpose.msra.mxu0 0.0
  %2158 = vmatprep.subr.mxu0 0.0
  %2159 = vmatpush1.xpose.msra.mxu0 0.0
  %2160 = vmatprep.subr.mxu0 0.0
  %2161 = vmatpush1.xpose.msra.mxu0 0.0
  %2162 = vmatprep.subr.mxu0 0.0
  %2163 = vmatpush1.xpose.msra.mxu0 0.0
  %2164 = vmatprep.subr.mxu0 0.0
  %2165 = vmatpush1.xpose.msra.mxu0 0.0
  %2166 = vmatprep.subr.mxu0 0.0
  %2167 = vmatpush1.xpose.msra.mxu0 0.0
  %2168 = vmatprep.subr.mxu0 0.0
  %2169 = vmatpush1.xpose.msra.mxu0 0.0
  %2170 = vmatprep.subr.mxu0 0.0
  %2171 = vmatpush1.xpose.msra.mxu0 0.0
  %2172 = vmatprep.subr.mxu0 0.0
  %2173 = vmatpush1.xpose.msra.mxu0 0.0
  %2174 = vmatprep.subr.mxu0 0.0
  %2175 = vmatpush1.xpose.msra.mxu0 0.0
  %2176 = vmatprep.subr.mxu0 0.0
  %2177 = vmatpush1.xpose.msra.mxu0 0.0
  %2178 = vmatprep.subr.mxu0 0.0
  %2179 = vmatpush1.xpose.msra.mxu0 0.0
  %2180 = vmatprep.subr.mxu0 0.0
  %2181 = vmatpush1.xpose.msra.mxu0 0.0
  %2182 = vmatprep.subr.mxu0 0.0
  %2183 = vmatpush1.xpose.msra.mxu0 0.0
  %2184 = vmatprep.subr.mxu0 0.0
  %2185 = vmatpush1.xpose.msra.mxu0 0.0
  %2186 = vmatprep.subr.mxu0 0.0
  %2187 = vmatpush1.xpose.msra.mxu0 0.0
  %2188 = vmatprep.subr.mxu0 0.0
  %2189 = vmatpush1.xpose.msra.mxu0 0.0
  %2190 = vmatprep.subr.mxu0 0.0
  %2191 = vmatpush1.xpose.msra.mxu0 0.0
  %2192 = vmatprep.subr.mxu0 0.0
  %2193 = vmatpush1.xpose.msra.mxu0 0.0
  %2194 = vmatprep.subr.mxu0 0.0
  %2195 = vmatpush1.xpose.msra.mxu0 0.0
  %2196 = vmatprep.subr.mxu0 0.0
  %2197 = vmatpush1.xpose.msra.mxu0 0.0
  %2198 = vmatprep.subr.mxu0 0.0
  %2199 = vmatpush1.xpose.msra.mxu0 0.0
  %2200 = vmatprep.mubr.f32.mxu0 0.0
  %2201 = vmatmul.mubr.f32.gmra.mrb[0].mxu0 %v11
  %v2202 = vpop.f32.mrb[0].mxu0
  %v2203 = vadd.f32 0.0, %v2202
  %v2204 = vpop.f32.mrb[0].mxu0
  %2205 = vdwg.mxu0
  %v2206 = vsub.f32 %v2133, %v1332
  %v2207 = vsub.f32 %v2203, %v1333
  %2210 = vrot.lane.b32.xlu0 %v2206, 32
  %v2211 = vpop.permute.xlu0 %2210
  %2212 = vrot.lane.b32.xlu0 %v2207, 32
  %v2213 = vpop.permute.xlu0 %2212
  %vm2216 = vcmask 387328
  %2217 = vst.msk [vmem:[%s1] sm:$0x7] %vm2216, %v2211
  %2218 = vst.msk [vmem:[%s1 + $0x4] sm:$0x7] %vm2216, %v2213
  %v2219 = vsel %vm2054, 1e+30, %v1978
  %v2220 = vsel %vm2055, 1e+30, %v1979
  %v2221 = vsel %vm2056, 1e+30, %v1980
  %v2222 = vsel %vm2057, 1e+30, %v1981
  %2223 = vmin.xlane.f32.xlu0 %v2219
  %v2224 = vpop.xlane.xlu0 %2223
  %2225 = vmin.xlane.f32.xlu0 %v2220
  %v2226 = vpop.xlane.xlu0 %2225
  %2227 = vmin.xlane.f32.xlu0 %v2221
  %v2228 = vpop.xlane.xlu0 %2227
  %2229 = vmin.xlane.f32.xlu0 %v2222
  %v2230 = vpop.xlane.xlu0 %2229
  %vm2231 = vcmp.le.f32.partialorder %v2219, %v2224
  %vm2232 = vcmp.le.f32.partialorder %v2220, %v2226
  %vm2233 = vcmp.le.f32.partialorder %v2221, %v2228
  %vm2234 = vcmp.le.f32.partialorder %v2222, %v2230
  %v2235 = vsel %vm2231, %v13, 128
  %v2236 = vsel %vm2232, %v13, 128
  %v2237 = vsel %vm2233, %v13, 128
  %v2238 = vsel %vm2234, %v13, 128
  %v2239 = vand.u32 %v2235, 65535
  %v2240 = vshra.s32 %v2235, 16
  %v2241 = vcvt.s32.f32 %v2239
  %v2242 = vcvt.s32.f32 %v2240
  %2243 = vmin.xlane.f32.xlu0 %v2242
  %v2244 = vpop.xlane.xlu0 %2243
  %vm2245 = vcmp.eq.f32.partialorder %v2242, %v2244
  %v2246 = vsel %vm2245, %v2241, inf
  %2247 = vmin.xlane.f32.xlu0 %v2246
  %v2248 = vpop.xlane.xlu0 %2247
  %v2249 = vcvt.f32.s32 %v2248
  %v2250 = vcvt.f32.s32 %v2244
  %v2251 = vshll.u32 %v2250, 16
  %v2252 = vadd.s32 %v2251, %v2249
  %v2253 = vand.u32 %v2236, 65535
  %v2254 = vshra.s32 %v2236, 16
  %v2255 = vcvt.s32.f32 %v2253
  %v2256 = vcvt.s32.f32 %v2254
  %2257 = vmin.xlane.f32.xlu0 %v2256
  %v2258 = vpop.xlane.xlu0 %2257
  %vm2259 = vcmp.eq.f32.partialorder %v2256, %v2258
  %v2260 = vsel %vm2259, %v2255, inf
  %2261 = vmin.xlane.f32.xlu0 %v2260
  %v2262 = vpop.xlane.xlu0 %2261
  %v2263 = vcvt.f32.s32 %v2262
  %v2264 = vcvt.f32.s32 %v2258
  %v2265 = vshll.u32 %v2264, 16
  %v2266 = vadd.s32 %v2265, %v2263
  %v2267 = vand.u32 %v2237, 65535
  %v2268 = vshra.s32 %v2237, 16
  %v2269 = vcvt.s32.f32 %v2267
  %v2270 = vcvt.s32.f32 %v2268
  %2271 = vmin.xlane.f32.xlu0 %v2270
  %v2272 = vpop.xlane.xlu0 %2271
  %vm2273 = vcmp.eq.f32.partialorder %v2270, %v2272
  %v2274 = vsel %vm2273, %v2269, inf
  %2275 = vmin.xlane.f32.xlu0 %v2274
  %v2276 = vpop.xlane.xlu0 %2275
  %v2277 = vcvt.f32.s32 %v2276
  %v2278 = vcvt.f32.s32 %v2272
  %v2279 = vshll.u32 %v2278, 16
  %v2280 = vadd.s32 %v2279, %v2277
  %v2281 = vand.u32 %v2238, 65535
  %v2282 = vshra.s32 %v2238, 16
  %v2283 = vcvt.s32.f32 %v2281
  %v2284 = vcvt.s32.f32 %v2282
  %2285 = vmin.xlane.f32.xlu0 %v2284
  %v2286 = vpop.xlane.xlu0 %2285
  %vm2287 = vcmp.eq.f32.partialorder %v2284, %v2286
  %v2288 = vsel %vm2287, %v2283, inf
  %2289 = vmin.xlane.f32.xlu0 %v2288
  %v2290 = vpop.xlane.xlu0 %2289
  %v2291 = vcvt.f32.s32 %v2290
  %v2292 = vcvt.f32.s32 %v2286
  %v2293 = vshll.u32 %v2292, 16
  %v2294 = vadd.s32 %v2293, %v2291
  %vm2295 = vcmp.eq.s32.totalorder %v13, %v2252
  %vm2296 = vcmp.eq.s32.totalorder %v13, %v2266
  %vm2297 = vcmp.eq.s32.totalorder %v13, %v2280
  %vm2298 = vcmp.eq.s32.totalorder %v13, %v2294
  %v2299 = vsel %vm2295, 1, 0
  %v2300 = vsel %vm2296, 1, 0
  %v2301 = vsel %vm2297, 1, 0
  %v2302 = vsel %vm2298, 1, 0
  %v2303 = vcvt.s32.f32 %v2299
  %v2304 = vcvt.s32.f32 %v2300
  %v2305 = vcvt.s32.f32 %v2301
  %v2306 = vcvt.s32.f32 %v2302
  %2307 = vmatprep.subr.mxu0 0.0
  %2308 = vmatpush1.xpose.msra.mxu0 %v2303
  %2309 = vmatprep.subr.mxu0 0.0
  %2310 = vmatpush1.xpose.msra.mxu0 %v2304
  %2311 = vmatprep.subr.mxu0 0.0
  %2312 = vmatpush1.xpose.msra.mxu0 0.0
  %2313 = vmatprep.subr.mxu0 0.0
  %2314 = vmatpush1.xpose.msra.mxu0 0.0
  %2315 = vmatprep.subr.mxu0 0.0
  %2316 = vmatpush1.xpose.msra.mxu0 0.0
  %2317 = vmatprep.subr.mxu0 0.0
  %2318 = vmatpush1.xpose.msra.mxu0 0.0
  %2319 = vmatprep.subr.mxu0 0.0
  %2320 = vmatpush1.xpose.msra.mxu0 0.0
  %2321 = vmatprep.subr.mxu0 0.0
  %2322 = vmatpush1.xpose.msra.mxu0 0.0
  %2323 = vmatprep.subr.mxu0 0.0
  %2324 = vmatpush1.xpose.msra.mxu0 0.0
  %2325 = vmatprep.subr.mxu0 0.0
  %2326 = vmatpush1.xpose.msra.mxu0 0.0
  %2327 = vmatprep.subr.mxu0 0.0
  %2328 = vmatpush1.xpose.msra.mxu0 0.0
  %2329 = vmatprep.subr.mxu0 0.0
  %2330 = vmatpush1.xpose.msra.mxu0 0.0
  %2331 = vmatprep.subr.mxu0 0.0
  %2332 = vmatpush1.xpose.msra.mxu0 0.0
  %2333 = vmatprep.subr.mxu0 0.0
  %2334 = vmatpush1.xpose.msra.mxu0 0.0
  %2335 = vmatprep.subr.mxu0 0.0
  %2336 = vmatpush1.xpose.msra.mxu0 0.0
  %2337 = vmatprep.subr.mxu0 0.0
  %2338 = vmatpush1.xpose.msra.mxu0 0.0
  %2339 = vmatprep.subr.mxu0 0.0
  %2340 = vmatpush1.xpose.msra.mxu0 0.0
  %2341 = vmatprep.subr.mxu0 0.0
  %2342 = vmatpush1.xpose.msra.mxu0 0.0
  %2343 = vmatprep.subr.mxu0 0.0
  %2344 = vmatpush1.xpose.msra.mxu0 0.0
  %2345 = vmatprep.subr.mxu0 0.0
  %2346 = vmatpush1.xpose.msra.mxu0 0.0
  %2347 = vmatprep.subr.mxu0 0.0
  %2348 = vmatpush1.xpose.msra.mxu0 0.0
  %2349 = vmatprep.subr.mxu0 0.0
  %2350 = vmatpush1.xpose.msra.mxu0 0.0
  %2351 = vmatprep.subr.mxu0 0.0
  %2352 = vmatpush1.xpose.msra.mxu0 0.0
  %2353 = vmatprep.subr.mxu0 0.0
  %2354 = vmatpush1.xpose.msra.mxu0 0.0
  %2355 = vmatprep.subr.mxu0 0.0
  %2356 = vmatpush1.xpose.msra.mxu0 0.0
  %2357 = vmatprep.subr.mxu0 0.0
  %2358 = vmatpush1.xpose.msra.mxu0 0.0
  %2359 = vmatprep.subr.mxu0 0.0
  %2360 = vmatpush1.xpose.msra.mxu0 0.0
  %2361 = vmatprep.subr.mxu0 0.0
  %2362 = vmatpush1.xpose.msra.mxu0 0.0
  %2363 = vmatprep.subr.mxu0 0.0
  %2364 = vmatpush1.xpose.msra.mxu0 0.0
  %2365 = vmatprep.subr.mxu0 0.0
  %2366 = vmatpush1.xpose.msra.mxu0 0.0
  %2367 = vmatprep.subr.mxu0 0.0
  %2368 = vmatpush1.xpose.msra.mxu0 0.0
  %2369 = vmatprep.subr.mxu0 0.0
  %2370 = vmatpush1.xpose.msra.mxu0 0.0
  %2371 = vmatprep.mubr.f32.mxu0 0.0
  %2372 = vmatmul.mubr.f32.gmra.mrb[0].mxu0 %v10
  %v2373 = vpop.f32.mrb[0].mxu0
  %v2374 = vadd.f32 0.0, %v2373
  %v2375 = vpop.f32.mrb[0].mxu0
  %2376 = vdwg.mxu0
  %2377 = vmatprep.subr.mxu0 0.0
  %2378 = vmatpush1.xpose.msra.mxu0 %v2305
  %2379 = vmatprep.subr.mxu0 0.0
  %2380 = vmatpush1.xpose.msra.mxu0 %v2306
  %2381 = vmatprep.subr.mxu0 0.0
  %2382 = vmatpush1.xpose.msra.mxu0 0.0
  %2383 = vmatprep.subr.mxu0 0.0
  %2384 = vmatpush1.xpose.msra.mxu0 0.0
  %2385 = vmatprep.subr.mxu0 0.0
  %2386 = vmatpush1.xpose.msra.mxu0 0.0
  %2387 = vmatprep.subr.mxu0 0.0
  %2388 = vmatpush1.xpose.msra.mxu0 0.0
  %2389 = vmatprep.subr.mxu0 0.0
  %2390 = vmatpush1.xpose.msra.mxu0 0.0
  %2391 = vmatprep.subr.mxu0 0.0
  %2392 = vmatpush1.xpose.msra.mxu0 0.0
  %2393 = vmatprep.subr.mxu0 0.0
  %2394 = vmatpush1.xpose.msra.mxu0 0.0
  %2395 = vmatprep.subr.mxu0 0.0
  %2396 = vmatpush1.xpose.msra.mxu0 0.0
  %2397 = vmatprep.subr.mxu0 0.0
  %2398 = vmatpush1.xpose.msra.mxu0 0.0
  %2399 = vmatprep.subr.mxu0 0.0
  %2400 = vmatpush1.xpose.msra.mxu0 0.0
  %2401 = vmatprep.subr.mxu0 0.0
  %2402 = vmatpush1.xpose.msra.mxu0 0.0
  %2403 = vmatprep.subr.mxu0 0.0
  %2404 = vmatpush1.xpose.msra.mxu0 0.0
  %2405 = vmatprep.subr.mxu0 0.0
  %2406 = vmatpush1.xpose.msra.mxu0 0.0
  %2407 = vmatprep.subr.mxu0 0.0
  %2408 = vmatpush1.xpose.msra.mxu0 0.0
  %2409 = vmatprep.subr.mxu0 0.0
  %2410 = vmatpush1.xpose.msra.mxu0 0.0
  %2411 = vmatprep.subr.mxu0 0.0
  %2412 = vmatpush1.xpose.msra.mxu0 0.0
  %2413 = vmatprep.subr.mxu0 0.0
  %2414 = vmatpush1.xpose.msra.mxu0 0.0
  %2415 = vmatprep.subr.mxu0 0.0
  %2416 = vmatpush1.xpose.msra.mxu0 0.0
  %2417 = vmatprep.subr.mxu0 0.0
  %2418 = vmatpush1.xpose.msra.mxu0 0.0
  %2419 = vmatprep.subr.mxu0 0.0
  %2420 = vmatpush1.xpose.msra.mxu0 0.0
  %2421 = vmatprep.subr.mxu0 0.0
  %2422 = vmatpush1.xpose.msra.mxu0 0.0
  %2423 = vmatprep.subr.mxu0 0.0
  %2424 = vmatpush1.xpose.msra.mxu0 0.0
  %2425 = vmatprep.subr.mxu0 0.0
  %2426 = vmatpush1.xpose.msra.mxu0 0.0
  %2427 = vmatprep.subr.mxu0 0.0
  %2428 = vmatpush1.xpose.msra.mxu0 0.0
  %2429 = vmatprep.subr.mxu0 0.0
  %2430 = vmatpush1.xpose.msra.mxu0 0.0
  %2431 = vmatprep.subr.mxu0 0.0
  %2432 = vmatpush1.xpose.msra.mxu0 0.0
  %2433 = vmatprep.subr.mxu0 0.0
  %2434 = vmatpush1.xpose.msra.mxu0 0.0
  %2435 = vmatprep.subr.mxu0 0.0
  %2436 = vmatpush1.xpose.msra.mxu0 0.0
  %2437 = vmatprep.subr.mxu0 0.0
  %2438 = vmatpush1.xpose.msra.mxu0 0.0
  %2439 = vmatprep.subr.mxu0 0.0
  %2440 = vmatpush1.xpose.msra.mxu0 0.0
  %2441 = vmatprep.mubr.f32.mxu0 0.0
  %2442 = vmatmul.mubr.f32.gmra.mrb[0].mxu0 %v11
  %v2443 = vpop.f32.mrb[0].mxu0
  %v2444 = vadd.f32 0.0, %v2443
  %v2445 = vpop.f32.mrb[0].mxu0
  %2446 = vdwg.mxu0
  %v2447 = vsub.f32 %v2374, %v1332
  %v2448 = vsub.f32 %v2444, %v1333
  %2451 = vrot.lane.b32.xlu0 %v2447, 48
  %v2452 = vpop.permute.xlu0 %2451
  %2453 = vrot.lane.b32.xlu0 %v2448, 48
  %v2454 = vpop.permute.xlu0 %2453
  %vm2457 = vcmask 518528
  %2458 = vst.msk [vmem:[%s1] sm:$0x7] %vm2457, %v2452
  %2459 = vst.msk [vmem:[%s1 + $0x4] sm:$0x7] %vm2457, %v2454
  %v2460 = vsel %vm2295, 1e+30, %v2219
  %v2461 = vsel %vm2296, 1e+30, %v2220
  %v2462 = vsel %vm2297, 1e+30, %v2221
  %v2463 = vsel %vm2298, 1e+30, %v2222
  %2464 = vmin.xlane.f32.xlu0 %v2460
  %v2465 = vpop.xlane.xlu0 %2464
  %2466 = vmin.xlane.f32.xlu0 %v2461
  %v2467 = vpop.xlane.xlu0 %2466
  %2468 = vmin.xlane.f32.xlu0 %v2462
  %v2469 = vpop.xlane.xlu0 %2468
  %2470 = vmin.xlane.f32.xlu0 %v2463
  %v2471 = vpop.xlane.xlu0 %2470
  %vm2472 = vcmp.le.f32.partialorder %v2460, %v2465
  %vm2473 = vcmp.le.f32.partialorder %v2461, %v2467
  %vm2474 = vcmp.le.f32.partialorder %v2462, %v2469
  %vm2475 = vcmp.le.f32.partialorder %v2463, %v2471
  %v2476 = vsel %vm2472, %v13, 128
  %v2477 = vsel %vm2473, %v13, 128
  %v2478 = vsel %vm2474, %v13, 128
  %v2479 = vsel %vm2475, %v13, 128
  %v2480 = vand.u32 %v2476, 65535
  %v2481 = vshra.s32 %v2476, 16
  %v2482 = vcvt.s32.f32 %v2480
  %v2483 = vcvt.s32.f32 %v2481
  %2484 = vmin.xlane.f32.xlu0 %v2483
  %v2485 = vpop.xlane.xlu0 %2484
  %vm2486 = vcmp.eq.f32.partialorder %v2483, %v2485
  %v2487 = vsel %vm2486, %v2482, inf
  %2488 = vmin.xlane.f32.xlu0 %v2487
  %v2489 = vpop.xlane.xlu0 %2488
  %v2490 = vcvt.f32.s32 %v2489
  %v2491 = vcvt.f32.s32 %v2485
  %v2492 = vshll.u32 %v2491, 16
  %v2493 = vadd.s32 %v2492, %v2490
  %v2494 = vand.u32 %v2477, 65535
  %v2495 = vshra.s32 %v2477, 16
  %v2496 = vcvt.s32.f32 %v2494
  %v2497 = vcvt.s32.f32 %v2495
  %2498 = vmin.xlane.f32.xlu0 %v2497
  %v2499 = vpop.xlane.xlu0 %2498
  %vm2500 = vcmp.eq.f32.partialorder %v2497, %v2499
  %v2501 = vsel %vm2500, %v2496, inf
  %2502 = vmin.xlane.f32.xlu0 %v2501
  %v2503 = vpop.xlane.xlu0 %2502
  %v2504 = vcvt.f32.s32 %v2503
  %v2505 = vcvt.f32.s32 %v2499
  %v2506 = vshll.u32 %v2505, 16
  %v2507 = vadd.s32 %v2506, %v2504
  %v2508 = vand.u32 %v2478, 65535
  %v2509 = vshra.s32 %v2478, 16
  %v2510 = vcvt.s32.f32 %v2508
  %v2511 = vcvt.s32.f32 %v2509
  %2512 = vmin.xlane.f32.xlu0 %v2511
  %v2513 = vpop.xlane.xlu0 %2512
  %vm2514 = vcmp.eq.f32.partialorder %v2511, %v2513
  %v2515 = vsel %vm2514, %v2510, inf
  %2516 = vmin.xlane.f32.xlu0 %v2515
  %v2517 = vpop.xlane.xlu0 %2516
  %v2518 = vcvt.f32.s32 %v2517
  %v2519 = vcvt.f32.s32 %v2513
  %v2520 = vshll.u32 %v2519, 16
  %v2521 = vadd.s32 %v2520, %v2518
  %v2522 = vand.u32 %v2479, 65535
  %v2523 = vshra.s32 %v2479, 16
  %v2524 = vcvt.s32.f32 %v2522
  %v2525 = vcvt.s32.f32 %v2523
  %2526 = vmin.xlane.f32.xlu0 %v2525
  %v2527 = vpop.xlane.xlu0 %2526
  %vm2528 = vcmp.eq.f32.partialorder %v2525, %v2527
  %v2529 = vsel %vm2528, %v2524, inf
  %2530 = vmin.xlane.f32.xlu0 %v2529
  %v2531 = vpop.xlane.xlu0 %2530
  %v2532 = vcvt.f32.s32 %v2531
  %v2533 = vcvt.f32.s32 %v2527
  %v2534 = vshll.u32 %v2533, 16
  %v2535 = vadd.s32 %v2534, %v2532
  %vm2536 = vcmp.eq.s32.totalorder %v13, %v2493
  %vm2537 = vcmp.eq.s32.totalorder %v13, %v2507
  %vm2538 = vcmp.eq.s32.totalorder %v13, %v2521
  %vm2539 = vcmp.eq.s32.totalorder %v13, %v2535
  %v2540 = vsel %vm2536, 1, 0
  %v2541 = vsel %vm2537, 1, 0
  %v2542 = vsel %vm2538, 1, 0
  %v2543 = vsel %vm2539, 1, 0
  %v2544 = vcvt.s32.f32 %v2540
  %v2545 = vcvt.s32.f32 %v2541
  %v2546 = vcvt.s32.f32 %v2542
  %v2547 = vcvt.s32.f32 %v2543
  %2548 = vmatprep.subr.mxu0 0.0
  %2549 = vmatpush1.xpose.msra.mxu0 %v2544
  %2550 = vmatprep.subr.mxu0 0.0
  %2551 = vmatpush1.xpose.msra.mxu0 %v2545
  %2552 = vmatprep.subr.mxu0 0.0
  %2553 = vmatpush1.xpose.msra.mxu0 0.0
  %2554 = vmatprep.subr.mxu0 0.0
  %2555 = vmatpush1.xpose.msra.mxu0 0.0
  %2556 = vmatprep.subr.mxu0 0.0
  %2557 = vmatpush1.xpose.msra.mxu0 0.0
  %2558 = vmatprep.subr.mxu0 0.0
  %2559 = vmatpush1.xpose.msra.mxu0 0.0
  %2560 = vmatprep.subr.mxu0 0.0
  %2561 = vmatpush1.xpose.msra.mxu0 0.0
  %2562 = vmatprep.subr.mxu0 0.0
  %2563 = vmatpush1.xpose.msra.mxu0 0.0
  %2564 = vmatprep.subr.mxu0 0.0
  %2565 = vmatpush1.xpose.msra.mxu0 0.0
  %2566 = vmatprep.subr.mxu0 0.0
  %2567 = vmatpush1.xpose.msra.mxu0 0.0
  %2568 = vmatprep.subr.mxu0 0.0
  %2569 = vmatpush1.xpose.msra.mxu0 0.0
  %2570 = vmatprep.subr.mxu0 0.0
  %2571 = vmatpush1.xpose.msra.mxu0 0.0
  %2572 = vmatprep.subr.mxu0 0.0
  %2573 = vmatpush1.xpose.msra.mxu0 0.0
  %2574 = vmatprep.subr.mxu0 0.0
  %2575 = vmatpush1.xpose.msra.mxu0 0.0
  %2576 = vmatprep.subr.mxu0 0.0
  %2577 = vmatpush1.xpose.msra.mxu0 0.0
  %2578 = vmatprep.subr.mxu0 0.0
  %2579 = vmatpush1.xpose.msra.mxu0 0.0
  %2580 = vmatprep.subr.mxu0 0.0
  %2581 = vmatpush1.xpose.msra.mxu0 0.0
  %2582 = vmatprep.subr.mxu0 0.0
  %2583 = vmatpush1.xpose.msra.mxu0 0.0
  %2584 = vmatprep.subr.mxu0 0.0
  %2585 = vmatpush1.xpose.msra.mxu0 0.0
  %2586 = vmatprep.subr.mxu0 0.0
  %2587 = vmatpush1.xpose.msra.mxu0 0.0
  %2588 = vmatprep.subr.mxu0 0.0
  %2589 = vmatpush1.xpose.msra.mxu0 0.0
  %2590 = vmatprep.subr.mxu0 0.0
  %2591 = vmatpush1.xpose.msra.mxu0 0.0
  %2592 = vmatprep.subr.mxu0 0.0
  %2593 = vmatpush1.xpose.msra.mxu0 0.0
  %2594 = vmatprep.subr.mxu0 0.0
  %2595 = vmatpush1.xpose.msra.mxu0 0.0
  %2596 = vmatprep.subr.mxu0 0.0
  %2597 = vmatpush1.xpose.msra.mxu0 0.0
  %2598 = vmatprep.subr.mxu0 0.0
  %2599 = vmatpush1.xpose.msra.mxu0 0.0
  %2600 = vmatprep.subr.mxu0 0.0
  %2601 = vmatpush1.xpose.msra.mxu0 0.0
  %2602 = vmatprep.subr.mxu0 0.0
  %2603 = vmatpush1.xpose.msra.mxu0 0.0
  %2604 = vmatprep.subr.mxu0 0.0
  %2605 = vmatpush1.xpose.msra.mxu0 0.0
  %2606 = vmatprep.subr.mxu0 0.0
  %2607 = vmatpush1.xpose.msra.mxu0 0.0
  %2608 = vmatprep.subr.mxu0 0.0
  %2609 = vmatpush1.xpose.msra.mxu0 0.0
  %2610 = vmatprep.subr.mxu0 0.0
  %2611 = vmatpush1.xpose.msra.mxu0 0.0
  %2612 = vmatprep.mubr.f32.mxu0 0.0
  %2613 = vmatmul.mubr.f32.gmra.mrb[0].mxu0 %v10
  %v2614 = vpop.f32.mrb[0].mxu0
  %v2615 = vadd.f32 0.0, %v2614
  %v2616 = vpop.f32.mrb[0].mxu0
  %2617 = vdwg.mxu0
  %2618 = vmatprep.subr.mxu0 0.0
  %2619 = vmatpush1.xpose.msra.mxu0 %v2546
  %2620 = vmatprep.subr.mxu0 0.0
  %2621 = vmatpush1.xpose.msra.mxu0 %v2547
  %2622 = vmatprep.subr.mxu0 0.0
  %2623 = vmatpush1.xpose.msra.mxu0 0.0
  %2624 = vmatprep.subr.mxu0 0.0
  %2625 = vmatpush1.xpose.msra.mxu0 0.0
  %2626 = vmatprep.subr.mxu0 0.0
  %2627 = vmatpush1.xpose.msra.mxu0 0.0
  %2628 = vmatprep.subr.mxu0 0.0
  %2629 = vmatpush1.xpose.msra.mxu0 0.0
  %2630 = vmatprep.subr.mxu0 0.0
  %2631 = vmatpush1.xpose.msra.mxu0 0.0
  %2632 = vmatprep.subr.mxu0 0.0
  %2633 = vmatpush1.xpose.msra.mxu0 0.0
  %2634 = vmatprep.subr.mxu0 0.0
  %2635 = vmatpush1.xpose.msra.mxu0 0.0
  %2636 = vmatprep.subr.mxu0 0.0
  %2637 = vmatpush1.xpose.msra.mxu0 0.0
  %2638 = vmatprep.subr.mxu0 0.0
  %2639 = vmatpush1.xpose.msra.mxu0 0.0
  %2640 = vmatprep.subr.mxu0 0.0
  %2641 = vmatpush1.xpose.msra.mxu0 0.0
  %2642 = vmatprep.subr.mxu0 0.0
  %2643 = vmatpush1.xpose.msra.mxu0 0.0
  %2644 = vmatprep.subr.mxu0 0.0
  %2645 = vmatpush1.xpose.msra.mxu0 0.0
  %2646 = vmatprep.subr.mxu0 0.0
  %2647 = vmatpush1.xpose.msra.mxu0 0.0
  %2648 = vmatprep.subr.mxu0 0.0
  %2649 = vmatpush1.xpose.msra.mxu0 0.0
  %2650 = vmatprep.subr.mxu0 0.0
  %2651 = vmatpush1.xpose.msra.mxu0 0.0
  %2652 = vmatprep.subr.mxu0 0.0
  %2653 = vmatpush1.xpose.msra.mxu0 0.0
  %2654 = vmatprep.subr.mxu0 0.0
  %2655 = vmatpush1.xpose.msra.mxu0 0.0
  %2656 = vmatprep.subr.mxu0 0.0
  %2657 = vmatpush1.xpose.msra.mxu0 0.0
  %2658 = vmatprep.subr.mxu0 0.0
  %2659 = vmatpush1.xpose.msra.mxu0 0.0
  %2660 = vmatprep.subr.mxu0 0.0
  %2661 = vmatpush1.xpose.msra.mxu0 0.0
  %2662 = vmatprep.subr.mxu0 0.0
  %2663 = vmatpush1.xpose.msra.mxu0 0.0
  %2664 = vmatprep.subr.mxu0 0.0
  %2665 = vmatpush1.xpose.msra.mxu0 0.0
  %2666 = vmatprep.subr.mxu0 0.0
  %2667 = vmatpush1.xpose.msra.mxu0 0.0
  %2668 = vmatprep.subr.mxu0 0.0
  %2669 = vmatpush1.xpose.msra.mxu0 0.0
  %2670 = vmatprep.subr.mxu0 0.0
  %2671 = vmatpush1.xpose.msra.mxu0 0.0
  %2672 = vmatprep.subr.mxu0 0.0
  %2673 = vmatpush1.xpose.msra.mxu0 0.0
  %2674 = vmatprep.subr.mxu0 0.0
  %2675 = vmatpush1.xpose.msra.mxu0 0.0
  %2676 = vmatprep.subr.mxu0 0.0
  %2677 = vmatpush1.xpose.msra.mxu0 0.0
  %2678 = vmatprep.subr.mxu0 0.0
  %2679 = vmatpush1.xpose.msra.mxu0 0.0
  %2680 = vmatprep.subr.mxu0 0.0
  %2681 = vmatpush1.xpose.msra.mxu0 0.0
  %2682 = vmatprep.mubr.f32.mxu0 0.0
  %2683 = vmatmul.mubr.f32.gmra.mrb[0].mxu0 %v11
  %v2684 = vpop.f32.mrb[0].mxu0
  %v2685 = vadd.f32 0.0, %v2684
  %v2686 = vpop.f32.mrb[0].mxu0
  %2687 = vdwg.mxu0
  %v2688 = vsub.f32 %v2615, %v1332
  %v2689 = vsub.f32 %v2685, %v1333
  %2692 = vrot.lane.b32.xlu0 %v2688, 64
  %v2693 = vpop.permute.xlu0 %2692
  %2694 = vrot.lane.b32.xlu0 %v2689, 64
  %v2695 = vpop.permute.xlu0 %2694
  %vm2698 = vcmask 649728
  %2699 = vst.msk [vmem:[%s1] sm:$0x7] %vm2698, %v2693
  %2700 = vst.msk [vmem:[%s1 + $0x4] sm:$0x7] %vm2698, %v2695
  %v2701 = vsel %vm2536, 1e+30, %v2460
  %v2702 = vsel %vm2537, 1e+30, %v2461
  %v2703 = vsel %vm2538, 1e+30, %v2462
  %v2704 = vsel %vm2539, 1e+30, %v2463
  %2705 = vmin.xlane.f32.xlu0 %v2701
  %v2706 = vpop.xlane.xlu0 %2705
  %2707 = vmin.xlane.f32.xlu0 %v2702
  %v2708 = vpop.xlane.xlu0 %2707
  %2709 = vmin.xlane.f32.xlu0 %v2703
  %v2710 = vpop.xlane.xlu0 %2709
  %2711 = vmin.xlane.f32.xlu0 %v2704
  %v2712 = vpop.xlane.xlu0 %2711
  %vm2713 = vcmp.le.f32.partialorder %v2701, %v2706
  %vm2714 = vcmp.le.f32.partialorder %v2702, %v2708
  %vm2715 = vcmp.le.f32.partialorder %v2703, %v2710
  %vm2716 = vcmp.le.f32.partialorder %v2704, %v2712
  %v2717 = vsel %vm2713, %v13, 128
  %v2718 = vsel %vm2714, %v13, 128
  %v2719 = vsel %vm2715, %v13, 128
  %v2720 = vsel %vm2716, %v13, 128
  %v2721 = vand.u32 %v2717, 65535
  %v2722 = vshra.s32 %v2717, 16
  %v2723 = vcvt.s32.f32 %v2721
  %v2724 = vcvt.s32.f32 %v2722
  %2725 = vmin.xlane.f32.xlu0 %v2724
  %v2726 = vpop.xlane.xlu0 %2725
  %vm2727 = vcmp.eq.f32.partialorder %v2724, %v2726
  %v2728 = vsel %vm2727, %v2723, inf
  %2729 = vmin.xlane.f32.xlu0 %v2728
  %v2730 = vpop.xlane.xlu0 %2729
  %v2731 = vcvt.f32.s32 %v2730
  %v2732 = vcvt.f32.s32 %v2726
  %v2733 = vshll.u32 %v2732, 16
  %v2734 = vadd.s32 %v2733, %v2731
  %v2735 = vand.u32 %v2718, 65535
  %v2736 = vshra.s32 %v2718, 16
  %v2737 = vcvt.s32.f32 %v2735
  %v2738 = vcvt.s32.f32 %v2736
  %2739 = vmin.xlane.f32.xlu0 %v2738
  %v2740 = vpop.xlane.xlu0 %2739
  %vm2741 = vcmp.eq.f32.partialorder %v2738, %v2740
  %v2742 = vsel %vm2741, %v2737, inf
  %2743 = vmin.xlane.f32.xlu0 %v2742
  %v2744 = vpop.xlane.xlu0 %2743
  %v2745 = vcvt.f32.s32 %v2744
  %v2746 = vcvt.f32.s32 %v2740
  %v2747 = vshll.u32 %v2746, 16
  %v2748 = vadd.s32 %v2747, %v2745
  %v2749 = vand.u32 %v2719, 65535
  %v2750 = vshra.s32 %v2719, 16
  %v2751 = vcvt.s32.f32 %v2749
  %v2752 = vcvt.s32.f32 %v2750
  %2753 = vmin.xlane.f32.xlu0 %v2752
  %v2754 = vpop.xlane.xlu0 %2753
  %vm2755 = vcmp.eq.f32.partialorder %v2752, %v2754
  %v2756 = vsel %vm2755, %v2751, inf
  %2757 = vmin.xlane.f32.xlu0 %v2756
  %v2758 = vpop.xlane.xlu0 %2757
  %v2759 = vcvt.f32.s32 %v2758
  %v2760 = vcvt.f32.s32 %v2754
  %v2761 = vshll.u32 %v2760, 16
  %v2762 = vadd.s32 %v2761, %v2759
  %v2763 = vand.u32 %v2720, 65535
  %v2764 = vshra.s32 %v2720, 16
  %v2765 = vcvt.s32.f32 %v2763
  %v2766 = vcvt.s32.f32 %v2764
  %2767 = vmin.xlane.f32.xlu0 %v2766
  %v2768 = vpop.xlane.xlu0 %2767
  %vm2769 = vcmp.eq.f32.partialorder %v2766, %v2768
  %v2770 = vsel %vm2769, %v2765, inf
  %2771 = vmin.xlane.f32.xlu0 %v2770
  %v2772 = vpop.xlane.xlu0 %2771
  %v2773 = vcvt.f32.s32 %v2772
  %v2774 = vcvt.f32.s32 %v2768
  %v2775 = vshll.u32 %v2774, 16
  %v2776 = vadd.s32 %v2775, %v2773
  %vm2777 = vcmp.eq.s32.totalorder %v13, %v2734
  %vm2778 = vcmp.eq.s32.totalorder %v13, %v2748
  %vm2779 = vcmp.eq.s32.totalorder %v13, %v2762
  %vm2780 = vcmp.eq.s32.totalorder %v13, %v2776
  %v2781 = vsel %vm2777, 1, 0
  %v2782 = vsel %vm2778, 1, 0
  %v2783 = vsel %vm2779, 1, 0
  %v2784 = vsel %vm2780, 1, 0
  %v2785 = vcvt.s32.f32 %v2781
  %v2786 = vcvt.s32.f32 %v2782
  %v2787 = vcvt.s32.f32 %v2783
  %v2788 = vcvt.s32.f32 %v2784
  %2789 = vmatprep.subr.mxu0 0.0
  %2790 = vmatpush1.xpose.msra.mxu0 %v2785
  %2791 = vmatprep.subr.mxu0 0.0
  %2792 = vmatpush1.xpose.msra.mxu0 %v2786
  %2793 = vmatprep.subr.mxu0 0.0
  %2794 = vmatpush1.xpose.msra.mxu0 0.0
  %2795 = vmatprep.subr.mxu0 0.0
  %2796 = vmatpush1.xpose.msra.mxu0 0.0
  %2797 = vmatprep.subr.mxu0 0.0
  %2798 = vmatpush1.xpose.msra.mxu0 0.0
  %2799 = vmatprep.subr.mxu0 0.0
  %2800 = vmatpush1.xpose.msra.mxu0 0.0
  %2801 = vmatprep.subr.mxu0 0.0
  %2802 = vmatpush1.xpose.msra.mxu0 0.0
  %2803 = vmatprep.subr.mxu0 0.0
  %2804 = vmatpush1.xpose.msra.mxu0 0.0
  %2805 = vmatprep.subr.mxu0 0.0
  %2806 = vmatpush1.xpose.msra.mxu0 0.0
  %2807 = vmatprep.subr.mxu0 0.0
  %2808 = vmatpush1.xpose.msra.mxu0 0.0
  %2809 = vmatprep.subr.mxu0 0.0
  %2810 = vmatpush1.xpose.msra.mxu0 0.0
  %2811 = vmatprep.subr.mxu0 0.0
  %2812 = vmatpush1.xpose.msra.mxu0 0.0
  %2813 = vmatprep.subr.mxu0 0.0
  %2814 = vmatpush1.xpose.msra.mxu0 0.0
  %2815 = vmatprep.subr.mxu0 0.0
  %2816 = vmatpush1.xpose.msra.mxu0 0.0
  %2817 = vmatprep.subr.mxu0 0.0
  %2818 = vmatpush1.xpose.msra.mxu0 0.0
  %2819 = vmatprep.subr.mxu0 0.0
  %2820 = vmatpush1.xpose.msra.mxu0 0.0
  %2821 = vmatprep.subr.mxu0 0.0
  %2822 = vmatpush1.xpose.msra.mxu0 0.0
  %2823 = vmatprep.subr.mxu0 0.0
  %2824 = vmatpush1.xpose.msra.mxu0 0.0
  %2825 = vmatprep.subr.mxu0 0.0
  %2826 = vmatpush1.xpose.msra.mxu0 0.0
  %2827 = vmatprep.subr.mxu0 0.0
  %2828 = vmatpush1.xpose.msra.mxu0 0.0
  %2829 = vmatprep.subr.mxu0 0.0
  %2830 = vmatpush1.xpose.msra.mxu0 0.0
  %2831 = vmatprep.subr.mxu0 0.0
  %2832 = vmatpush1.xpose.msra.mxu0 0.0
  %2833 = vmatprep.subr.mxu0 0.0
  %2834 = vmatpush1.xpose.msra.mxu0 0.0
  %2835 = vmatprep.subr.mxu0 0.0
  %2836 = vmatpush1.xpose.msra.mxu0 0.0
  %2837 = vmatprep.subr.mxu0 0.0
  %2838 = vmatpush1.xpose.msra.mxu0 0.0
  %2839 = vmatprep.subr.mxu0 0.0
  %2840 = vmatpush1.xpose.msra.mxu0 0.0
  %2841 = vmatprep.subr.mxu0 0.0
  %2842 = vmatpush1.xpose.msra.mxu0 0.0
  %2843 = vmatprep.subr.mxu0 0.0
  %2844 = vmatpush1.xpose.msra.mxu0 0.0
  %2845 = vmatprep.subr.mxu0 0.0
  %2846 = vmatpush1.xpose.msra.mxu0 0.0
  %2847 = vmatprep.subr.mxu0 0.0
  %2848 = vmatpush1.xpose.msra.mxu0 0.0
  %2849 = vmatprep.subr.mxu0 0.0
  %2850 = vmatpush1.xpose.msra.mxu0 0.0
  %2851 = vmatprep.subr.mxu0 0.0
  %2852 = vmatpush1.xpose.msra.mxu0 0.0
  %2853 = vmatprep.mubr.f32.mxu0 0.0
  %2854 = vmatmul.mubr.f32.gmra.mrb[0].mxu0 %v10
  %v2855 = vpop.f32.mrb[0].mxu0
  %v2856 = vadd.f32 0.0, %v2855
  %v2857 = vpop.f32.mrb[0].mxu0
  %2858 = vdwg.mxu0
  %2859 = vmatprep.subr.mxu0 0.0
  %2860 = vmatpush1.xpose.msra.mxu0 %v2787
  %2861 = vmatprep.subr.mxu0 0.0
  %2862 = vmatpush1.xpose.msra.mxu0 %v2788
  %2863 = vmatprep.subr.mxu0 0.0
  %2864 = vmatpush1.xpose.msra.mxu0 0.0
  %2865 = vmatprep.subr.mxu0 0.0
  %2866 = vmatpush1.xpose.msra.mxu0 0.0
  %2867 = vmatprep.subr.mxu0 0.0
  %2868 = vmatpush1.xpose.msra.mxu0 0.0
  %2869 = vmatprep.subr.mxu0 0.0
  %2870 = vmatpush1.xpose.msra.mxu0 0.0
  %2871 = vmatprep.subr.mxu0 0.0
  %2872 = vmatpush1.xpose.msra.mxu0 0.0
  %2873 = vmatprep.subr.mxu0 0.0
  %2874 = vmatpush1.xpose.msra.mxu0 0.0
  %2875 = vmatprep.subr.mxu0 0.0
  %2876 = vmatpush1.xpose.msra.mxu0 0.0
  %2877 = vmatprep.subr.mxu0 0.0
  %2878 = vmatpush1.xpose.msra.mxu0 0.0
  %2879 = vmatprep.subr.mxu0 0.0
  %2880 = vmatpush1.xpose.msra.mxu0 0.0
  %2881 = vmatprep.subr.mxu0 0.0
  %2882 = vmatpush1.xpose.msra.mxu0 0.0
  %2883 = vmatprep.subr.mxu0 0.0
  %2884 = vmatpush1.xpose.msra.mxu0 0.0
  %2885 = vmatprep.subr.mxu0 0.0
  %2886 = vmatpush1.xpose.msra.mxu0 0.0
  %2887 = vmatprep.subr.mxu0 0.0
  %2888 = vmatpush1.xpose.msra.mxu0 0.0
  %2889 = vmatprep.subr.mxu0 0.0
  %2890 = vmatpush1.xpose.msra.mxu0 0.0
  %2891 = vmatprep.subr.mxu0 0.0
  %2892 = vmatpush1.xpose.msra.mxu0 0.0
  %2893 = vmatprep.subr.mxu0 0.0
  %2894 = vmatpush1.xpose.msra.mxu0 0.0
  %2895 = vmatprep.subr.mxu0 0.0
  %2896 = vmatpush1.xpose.msra.mxu0 0.0
  %2897 = vmatprep.subr.mxu0 0.0
  %2898 = vmatpush1.xpose.msra.mxu0 0.0
  %2899 = vmatprep.subr.mxu0 0.0
  %2900 = vmatpush1.xpose.msra.mxu0 0.0
  %2901 = vmatprep.subr.mxu0 0.0
  %2902 = vmatpush1.xpose.msra.mxu0 0.0
  %2903 = vmatprep.subr.mxu0 0.0
  %2904 = vmatpush1.xpose.msra.mxu0 0.0
  %2905 = vmatprep.subr.mxu0 0.0
  %2906 = vmatpush1.xpose.msra.mxu0 0.0
  %2907 = vmatprep.subr.mxu0 0.0
  %2908 = vmatpush1.xpose.msra.mxu0 0.0
  %2909 = vmatprep.subr.mxu0 0.0
  %2910 = vmatpush1.xpose.msra.mxu0 0.0
  %2911 = vmatprep.subr.mxu0 0.0
  %2912 = vmatpush1.xpose.msra.mxu0 0.0
  %2913 = vmatprep.subr.mxu0 0.0
  %2914 = vmatpush1.xpose.msra.mxu0 0.0
  %2915 = vmatprep.subr.mxu0 0.0
  %2916 = vmatpush1.xpose.msra.mxu0 0.0
  %2917 = vmatprep.subr.mxu0 0.0
  %2918 = vmatpush1.xpose.msra.mxu0 0.0
  %2919 = vmatprep.subr.mxu0 0.0
  %2920 = vmatpush1.xpose.msra.mxu0 0.0
  %2921 = vmatprep.subr.mxu0 0.0
  %2922 = vmatpush1.xpose.msra.mxu0 0.0
  %2923 = vmatprep.mubr.f32.mxu0 0.0
  %2924 = vmatmul.mubr.f32.gmra.mrb[0].mxu0 %v11
  %v2925 = vpop.f32.mrb[0].mxu0
  %v2926 = vadd.f32 0.0, %v2925
  %v2927 = vpop.f32.mrb[0].mxu0
  %2928 = vdwg.mxu0
  %v2929 = vsub.f32 %v2856, %v1332
  %v2930 = vsub.f32 %v2926, %v1333
  %2933 = vrot.lane.b32.xlu0 %v2929, 80
  %v2934 = vpop.permute.xlu0 %2933
  %2935 = vrot.lane.b32.xlu0 %v2930, 80
  %v2936 = vpop.permute.xlu0 %2935
  %vm2939 = vcmask 780928
  %2940 = vst.msk [vmem:[%s1] sm:$0x7] %vm2939, %v2934
  %2941 = vst.msk [vmem:[%s1 + $0x4] sm:$0x7] %vm2939, %v2936
  %v2942 = vsel %vm2777, 1e+30, %v2701
  %v2943 = vsel %vm2778, 1e+30, %v2702
  %v2944 = vsel %vm2779, 1e+30, %v2703
  %v2945 = vsel %vm2780, 1e+30, %v2704
  %2946 = vmin.xlane.f32.xlu0 %v2942
  %v2947 = vpop.xlane.xlu0 %2946
  %2948 = vmin.xlane.f32.xlu0 %v2943
  %v2949 = vpop.xlane.xlu0 %2948
  %2950 = vmin.xlane.f32.xlu0 %v2944
  %v2951 = vpop.xlane.xlu0 %2950
  %2952 = vmin.xlane.f32.xlu0 %v2945
  %v2953 = vpop.xlane.xlu0 %2952
  %vm2954 = vcmp.le.f32.partialorder %v2942, %v2947
  %vm2955 = vcmp.le.f32.partialorder %v2943, %v2949
  %vm2956 = vcmp.le.f32.partialorder %v2944, %v2951
  %vm2957 = vcmp.le.f32.partialorder %v2945, %v2953
  %v2958 = vsel %vm2954, %v13, 128
  %v2959 = vsel %vm2955, %v13, 128
  %v2960 = vsel %vm2956, %v13, 128
  %v2961 = vsel %vm2957, %v13, 128
  %v2962 = vand.u32 %v2958, 65535
  %v2963 = vshra.s32 %v2958, 16
  %v2964 = vcvt.s32.f32 %v2962
  %v2965 = vcvt.s32.f32 %v2963
  %2966 = vmin.xlane.f32.xlu0 %v2965
  %v2967 = vpop.xlane.xlu0 %2966
  %vm2968 = vcmp.eq.f32.partialorder %v2965, %v2967
  %v2969 = vsel %vm2968, %v2964, inf
  %2970 = vmin.xlane.f32.xlu0 %v2969
  %v2971 = vpop.xlane.xlu0 %2970
  %v2972 = vcvt.f32.s32 %v2971
  %v2973 = vcvt.f32.s32 %v2967
  %v2974 = vshll.u32 %v2973, 16
  %v2975 = vadd.s32 %v2974, %v2972
  %v2976 = vand.u32 %v2959, 65535
  %v2977 = vshra.s32 %v2959, 16
  %v2978 = vcvt.s32.f32 %v2976
  %v2979 = vcvt.s32.f32 %v2977
  %2980 = vmin.xlane.f32.xlu0 %v2979
  %v2981 = vpop.xlane.xlu0 %2980
  %vm2982 = vcmp.eq.f32.partialorder %v2979, %v2981
  %v2983 = vsel %vm2982, %v2978, inf
  %2984 = vmin.xlane.f32.xlu0 %v2983
  %v2985 = vpop.xlane.xlu0 %2984
  %v2986 = vcvt.f32.s32 %v2985
  %v2987 = vcvt.f32.s32 %v2981
  %v2988 = vshll.u32 %v2987, 16
  %v2989 = vadd.s32 %v2988, %v2986
  %v2990 = vand.u32 %v2960, 65535
  %v2991 = vshra.s32 %v2960, 16
  %v2992 = vcvt.s32.f32 %v2990
  %v2993 = vcvt.s32.f32 %v2991
  %2994 = vmin.xlane.f32.xlu0 %v2993
  %v2995 = vpop.xlane.xlu0 %2994
  %vm2996 = vcmp.eq.f32.partialorder %v2993, %v2995
  %v2997 = vsel %vm2996, %v2992, inf
  %2998 = vmin.xlane.f32.xlu0 %v2997
  %v2999 = vpop.xlane.xlu0 %2998
  %v3000 = vcvt.f32.s32 %v2999
  %v3001 = vcvt.f32.s32 %v2995
  %v3002 = vshll.u32 %v3001, 16
  %v3003 = vadd.s32 %v3002, %v3000
  %v3004 = vand.u32 %v2961, 65535
  %v3005 = vshra.s32 %v2961, 16
  %v3006 = vcvt.s32.f32 %v3004
  %v3007 = vcvt.s32.f32 %v3005
  %3008 = vmin.xlane.f32.xlu0 %v3007
  %v3009 = vpop.xlane.xlu0 %3008
  %vm3010 = vcmp.eq.f32.partialorder %v3007, %v3009
  %v3011 = vsel %vm3010, %v3006, inf
  %3012 = vmin.xlane.f32.xlu0 %v3011
  %v3013 = vpop.xlane.xlu0 %3012
  %v3014 = vcvt.f32.s32 %v3013
  %v3015 = vcvt.f32.s32 %v3009
  %v3016 = vshll.u32 %v3015, 16
  %v3017 = vadd.s32 %v3016, %v3014
  %vm3018 = vcmp.eq.s32.totalorder %v13, %v2975
  %vm3019 = vcmp.eq.s32.totalorder %v13, %v2989
  %vm3020 = vcmp.eq.s32.totalorder %v13, %v3003
  %vm3021 = vcmp.eq.s32.totalorder %v13, %v3017
  %v3022 = vsel %vm3018, 1, 0
  %v3023 = vsel %vm3019, 1, 0
  %v3024 = vsel %vm3020, 1, 0
  %v3025 = vsel %vm3021, 1, 0
  %v3026 = vcvt.s32.f32 %v3022
  %v3027 = vcvt.s32.f32 %v3023
  %v3028 = vcvt.s32.f32 %v3024
  %v3029 = vcvt.s32.f32 %v3025
  %3030 = vmatprep.subr.mxu0 0.0
  %3031 = vmatpush1.xpose.msra.mxu0 %v3026
  %3032 = vmatprep.subr.mxu0 0.0
  %3033 = vmatpush1.xpose.msra.mxu0 %v3027
  %3034 = vmatprep.subr.mxu0 0.0
  %3035 = vmatpush1.xpose.msra.mxu0 0.0
  %3036 = vmatprep.subr.mxu0 0.0
  %3037 = vmatpush1.xpose.msra.mxu0 0.0
  %3038 = vmatprep.subr.mxu0 0.0
  %3039 = vmatpush1.xpose.msra.mxu0 0.0
  %3040 = vmatprep.subr.mxu0 0.0
  %3041 = vmatpush1.xpose.msra.mxu0 0.0
  %3042 = vmatprep.subr.mxu0 0.0
  %3043 = vmatpush1.xpose.msra.mxu0 0.0
  %3044 = vmatprep.subr.mxu0 0.0
  %3045 = vmatpush1.xpose.msra.mxu0 0.0
  %3046 = vmatprep.subr.mxu0 0.0
  %3047 = vmatpush1.xpose.msra.mxu0 0.0
  %3048 = vmatprep.subr.mxu0 0.0
  %3049 = vmatpush1.xpose.msra.mxu0 0.0
  %3050 = vmatprep.subr.mxu0 0.0
  %3051 = vmatpush1.xpose.msra.mxu0 0.0
  %3052 = vmatprep.subr.mxu0 0.0
  %3053 = vmatpush1.xpose.msra.mxu0 0.0
  %3054 = vmatprep.subr.mxu0 0.0
  %3055 = vmatpush1.xpose.msra.mxu0 0.0
  %3056 = vmatprep.subr.mxu0 0.0
  %3057 = vmatpush1.xpose.msra.mxu0 0.0
  %3058 = vmatprep.subr.mxu0 0.0
  %3059 = vmatpush1.xpose.msra.mxu0 0.0
  %3060 = vmatprep.subr.mxu0 0.0
  %3061 = vmatpush1.xpose.msra.mxu0 0.0
  %3062 = vmatprep.subr.mxu0 0.0
  %3063 = vmatpush1.xpose.msra.mxu0 0.0
  %3064 = vmatprep.subr.mxu0 0.0
  %3065 = vmatpush1.xpose.msra.mxu0 0.0
  %3066 = vmatprep.subr.mxu0 0.0
  %3067 = vmatpush1.xpose.msra.mxu0 0.0
  %3068 = vmatprep.subr.mxu0 0.0
  %3069 = vmatpush1.xpose.msra.mxu0 0.0
  %3070 = vmatprep.subr.mxu0 0.0
  %3071 = vmatpush1.xpose.msra.mxu0 0.0
  %3072 = vmatprep.subr.mxu0 0.0
  %3073 = vmatpush1.xpose.msra.mxu0 0.0
  %3074 = vmatprep.subr.mxu0 0.0
  %3075 = vmatpush1.xpose.msra.mxu0 0.0
  %3076 = vmatprep.subr.mxu0 0.0
  %3077 = vmatpush1.xpose.msra.mxu0 0.0
  %3078 = vmatprep.subr.mxu0 0.0
  %3079 = vmatpush1.xpose.msra.mxu0 0.0
  %3080 = vmatprep.subr.mxu0 0.0
  %3081 = vmatpush1.xpose.msra.mxu0 0.0
  %3082 = vmatprep.subr.mxu0 0.0
  %3083 = vmatpush1.xpose.msra.mxu0 0.0
  %3084 = vmatprep.subr.mxu0 0.0
  %3085 = vmatpush1.xpose.msra.mxu0 0.0
  %3086 = vmatprep.subr.mxu0 0.0
  %3087 = vmatpush1.xpose.msra.mxu0 0.0
  %3088 = vmatprep.subr.mxu0 0.0
  %3089 = vmatpush1.xpose.msra.mxu0 0.0
  %3090 = vmatprep.subr.mxu0 0.0
  %3091 = vmatpush1.xpose.msra.mxu0 0.0
  %3092 = vmatprep.subr.mxu0 0.0
  %3093 = vmatpush1.xpose.msra.mxu0 0.0
  %3094 = vmatprep.mubr.f32.mxu0 0.0
  %3095 = vmatmul.mubr.f32.gmra.mrb[0].mxu0 %v10
  %v3096 = vpop.f32.mrb[0].mxu0
  %v3097 = vadd.f32 0.0, %v3096
  %v3098 = vpop.f32.mrb[0].mxu0
  %3099 = vdwg.mxu0
  %3100 = vmatprep.subr.mxu0 0.0
  %3101 = vmatpush1.xpose.msra.mxu0 %v3028
  %3102 = vmatprep.subr.mxu0 0.0
  %3103 = vmatpush1.xpose.msra.mxu0 %v3029
  %3104 = vmatprep.subr.mxu0 0.0
  %3105 = vmatpush1.xpose.msra.mxu0 0.0
  %3106 = vmatprep.subr.mxu0 0.0
  %3107 = vmatpush1.xpose.msra.mxu0 0.0
  %3108 = vmatprep.subr.mxu0 0.0
  %3109 = vmatpush1.xpose.msra.mxu0 0.0
  %3110 = vmatprep.subr.mxu0 0.0
  %3111 = vmatpush1.xpose.msra.mxu0 0.0
  %3112 = vmatprep.subr.mxu0 0.0
  %3113 = vmatpush1.xpose.msra.mxu0 0.0
  %3114 = vmatprep.subr.mxu0 0.0
  %3115 = vmatpush1.xpose.msra.mxu0 0.0
  %3116 = vmatprep.subr.mxu0 0.0
  %3117 = vmatpush1.xpose.msra.mxu0 0.0
  %3118 = vmatprep.subr.mxu0 0.0
  %3119 = vmatpush1.xpose.msra.mxu0 0.0
  %3120 = vmatprep.subr.mxu0 0.0
  %3121 = vmatpush1.xpose.msra.mxu0 0.0
  %3122 = vmatprep.subr.mxu0 0.0
  %3123 = vmatpush1.xpose.msra.mxu0 0.0
  %3124 = vmatprep.subr.mxu0 0.0
  %3125 = vmatpush1.xpose.msra.mxu0 0.0
  %3126 = vmatprep.subr.mxu0 0.0
  %3127 = vmatpush1.xpose.msra.mxu0 0.0
  %3128 = vmatprep.subr.mxu0 0.0
  %3129 = vmatpush1.xpose.msra.mxu0 0.0
  %3130 = vmatprep.subr.mxu0 0.0
  %3131 = vmatpush1.xpose.msra.mxu0 0.0
  %3132 = vmatprep.subr.mxu0 0.0
  %3133 = vmatpush1.xpose.msra.mxu0 0.0
  %3134 = vmatprep.subr.mxu0 0.0
  %3135 = vmatpush1.xpose.msra.mxu0 0.0
  %3136 = vmatprep.subr.mxu0 0.0
  %3137 = vmatpush1.xpose.msra.mxu0 0.0
  %3138 = vmatprep.subr.mxu0 0.0
  %3139 = vmatpush1.xpose.msra.mxu0 0.0
  %3140 = vmatprep.subr.mxu0 0.0
  %3141 = vmatpush1.xpose.msra.mxu0 0.0
  %3142 = vmatprep.subr.mxu0 0.0
  %3143 = vmatpush1.xpose.msra.mxu0 0.0
  %3144 = vmatprep.subr.mxu0 0.0
  %3145 = vmatpush1.xpose.msra.mxu0 0.0
  %3146 = vmatprep.subr.mxu0 0.0
  %3147 = vmatpush1.xpose.msra.mxu0 0.0
  %3148 = vmatprep.subr.mxu0 0.0
  %3149 = vmatpush1.xpose.msra.mxu0 0.0
  %3150 = vmatprep.subr.mxu0 0.0
  %3151 = vmatpush1.xpose.msra.mxu0 0.0
  %3152 = vmatprep.subr.mxu0 0.0
  %3153 = vmatpush1.xpose.msra.mxu0 0.0
  %3154 = vmatprep.subr.mxu0 0.0
  %3155 = vmatpush1.xpose.msra.mxu0 0.0
  %3156 = vmatprep.subr.mxu0 0.0
  %3157 = vmatpush1.xpose.msra.mxu0 0.0
  %3158 = vmatprep.subr.mxu0 0.0
  %3159 = vmatpush1.xpose.msra.mxu0 0.0
  %3160 = vmatprep.subr.mxu0 0.0
  %3161 = vmatpush1.xpose.msra.mxu0 0.0
  %3162 = vmatprep.subr.mxu0 0.0
  %3163 = vmatpush1.xpose.msra.mxu0 0.0
  %3164 = vmatprep.mubr.f32.mxu0 0.0
  %3165 = vmatmul.mubr.f32.gmra.mrb[0].mxu0 %v11
  %v3166 = vpop.f32.mrb[0].mxu0
  %v3167 = vadd.f32 0.0, %v3166
  %v3168 = vpop.f32.mrb[0].mxu0
  %3169 = vdwg.mxu0
  %v3170 = vsub.f32 %v3097, %v1332
  %v3171 = vsub.f32 %v3167, %v1333
  %3174 = vrot.lane.b32.xlu0 %v3170, 96
  %v3175 = vpop.permute.xlu0 %3174
  %3176 = vrot.lane.b32.xlu0 %v3171, 96
  %v3177 = vpop.permute.xlu0 %3176
  %vm3180 = vcmask 912128
  %3181 = vst.msk [vmem:[%s1] sm:$0x7] %vm3180, %v3175
  %3182 = vst.msk [vmem:[%s1 + $0x4] sm:$0x7] %vm3180, %v3177
  %v3183 = vsel %vm3018, 1e+30, %v2942
  %v3184 = vsel %vm3019, 1e+30, %v2943
  %v3185 = vsel %vm3020, 1e+30, %v2944
  %v3186 = vsel %vm3021, 1e+30, %v2945
  %3187 = vmin.xlane.f32.xlu0 %v3183
  %v3188 = vpop.xlane.xlu0 %3187
  %3189 = vmin.xlane.f32.xlu0 %v3184
  %v3190 = vpop.xlane.xlu0 %3189
  %3191 = vmin.xlane.f32.xlu0 %v3185
  %v3192 = vpop.xlane.xlu0 %3191
  %3193 = vmin.xlane.f32.xlu0 %v3186
  %v3194 = vpop.xlane.xlu0 %3193
  %vm3195 = vcmp.le.f32.partialorder %v3183, %v3188
  %vm3196 = vcmp.le.f32.partialorder %v3184, %v3190
  %vm3197 = vcmp.le.f32.partialorder %v3185, %v3192
  %vm3198 = vcmp.le.f32.partialorder %v3186, %v3194
  %v3199 = vsel %vm3195, %v13, 128
  %v3200 = vsel %vm3196, %v13, 128
  %v3201 = vsel %vm3197, %v13, 128
  %v3202 = vsel %vm3198, %v13, 128
  %v3203 = vand.u32 %v3199, 65535
  %v3204 = vshra.s32 %v3199, 16
  %v3205 = vcvt.s32.f32 %v3203
  %v3206 = vcvt.s32.f32 %v3204
  %3207 = vmin.xlane.f32.xlu0 %v3206
  %v3208 = vpop.xlane.xlu0 %3207
  %vm3209 = vcmp.eq.f32.partialorder %v3206, %v3208
  %v3210 = vsel %vm3209, %v3205, inf
  %3211 = vmin.xlane.f32.xlu0 %v3210
  %v3212 = vpop.xlane.xlu0 %3211
  %v3213 = vcvt.f32.s32 %v3212
  %v3214 = vcvt.f32.s32 %v3208
  %v3215 = vshll.u32 %v3214, 16
  %v3216 = vadd.s32 %v3215, %v3213
  %v3217 = vand.u32 %v3200, 65535
  %v3218 = vshra.s32 %v3200, 16
  %v3219 = vcvt.s32.f32 %v3217
  %v3220 = vcvt.s32.f32 %v3218
  %3221 = vmin.xlane.f32.xlu0 %v3220
  %v3222 = vpop.xlane.xlu0 %3221
  %vm3223 = vcmp.eq.f32.partialorder %v3220, %v3222
  %v3224 = vsel %vm3223, %v3219, inf
  %3225 = vmin.xlane.f32.xlu0 %v3224
  %v3226 = vpop.xlane.xlu0 %3225
  %v3227 = vcvt.f32.s32 %v3226
  %v3228 = vcvt.f32.s32 %v3222
  %v3229 = vshll.u32 %v3228, 16
  %v3230 = vadd.s32 %v3229, %v3227
  %v3231 = vand.u32 %v3201, 65535
  %v3232 = vshra.s32 %v3201, 16
  %v3233 = vcvt.s32.f32 %v3231
  %v3234 = vcvt.s32.f32 %v3232
  %3235 = vmin.xlane.f32.xlu0 %v3234
  %v3236 = vpop.xlane.xlu0 %3235
  %vm3237 = vcmp.eq.f32.partialorder %v3234, %v3236
  %v3238 = vsel %vm3237, %v3233, inf
  %3239 = vmin.xlane.f32.xlu0 %v3238
  %v3240 = vpop.xlane.xlu0 %3239
  %v3241 = vcvt.f32.s32 %v3240
  %v3242 = vcvt.f32.s32 %v3236
  %v3243 = vshll.u32 %v3242, 16
  %v3244 = vadd.s32 %v3243, %v3241
  %v3245 = vand.u32 %v3202, 65535
  %v3246 = vshra.s32 %v3202, 16
  %v3247 = vcvt.s32.f32 %v3245
  %v3248 = vcvt.s32.f32 %v3246
  %3249 = vmin.xlane.f32.xlu0 %v3248
  %v3250 = vpop.xlane.xlu0 %3249
  %vm3251 = vcmp.eq.f32.partialorder %v3248, %v3250
  %v3252 = vsel %vm3251, %v3247, inf
  %3253 = vmin.xlane.f32.xlu0 %v3252
  %v3254 = vpop.xlane.xlu0 %3253
  %v3255 = vcvt.f32.s32 %v3254
  %v3256 = vcvt.f32.s32 %v3250
  %v3257 = vshll.u32 %v3256, 16
  %v3258 = vadd.s32 %v3257, %v3255
  %vm3259 = vcmp.eq.s32.totalorder %v13, %v3216
  %vm3260 = vcmp.eq.s32.totalorder %v13, %v3230
  %vm3261 = vcmp.eq.s32.totalorder %v13, %v3244
  %vm3262 = vcmp.eq.s32.totalorder %v13, %v3258
  %v3263 = vsel %vm3259, 1, 0
  %v3264 = vsel %vm3260, 1, 0
  %v3265 = vsel %vm3261, 1, 0
  %v3266 = vsel %vm3262, 1, 0
  %v3267 = vcvt.s32.f32 %v3263
  %v3268 = vcvt.s32.f32 %v3264
  %v3269 = vcvt.s32.f32 %v3265
  %v3270 = vcvt.s32.f32 %v3266
  %3271 = vmatprep.subr.mxu0 0.0
  %3272 = vmatpush1.xpose.msra.mxu0 %v3267
  %3273 = vmatprep.subr.mxu0 0.0
  %3274 = vmatpush1.xpose.msra.mxu0 %v3268
  %3275 = vmatprep.subr.mxu0 0.0
  %3276 = vmatpush1.xpose.msra.mxu0 0.0
  %3277 = vmatprep.subr.mxu0 0.0
  %3278 = vmatpush1.xpose.msra.mxu0 0.0
  %3279 = vmatprep.subr.mxu0 0.0
  %3280 = vmatpush1.xpose.msra.mxu0 0.0
  %3281 = vmatprep.subr.mxu0 0.0
  %3282 = vmatpush1.xpose.msra.mxu0 0.0
  %3283 = vmatprep.subr.mxu0 0.0
  %3284 = vmatpush1.xpose.msra.mxu0 0.0
  %3285 = vmatprep.subr.mxu0 0.0
  %3286 = vmatpush1.xpose.msra.mxu0 0.0
  %3287 = vmatprep.subr.mxu0 0.0
  %3288 = vmatpush1.xpose.msra.mxu0 0.0
  %3289 = vmatprep.subr.mxu0 0.0
  %3290 = vmatpush1.xpose.msra.mxu0 0.0
  %3291 = vmatprep.subr.mxu0 0.0
  %3292 = vmatpush1.xpose.msra.mxu0 0.0
  %3293 = vmatprep.subr.mxu0 0.0
  %3294 = vmatpush1.xpose.msra.mxu0 0.0
  %3295 = vmatprep.subr.mxu0 0.0
  %3296 = vmatpush1.xpose.msra.mxu0 0.0
  %3297 = vmatprep.subr.mxu0 0.0
  %3298 = vmatpush1.xpose.msra.mxu0 0.0
  %3299 = vmatprep.subr.mxu0 0.0
  %3300 = vmatpush1.xpose.msra.mxu0 0.0
  %3301 = vmatprep.subr.mxu0 0.0
  %3302 = vmatpush1.xpose.msra.mxu0 0.0
  %3303 = vmatprep.subr.mxu0 0.0
  %3304 = vmatpush1.xpose.msra.mxu0 0.0
  %3305 = vmatprep.subr.mxu0 0.0
  %3306 = vmatpush1.xpose.msra.mxu0 0.0
  %3307 = vmatprep.subr.mxu0 0.0
  %3308 = vmatpush1.xpose.msra.mxu0 0.0
  %3309 = vmatprep.subr.mxu0 0.0
  %3310 = vmatpush1.xpose.msra.mxu0 0.0
  %3311 = vmatprep.subr.mxu0 0.0
  %3312 = vmatpush1.xpose.msra.mxu0 0.0
  %3313 = vmatprep.subr.mxu0 0.0
  %3314 = vmatpush1.xpose.msra.mxu0 0.0
  %3315 = vmatprep.subr.mxu0 0.0
  %3316 = vmatpush1.xpose.msra.mxu0 0.0
  %3317 = vmatprep.subr.mxu0 0.0
  %3318 = vmatpush1.xpose.msra.mxu0 0.0
  %3319 = vmatprep.subr.mxu0 0.0
  %3320 = vmatpush1.xpose.msra.mxu0 0.0
  %3321 = vmatprep.subr.mxu0 0.0
  %3322 = vmatpush1.xpose.msra.mxu0 0.0
  %3323 = vmatprep.subr.mxu0 0.0
  %3324 = vmatpush1.xpose.msra.mxu0 0.0
  %3325 = vmatprep.subr.mxu0 0.0
  %3326 = vmatpush1.xpose.msra.mxu0 0.0
  %3327 = vmatprep.subr.mxu0 0.0
  %3328 = vmatpush1.xpose.msra.mxu0 0.0
  %3329 = vmatprep.subr.mxu0 0.0
  %3330 = vmatpush1.xpose.msra.mxu0 0.0
  %3331 = vmatprep.subr.mxu0 0.0
  %3332 = vmatpush1.xpose.msra.mxu0 0.0
  %3333 = vmatprep.subr.mxu0 0.0
  %3334 = vmatpush1.xpose.msra.mxu0 0.0
  %3335 = vmatprep.mubr.f32.mxu0 0.0
  %3336 = vmatmul.mubr.f32.gmra.mrb[0].mxu0 %v10
  %v3337 = vpop.f32.mrb[0].mxu0
  %v3338 = vadd.f32 0.0, %v3337
  %v3339 = vpop.f32.mrb[0].mxu0
  %3340 = vdwg.mxu0
  %3341 = vmatprep.subr.mxu0 0.0
  %3342 = vmatpush1.xpose.msra.mxu0 %v3269
  %3343 = vmatprep.subr.mxu0 0.0
  %3344 = vmatpush1.xpose.msra.mxu0 %v3270
  %3345 = vmatprep.subr.mxu0 0.0
  %3346 = vmatpush1.xpose.msra.mxu0 0.0
  %3347 = vmatprep.subr.mxu0 0.0
  %3348 = vmatpush1.xpose.msra.mxu0 0.0
  %3349 = vmatprep.subr.mxu0 0.0
  %3350 = vmatpush1.xpose.msra.mxu0 0.0
  %3351 = vmatprep.subr.mxu0 0.0
  %3352 = vmatpush1.xpose.msra.mxu0 0.0
  %3353 = vmatprep.subr.mxu0 0.0
  %3354 = vmatpush1.xpose.msra.mxu0 0.0
  %3355 = vmatprep.subr.mxu0 0.0
  %3356 = vmatpush1.xpose.msra.mxu0 0.0
  %3357 = vmatprep.subr.mxu0 0.0
  %3358 = vmatpush1.xpose.msra.mxu0 0.0
  %3359 = vmatprep.subr.mxu0 0.0
  %3360 = vmatpush1.xpose.msra.mxu0 0.0
  %3361 = vmatprep.subr.mxu0 0.0
  %3362 = vmatpush1.xpose.msra.mxu0 0.0
  %3363 = vmatprep.subr.mxu0 0.0
  %3364 = vmatpush1.xpose.msra.mxu0 0.0
  %3365 = vmatprep.subr.mxu0 0.0
  %3366 = vmatpush1.xpose.msra.mxu0 0.0
  %3367 = vmatprep.subr.mxu0 0.0
  %3368 = vmatpush1.xpose.msra.mxu0 0.0
  %3369 = vmatprep.subr.mxu0 0.0
  %3370 = vmatpush1.xpose.msra.mxu0 0.0
  %3371 = vmatprep.subr.mxu0 0.0
  %3372 = vmatpush1.xpose.msra.mxu0 0.0
  %3373 = vmatprep.subr.mxu0 0.0
  %3374 = vmatpush1.xpose.msra.mxu0 0.0
  %3375 = vmatprep.subr.mxu0 0.0
  %3376 = vmatpush1.xpose.msra.mxu0 0.0
  %3377 = vmatprep.subr.mxu0 0.0
  %3378 = vmatpush1.xpose.msra.mxu0 0.0
  %3379 = vmatprep.subr.mxu0 0.0
  %3380 = vmatpush1.xpose.msra.mxu0 0.0
  %3381 = vmatprep.subr.mxu0 0.0
  %3382 = vmatpush1.xpose.msra.mxu0 0.0
  %3383 = vmatprep.subr.mxu0 0.0
  %3384 = vmatpush1.xpose.msra.mxu0 0.0
  %3385 = vmatprep.subr.mxu0 0.0
  %3386 = vmatpush1.xpose.msra.mxu0 0.0
  %3387 = vmatprep.subr.mxu0 0.0
  %3388 = vmatpush1.xpose.msra.mxu0 0.0
  %3389 = vmatprep.subr.mxu0 0.0
  %3390 = vmatpush1.xpose.msra.mxu0 0.0
  %3391 = vmatprep.subr.mxu0 0.0
  %3392 = vmatpush1.xpose.msra.mxu0 0.0
  %3393 = vmatprep.subr.mxu0 0.0
  %3394 = vmatpush1.xpose.msra.mxu0 0.0
  %3395 = vmatprep.subr.mxu0 0.0
  %3396 = vmatpush1.xpose.msra.mxu0 0.0
  %3397 = vmatprep.subr.mxu0 0.0
  %3398 = vmatpush1.xpose.msra.mxu0 0.0
  %3399 = vmatprep.subr.mxu0 0.0
  %3400 = vmatpush1.xpose.msra.mxu0 0.0
  %3401 = vmatprep.subr.mxu0 0.0
  %3402 = vmatpush1.xpose.msra.mxu0 0.0
  %3403 = vmatprep.subr.mxu0 0.0
  %3404 = vmatpush1.xpose.msra.mxu0 0.0
  %3405 = vmatprep.mubr.f32.mxu0 0.0
  %3406 = vmatmul.mubr.f32.gmra.mrb[0].mxu0 %v11
  %v3407 = vpop.f32.mrb[0].mxu0
  %v3408 = vadd.f32 0.0, %v3407
  %v3409 = vpop.f32.mrb[0].mxu0
  %3410 = vdwg.mxu0
  %v3411 = vsub.f32 %v3338, %v1332
  %v3412 = vsub.f32 %v3408, %v1333
  %3415 = vrot.lane.b32.xlu0 %v3411, 112
  %v3416 = vpop.permute.xlu0 %3415
  %3417 = vrot.lane.b32.xlu0 %v3412, 112
  %v3418 = vpop.permute.xlu0 %3417
  %vm3421 = vcmask 1043328
  %3422 = vst.msk [vmem:[%s1] sm:$0x7] %vm3421, %v3416
  %3423 = vst.msk [vmem:[%s1 + $0x4] sm:$0x7] %vm3421, %v3418
  // Predicated region
  $region6: #{tpu_custom_call.1} parent=0 // pred_check
    _
  $region7: #{tpu_custom_call.1} parent=0 // pred_check_branch
    %3425 = sbr.rel (0) target = $region9
  $region8: #{tpu_custom_call.1} parent=0 // pred_region
    _
  $region9: #{tpu_custom_call.1} parent=0 // pred_fallthru
    _
  // Predicated region
  $region10: #{tpu_custom_call.1} parent=0 // pred_check
    _
  $region11: #{tpu_custom_call.1} parent=0 // pred_check_branch
    %3427 = sbr.rel (0) target = $region13
  $region12: #{tpu_custom_call.1} parent=0 // pred_region
    _
  $region13: #{tpu_custom_call.1} parent=0 // pred_fallthru
    _
  // Predicated region
  $region14: #{tpu_custom_call.1} parent=0 // pred_check
    _
  $region15: #{tpu_custom_call.1} parent=0 // pred_check_branch
    %3429 = sbr.rel (0) target = $region17
  $region16: #{tpu_custom_call.1} parent=0 // pred_region
    _
  $region17: #{tpu_custom_call.1} parent=0 // pred_fallthru
    _
  // Predicated region
  $region18: #{tpu_custom_call.1} parent=0 // pred_check
    _
  $region19: #{tpu_custom_call.1} parent=0 // pred_check_branch
    %3431 = sbr.rel (0) target = $region21
  $region20: #{tpu_custom_call.1} parent=0 // pred_region
    _
  $region21: #{tpu_custom_call.1} parent=0 // pred_fallthru
    _

</llo_original>
